<compile_context>
chip_gen: v5e
topology: v5e:2x2
jax: 0.10.0
libtpu: 0.0.40
codegen_flags: <defaults>
</compile_context>

<pallas_src>
import jax
import jax.numpy as jnp
from jax.experimental import pallas as pl
from jax.experimental.pallas import tpu as pltpu


def qnetwork_kernel(hist_ref, num_ref,
                    w_emb_ref, b_emb_ref,
                    w_ih0_ref, w_hh0_ref, b0_ref,
                    w_ih1_ref, w_hh1_ref, b1_ref,
                    w_fc_num_ref, w_fc_hist_ref, b_fc_ref,
                    out_ref,
                    xproj_ref):
    H = w_hh0_ref.shape[0]          # hidden size (static)
    B = num_ref.shape[0]            # batch (static)
    TB = hist_ref.shape[0]          # T * B (history is time-major, flattened)
    T = TB // B

    # --- embedding branch (K=2 -> VPU broadcast-mul-add) + its head contribution ---
    numeric = jnp.maximum(
        num_ref[:, 0:1] * w_emb_ref[0:1, :]
        + num_ref[:, 1:2] * w_emb_ref[1:2, :]
        + b_emb_ref[...], 0.0)                                         # [B, H]
    out_num = jnp.dot(numeric, w_fc_num_ref[...],
                      preferred_element_type=jnp.float32)              # [B, Npad]

    # --- hoisted layer-0 input projection (bias folded), staged in VMEM scratch ---
    # K=2 -> VPU broadcast-mul-adds instead of a skinny MXU matmul; written once,
    # read back one [B,4H] slab per step so it never sits in vregs across the unroll.
    xproj_ref[...] = (hist_ref[:, 0:1] * w_ih0_ref[0:1, :]
                      + hist_ref[:, 1:2] * w_ih0_ref[1:2, :]
                      + b0_ref[...])                                   # [T*B, 4H]

    w_hh0 = w_hh0_ref[...]                                             # [H, 4H] bf16
    w_ih1 = w_ih1_ref[...]                                             # [H, 4H] bf16
    w_hh1 = w_hh1_ref[...]                                             # [H, 4H] bf16
    b1 = jnp.broadcast_to(b1_ref[...], (B, 4 * H))                     # hoisted broadcast

    def gates_to_hc(gates, c):
        # permuted gate layout (i, f, o, g): one contiguous sigmoid slab + one tanh slab.
        # sigmoid as a single EUP op: sigmoid(x) = 0.5 * tanh(0.5 * x) + 0.5
        sig = 0.5 * jnp.tanh(0.5 * gates[:, :3 * H]) + 0.5
        i = sig[:, :H]
        f = sig[:, H:2 * H]
        o = sig[:, 2 * H:]
        g = jnp.tanh(gates[:, 3 * H:])
        c_new = f * c + i * g
        h_new = o * jnp.tanh(c_new)
        return h_new, c_new

    zeros = jnp.zeros((B, H), jnp.float32)
    h0, c0, h1, c1 = zeros, zeros, zeros, zeros

    # statically unrolled T-step recurrence (T is small and static)
    for t in range(T):
        x_t = xproj_ref[t * B:(t + 1) * B, :]                          # [B, 4H] f32
        # layer 0: only the recurrent bf16 matmul remains on the serial path
        g0 = x_t + jnp.dot(h0.astype(jnp.bfloat16), w_hh0,
                           preferred_element_type=jnp.float32)
        h0, c0 = gates_to_hc(g0, c0)
        # layer 1: split matmuls — h1(t-1)@w_hh1 is independent of h0(t) and overlaps
        # the layer-0 recurrent matmul; dot+dot form enables MRB accumulation on v7x.
        g1 = (jnp.dot(h1.astype(jnp.bfloat16), w_hh1,
                      preferred_element_type=jnp.float32)
              + jnp.dot(h0.astype(jnp.bfloat16), w_ih1,
                        preferred_element_type=jnp.float32)
              + b1)
        h1, c1 = gates_to_hc(g1, c1)

    hist_feat = jnp.maximum(h1, 0.0)                                   # relu(last h, top layer)

    # --- output head (split weights: no lane concat; lane-dense padded store) ---
    out_ref[...] = (out_num
                    + jnp.dot(hist_feat, w_fc_hist_ref[...],
                              preferred_element_type=jnp.float32)
                    + b_fc_ref[...])


def _permute_ifgo_to_ifog(w):
    """Permute gate columns (i,f,g,o) -> (i,f,o,g) along the last axis."""
    H = w.shape[-1] // 4
    return jnp.concatenate(
        [w[..., :2 * H], w[..., 3 * H:], w[..., 2 * H:3 * H]], axis=-1)


def prepare_params(params):
    """One-time weight prep (hoisted out of the per-call path): gate permutes,
    bf16 casts of the recurrent weights, fc split + lane-dense padding."""
    H = params["w_hh0"].shape[0]
    out_size = params["w_fc"].shape[1]
    out_pad = max(128, -(-out_size // 128) * 128)      # lane-dense output width
    pad_cols = out_pad - out_size
    return {
        "hidden": H,
        "out_size": out_size,
        "out_pad": out_pad,
        "w_emb": params["w_emb"],
        "b_emb": params["b_emb"],
        "w_ih0": _permute_ifgo_to_ifog(params["w_ih0"]),                       # f32 (VPU path)
        "w_hh0": _permute_ifgo_to_ifog(params["w_hh0"]).astype(jnp.bfloat16),  # recurrent, bf16
        "b0":    _permute_ifgo_to_ifog(params["b0"]),
        "w_ih1": _permute_ifgo_to_ifog(params["w_ih1"]).astype(jnp.bfloat16),
        "w_hh1": _permute_ifgo_to_ifog(params["w_hh1"]).astype(jnp.bfloat16),
        "b1":    _permute_ifgo_to_ifog(params["b1"]),
        "w_fc_num":  jnp.pad(params["w_fc"][:H], ((0, 0), (0, pad_cols))),     # [H, out_pad]
        "w_fc_hist": jnp.pad(params["w_fc"][H:], ((0, 0), (0, pad_cols))),     # [H, out_pad]
        "b_fc":      jnp.pad(params["b_fc"], ((0, 0), (0, pad_cols))),         # [1, out_pad]
    }


def qnetwork_forward(history_btd, numeric_b2, prepped):
    """history_btd: [B, T, D_in] (batch_first like PyTorch); numeric_b2: [B, 2].
    `prepped` comes from prepare_params(); only layout plumbing for the activations
    happens here per call."""
    B, T, D_in = history_btd.shape
    H = prepped["hidden"]
    out_pad = prepped["out_pad"]

    # time-major, flattened history so the layer-0 projection covers all T at once.
    hist_flat = jnp.transpose(history_btd, (1, 0, 2)).reshape(T * B, D_in)

    args = (hist_flat, numeric_b2,
            prepped["w_emb"], prepped["b_emb"],
            prepped["w_ih0"], prepped["w_hh0"], prepped["b0"],
            prepped["w_ih1"], prepped["w_hh1"], prepped["b1"],
            prepped["w_fc_num"], prepped["w_fc_hist"], prepped["b_fc"])

    vmem = pl.BlockSpec(memory_space=pltpu.MemorySpace.VMEM)
    out_padded = pl.pallas_call(
        qnetwork_kernel,
        out_shape=jax.ShapeDtypeStruct((B, out_pad), jnp.float32),
        in_specs=[vmem] * len(args),
        out_specs=vmem,
        scratch_shapes=[pltpu.VMEM((T * B, 4 * H), jnp.float32)],  # staged x_proj
    )(*args)
    return out_padded[:, :prepped["out_size"]]


def make_params(key, input_size, hidden_size, output_size):
    """Deterministic synthetic params, stored pre-transposed ([in, out]), gate order i,f,g,o."""
    ks = jax.random.split(key, 12)
    s = 0.1

    def rnd(k, shape):
        return s * jax.random.normal(k, shape, dtype=jnp.float32)

    H = hidden_size
    params = {
        # embedding: Linear(2, H)
        "w_emb": rnd(ks[0], (2, H)),
        "b_emb": rnd(ks[1], (1, H)),
        # LSTM layer 0: W_ih [D_in, 4H], W_hh [H, 4H], fused bias [1, 4H]
        "w_ih0": rnd(ks[2], (input_size, 4 * H)),
        "w_hh0": rnd(ks[3], (H, 4 * H)),
        "b0":    rnd(ks[4], (1, 4 * H)) + rnd(ks[5], (1, 4 * H)),
        # LSTM layer 1: W_ih [H, 4H], W_hh [H, 4H], fused bias [1, 4H]
        "w_ih1": rnd(ks[6], (H, 4 * H)),
        "w_hh1": rnd(ks[7], (H, 4 * H)),
        "b1":    rnd(ks[8], (1, 4 * H)) + rnd(ks[9], (1, 4 * H)),
        # fc: Linear(2H, output_size)
        "w_fc":  rnd(ks[10], (2 * H, output_size)),
        "b_fc":  rnd(ks[11], (1, output_size)),
    }
    return params


def qnetwork_reference(history_btd, numeric_b2, params):
    """Pure-JAX f32 reference implementing the same math (for a correctness check)."""
    H = params["w_hh0"].shape[0]
    B, T, _ = history_btd.shape
    numeric = jnp.maximum(numeric_b2 @ params["w_emb"] + params["b_emb"], 0.0)

    def cell(x, h, c, w_ih, w_hh, b):
        g = x @ w_ih + h @ w_hh + b
        i = jax.nn.sigmoid(g[:, :H])
        f = jax.nn.sigmoid(g[:, H:2 * H])
        gg = jnp.tanh(g[:, 2 * H:3 * H])
        o = jax.nn.sigmoid(g[:, 3 * H:])
        c = f * c + i * gg
        return o * jnp.tanh(c), c

    h0 = c0 = h1 = c1 = jnp.zeros((B, H), jnp.float32)
    for t in range(T):
        x_t = history_btd[:, t, :]
        h0, c0 = cell(x_t, h0, c0, params["w_ih0"], params["w_hh0"], params["b0"])
        h1, c1 = cell(h0, h1, c1, params["w_ih1"], params["w_hh1"], params["b1"])
    x = jnp.concatenate([numeric, jnp.maximum(h1, 0.0)], axis=1)
    return x @ params["w_fc"] + params["b_fc"]


if __name__ == "__main__":
    B, T = 8, 8
    input_size = 2          # past_prices [B,T,1] + past_inflation [B,T,1]
    hidden_size = 128
    output_size = 4

    key = jax.random.PRNGKey(0)
    k_p, k_pp, k_pi, k_inf, k_act = jax.random.split(key, 5)

    params = make_params(k_p, input_size, hidden_size, output_size)
    prepped = prepare_params(params)   # one-time weight prep (not on the per-call path)

    past_prices = jax.random.normal(k_pp, (B, T, 1), dtype=jnp.float32)
    past_inflation = jax.random.normal(k_pi, (B, T, 1), dtype=jnp.float32)
    inflation = jax.random.normal(k_inf, (B, 1), dtype=jnp.float32)
    action = jax.random.normal(k_act, (B, 1), dtype=jnp.float32)

    # glue (cheap concatenations) stays in plain JAX, matching torch.cat
    history = jnp.concatenate([past_prices, past_inflation], axis=2)   # [B, T, 2]
    numeric = jnp.concatenate([inflation, action], axis=1)             # [B, 2]

    out = qnetwork_forward(history, numeric, prepped)
    out = jax.block_until_ready(out)

    ref = qnetwork_reference(history, numeric, params)
    assert out.shape == (B, output_size)
    # bf16 recurrent matmuls (f32 accumulation) -> loosened tolerance vs the f32 reference
    assert jnp.allclose(out, ref, atol=2e-2, rtol=2e-2), "Pallas kernel mismatch vs reference"

    print("KERNEL_OK")
</pallas_src>

<mosaic_0001>
module attributes {stable_mosaic.version = 11 : i64} {
  func.func @qnetwork_kernel(%arg0: memref<64x2xf32, #tpu.memory_space<vmem>>, %arg1: memref<8x2xf32, #tpu.memory_space<vmem>>, %arg2: memref<2x128xf32, #tpu.memory_space<vmem>>, %arg3: memref<1x128xf32, #tpu.memory_space<vmem>>, %arg4: memref<2x512xf32, #tpu.memory_space<vmem>>, %arg5: memref<128x512xbf16, #tpu.memory_space<vmem>>, %arg6: memref<1x512xf32, #tpu.memory_space<vmem>>, %arg7: memref<128x512xbf16, #tpu.memory_space<vmem>>, %arg8: memref<128x512xbf16, #tpu.memory_space<vmem>>, %arg9: memref<1x512xf32, #tpu.memory_space<vmem>>, %arg10: memref<128x128xf32, #tpu.memory_space<vmem>>, %arg11: memref<128x128xf32, #tpu.memory_space<vmem>>, %arg12: memref<1x128xf32, #tpu.memory_space<vmem>>, %arg13: memref<8x128xf32, #tpu.memory_space<vmem>>, %arg14: memref<64x512xf32, #tpu.memory_space<vmem>>) attributes {dimension_semantics = [], scalar_prefetch = 0 : i64, scratch_operands = 1 : i64, tpu.core_type = #tpu.core_type<tc>} {
    %c0 = arith.constant 0 : index
    %c0_0 = arith.constant 0 : index
    %0 = vector.load %arg1[%c0, %c0_0] : memref<8x2xf32, #tpu.memory_space<vmem>>, vector<8x1xf32>
    %c0_1 = arith.constant 0 : index
    %c0_2 = arith.constant 0 : index
    %1 = vector.load %arg2[%c0_1, %c0_2] : memref<2x128xf32, #tpu.memory_space<vmem>>, vector<1x128xf32>
    %2 = vector.broadcast %0 : vector<8x1xf32> to vector<8x128xf32>
    %3 = vector.broadcast %1 : vector<1x128xf32> to vector<8x128xf32>
    %4 = arith.mulf %2, %3 : vector<8x128xf32>
    %c0_3 = arith.constant 0 : index
    %c1 = arith.constant 1 : index
    %5 = vector.load %arg1[%c0_3, %c1] : memref<8x2xf32, #tpu.memory_space<vmem>>, vector<8x1xf32>
    %c1_4 = arith.constant 1 : index
    %c0_5 = arith.constant 0 : index
    %6 = vector.load %arg2[%c1_4, %c0_5] : memref<2x128xf32, #tpu.memory_space<vmem>>, vector<1x128xf32>
    %7 = vector.broadcast %5 : vector<8x1xf32> to vector<8x128xf32>
    %8 = vector.broadcast %6 : vector<1x128xf32> to vector<8x128xf32>
    %9 = arith.mulf %7, %8 : vector<8x128xf32>
    %10 = arith.addf %4, %9 : vector<8x128xf32>
    %c0_6 = arith.constant 0 : index
    %c0_7 = arith.constant 0 : index
    %11 = vector.load %arg3[%c0_6, %c0_7] : memref<1x128xf32, #tpu.memory_space<vmem>>, vector<1x128xf32>
    %12 = vector.broadcast %11 : vector<1x128xf32> to vector<8x128xf32>
    %13 = arith.addf %10, %12 : vector<8x128xf32>
    %cst = arith.constant 0.000000e+00 : f32
    %14 = vector.broadcast %cst : f32 to vector<8x128xf32>
    %15 = arith.maximumf %13, %14 : vector<8x128xf32>
    %c0_8 = arith.constant 0 : index
    %c0_9 = arith.constant 0 : index
    %16 = vector.load %arg10[%c0_8, %c0_9] : memref<128x128xf32, #tpu.memory_space<vmem>>, vector<128x128xf32>
    %cst_10 = arith.constant dense<0.000000e+00> : vector<8x128xf32>
    %17 = tpu.matmul %15, %16, %cst_10 {dimension_numbers = #tpu.dot_dimension_numbers<[1], [0], [0], [1], [0, 0, 1, 1], [], []>} : vector<8x128xf32>, vector<128x128xf32>, vector<8x128xf32> -> vector<8x128xf32>
    %c0_11 = arith.constant 0 : index
    %c0_12 = arith.constant 0 : index
    %18 = vector.load %arg0[%c0_11, %c0_12] : memref<64x2xf32, #tpu.memory_space<vmem>>, vector<64x1xf32>
    %c0_13 = arith.constant 0 : index
    %c0_14 = arith.constant 0 : index
    %19 = vector.load %arg4[%c0_13, %c0_14] : memref<2x512xf32, #tpu.memory_space<vmem>>, vector<1x512xf32>
    %20 = vector.broadcast %18 : vector<64x1xf32> to vector<64x512xf32>
    %21 = vector.broadcast %19 : vector<1x512xf32> to vector<64x512xf32>
    %22 = arith.mulf %20, %21 : vector<64x512xf32>
    %c0_15 = arith.constant 0 : index
    %c1_16 = arith.constant 1 : index
    %23 = vector.load %arg0[%c0_15, %c1_16] : memref<64x2xf32, #tpu.memory_space<vmem>>, vector<64x1xf32>
    %c1_17 = arith.constant 1 : index
    %c0_18 = arith.constant 0 : index
    %24 = vector.load %arg4[%c1_17, %c0_18] : memref<2x512xf32, #tpu.memory_space<vmem>>, vector<1x512xf32>
    %25 = vector.broadcast %23 : vector<64x1xf32> to vector<64x512xf32>
    %26 = vector.broadcast %24 : vector<1x512xf32> to vector<64x512xf32>
    %27 = arith.mulf %25, %26 : vector<64x512xf32>
    %28 = arith.addf %22, %27 : vector<64x512xf32>
    %c0_19 = arith.constant 0 : index
    %c0_20 = arith.constant 0 : index
    %29 = vector.load %arg6[%c0_19, %c0_20] : memref<1x512xf32, #tpu.memory_space<vmem>>, vector<1x512xf32>
    %30 = vector.broadcast %29 : vector<1x512xf32> to vector<64x512xf32>
    %31 = arith.addf %28, %30 : vector<64x512xf32>
    %c0_21 = arith.constant 0 : index
    %c0_22 = arith.constant 0 : index
    %32 = vector.load %arg14[%c0_21, %c0_22] : memref<64x512xf32, #tpu.memory_space<vmem>>, vector<64x512xf32>
    tpu.vector_store %arg14[%c0_21, %c0_22], %31 {strides = array<i32>} : memref<64x512xf32, #tpu.memory_space<vmem>>, vector<64x512xf32>,
    %c0_23 = arith.constant 0 : index
    %c0_24 = arith.constant 0 : index
    %33 = vector.load %arg5[%c0_23, %c0_24] : memref<128x512xbf16, #tpu.memory_space<vmem>>, vector<128x512xbf16>
    %c0_25 = arith.constant 0 : index
    %c0_26 = arith.constant 0 : index
    %34 = vector.load %arg7[%c0_25, %c0_26] : memref<128x512xbf16, #tpu.memory_space<vmem>>, vector<128x512xbf16>
    %c0_27 = arith.constant 0 : index
    %c0_28 = arith.constant 0 : index
    %35 = vector.load %arg8[%c0_27, %c0_28] : memref<128x512xbf16, #tpu.memory_space<vmem>>, vector<128x512xbf16>
    %c0_29 = arith.constant 0 : index
    %c0_30 = arith.constant 0 : index
    %36 = vector.load %arg9[%c0_29, %c0_30] : memref<1x512xf32, #tpu.memory_space<vmem>>, vector<1x512xf32>
    %37 = vector.shape_cast %36 : vector<1x512xf32> to vector<1x512xf32>
    %38 = vector.broadcast %37 : vector<1x512xf32> to vector<8x512xf32>
    %cst_31 = arith.constant 0.000000e+00 : f32
    %39 = vector.broadcast %cst_31 : f32 to vector<8x128xf32>
    %c0_32 = arith.constant 0 : index
    %c0_33 = arith.constant 0 : index
    %40 = vector.load %arg14[%c0_32, %c0_33] : memref<64x512xf32, #tpu.memory_space<vmem>>, vector<8x512xf32>
    %41 = arith.truncf %39 : vector<8x128xf32> to vector<8x128xbf16>
    %cst_34 = arith.constant dense<0.000000e+00> : vector<8x512xf32>
    %42 = tpu.matmul %41, %33, %cst_34 {dimension_numbers = #tpu.dot_dimension_numbers<[1], [0], [0], [1], [0, 0, 1, 1], [], []>} : vector<8x128xbf16>, vector<128x512xbf16>, vector<8x512xf32> -> vector<8x512xf32>
    %43 = arith.addf %40, %42 : vector<8x512xf32>
    %44 = vector.extract_strided_slice %43 {offsets = [0, 0], sizes = [8, 384], strides = [1, 1]} : vector<8x512xf32> to vector<8x384xf32>
    %cst_35 = arith.constant 5.000000e-01 : f32
    %45 = vector.broadcast %cst_35 : f32 to vector<8x384xf32>
    %46 = arith.mulf %45, %44 : vector<8x384xf32>
    %47 = math.tanh %46 : vector<8x384xf32>
    %cst_36 = arith.constant 5.000000e-01 : f32
    %48 = vector.broadcast %cst_36 : f32 to vector<8x384xf32>
    %49 = arith.mulf %48, %47 : vector<8x384xf32>
    %cst_37 = arith.constant 5.000000e-01 : f32
    %50 = vector.broadcast %cst_37 : f32 to vector<8x384xf32>
    %51 = arith.addf %49, %50 : vector<8x384xf32>
    %52 = vector.extract_strided_slice %51 {offsets = [0, 0], sizes = [8, 128], strides = [1, 1]} : vector<8x384xf32> to vector<8x128xf32>
    %53 = vector.extract_strided_slice %51 {offsets = [0, 128], sizes = [8, 128], strides = [1, 1]} : vector<8x384xf32> to vector<8x128xf32>
    %54 = vector.extract_strided_slice %51 {offsets = [0, 256], sizes = [8, 128], strides = [1, 1]} : vector<8x384xf32> to vector<8x128xf32>
    %55 = vector.extract_strided_slice %43 {offsets = [0, 384], sizes = [8, 128], strides = [1, 1]} : vector<8x512xf32> to vector<8x128xf32>
    %56 = math.tanh %55 : vector<8x128xf32>
    %57 = arith.mulf %53, %39 : vector<8x128xf32>
    %58 = arith.mulf %52, %56 : vector<8x128xf32>
    %59 = arith.addf %57, %58 : vector<8x128xf32>
    %60 = math.tanh %59 : vector<8x128xf32>
    %61 = arith.mulf %54, %60 : vector<8x128xf32>
    %62 = arith.truncf %39 : vector<8x128xf32> to vector<8x128xbf16>
    %cst_38 = arith.constant dense<0.000000e+00> : vector<8x512xf32>
    %63 = tpu.matmul %62, %35, %cst_38 {dimension_numbers = #tpu.dot_dimension_numbers<[1], [0], [0], [1], [0, 0, 1, 1], [], []>} : vector<8x128xbf16>, vector<128x512xbf16>, vector<8x512xf32> -> vector<8x512xf32>
    %64 = arith.truncf %61 : vector<8x128xf32> to vector<8x128xbf16>
    %cst_39 = arith.constant dense<0.000000e+00> : vector<8x512xf32>
    %65 = tpu.matmul %64, %34, %cst_39 {dimension_numbers = #tpu.dot_dimension_numbers<[1], [0], [0], [1], [0, 0, 1, 1], [], []>} : vector<8x128xbf16>, vector<128x512xbf16>, vector<8x512xf32> -> vector<8x512xf32>
    %66 = arith.addf %63, %65 : vector<8x512xf32>
    %67 = arith.addf %66, %38 : vector<8x512xf32>
    %68 = vector.extract_strided_slice %67 {offsets = [0, 0], sizes = [8, 384], strides = [1, 1]} : vector<8x512xf32> to vector<8x384xf32>
    %cst_40 = arith.constant 5.000000e-01 : f32
    %69 = vector.broadcast %cst_40 : f32 to vector<8x384xf32>
    %70 = arith.mulf %69, %68 : vector<8x384xf32>
    %71 = math.tanh %70 : vector<8x384xf32>
    %cst_41 = arith.constant 5.000000e-01 : f32
    %72 = vector.broadcast %cst_41 : f32 to vector<8x384xf32>
    %73 = arith.mulf %72, %71 : vector<8x384xf32>
    %cst_42 = arith.constant 5.000000e-01 : f32
    %74 = vector.broadcast %cst_42 : f32 to vector<8x384xf32>
    %75 = arith.addf %73, %74 : vector<8x384xf32>
    %76 = vector.extract_strided_slice %75 {offsets = [0, 0], sizes = [8, 128], strides = [1, 1]} : vector<8x384xf32> to vector<8x128xf32>
    %77 = vector.extract_strided_slice %75 {offsets = [0, 128], sizes = [8, 128], strides = [1, 1]} : vector<8x384xf32> to vector<8x128xf32>
    %78 = vector.extract_strided_slice %75 {offsets = [0, 256], sizes = [8, 128], strides = [1, 1]} : vector<8x384xf32> to vector<8x128xf32>
    %79 = vector.extract_strided_slice %67 {offsets = [0, 384], sizes = [8, 128], strides = [1, 1]} : vector<8x512xf32> to vector<8x128xf32>
    %80 = math.tanh %79 : vector<8x128xf32>
    %81 = arith.mulf %77, %39 : vector<8x128xf32>
    %82 = arith.mulf %76, %80 : vector<8x128xf32>
    %83 = arith.addf %81, %82 : vector<8x128xf32>
    %84 = math.tanh %83 : vector<8x128xf32>
    %85 = arith.mulf %78, %84 : vector<8x128xf32>
    %c8 = arith.constant 8 : index
    %c0_43 = arith.constant 0 : index
    %86 = vector.load %arg14[%c8, %c0_43] : memref<64x512xf32, #tpu.memory_space<vmem>>, vector<8x512xf32>
    %87 = arith.truncf %61 : vector<8x128xf32> to vector<8x128xbf16>
    %cst_44 = arith.constant dense<0.000000e+00> : vector<8x512xf32>
    %88 = tpu.matmul %87, %33, %cst_44 {dimension_numbers = #tpu.dot_dimension_numbers<[1], [0], [0], [1], [0, 0, 1, 1], [], []>} : vector<8x128xbf16>, vector<128x512xbf16>, vector<8x512xf32> -> vector<8x512xf32>
    %89 = arith.addf %86, %88 : vector<8x512xf32>
    %90 = vector.extract_strided_slice %89 {offsets = [0, 0], sizes = [8, 384], strides = [1, 1]} : vector<8x512xf32> to vector<8x384xf32>
    %cst_45 = arith.constant 5.000000e-01 : f32
    %91 = vector.broadcast %cst_45 : f32 to vector<8x384xf32>
    %92 = arith.mulf %91, %90 : vector<8x384xf32>
    %93 = math.tanh %92 : vector<8x384xf32>
    %cst_46 = arith.constant 5.000000e-01 : f32
    %94 = vector.broadcast %cst_46 : f32 to vector<8x384xf32>
    %95 = arith.mulf %94, %93 : vector<8x384xf32>
    %cst_47 = arith.constant 5.000000e-01 : f32
    %96 = vector.broadcast %cst_47 : f32 to vector<8x384xf32>
    %97 = arith.addf %95, %96 : vector<8x384xf32>
    %98 = vector.extract_strided_slice %97 {offsets = [0, 0], sizes = [8, 128], strides = [1, 1]} : vector<8x384xf32> to vector<8x128xf32>
    %99 = vector.extract_strided_slice %97 {offsets = [0, 128], sizes = [8, 128], strides = [1, 1]} : vector<8x384xf32> to vector<8x128xf32>
    %100 = vector.extract_strided_slice %97 {offsets = [0, 256], sizes = [8, 128], strides = [1, 1]} : vector<8x384xf32> to vector<8x128xf32>
    %101 = vector.extract_strided_slice %89 {offsets = [0, 384], sizes = [8, 128], strides = [1, 1]} : vector<8x512xf32> to vector<8x128xf32>
    %102 = math.tanh %101 : vector<8x128xf32>
    %103 = arith.mulf %99, %59 : vector<8x128xf32>
    %104 = arith.mulf %98, %102 : vector<8x128xf32>
    %105 = arith.addf %103, %104 : vector<8x128xf32>
    %106 = math.tanh %105 : vector<8x128xf32>
    %107 = arith.mulf %100, %106 : vector<8x128xf32>
    %108 = arith.truncf %85 : vector<8x128xf32> to vector<8x128xbf16>
    %cst_48 = arith.constant dense<0.000000e+00> : vector<8x512xf32>
    %109 = tpu.matmul %108, %35, %cst_48 {dimension_numbers = #tpu.dot_dimension_numbers<[1], [0], [0], [1], [0, 0, 1, 1], [], []>} : vector<8x128xbf16>, vector<128x512xbf16>, vector<8x512xf32> -> vector<8x512xf32>
    %110 = arith.truncf %107 : vector<8x128xf32> to vector<8x128xbf16>
    %cst_49 = arith.constant dense<0.000000e+00> : vector<8x512xf32>
    %111 = tpu.matmul %110, %34, %cst_49 {dimension_numbers = #tpu.dot_dimension_numbers<[1], [0], [0], [1], [0, 0, 1, 1], [], []>} : vector<8x128xbf16>, vector<128x512xbf16>, vector<8x512xf32> -> vector<8x512xf32>
    %112 = arith.addf %109, %111 : vector<8x512xf32>
    %113 = arith.addf %112, %38 : vector<8x512xf32>
    %114 = vector.extract_strided_slice %113 {offsets = [0, 0], sizes = [8, 384], strides = [1, 1]} : vector<8x512xf32> to vector<8x384xf32>
    %cst_50 = arith.constant 5.000000e-01 : f32
    %115 = vector.broadcast %cst_50 : f32 to vector<8x384xf32>
    %116 = arith.mulf %115, %114 : vector<8x384xf32>
    %117 = math.tanh %116 : vector<8x384xf32>
    %cst_51 = arith.constant 5.000000e-01 : f32
    %118 = vector.broadcast %cst_51 : f32 to vector<8x384xf32>
    %119 = arith.mulf %118, %117 : vector<8x384xf32>
    %cst_52 = arith.constant 5.000000e-01 : f32
    %120 = vector.broadcast %cst_52 : f32 to vector<8x384xf32>
    %121 = arith.addf %119, %120 : vector<8x384xf32>
    %122 = vector.extract_strided_slice %121 {offsets = [0, 0], sizes = [8, 128], strides = [1, 1]} : vector<8x384xf32> to vector<8x128xf32>
    %123 = vector.extract_strided_slice %121 {offsets = [0, 128], sizes = [8, 128], strides = [1, 1]} : vector<8x384xf32> to vector<8x128xf32>
    %124 = vector.extract_strided_slice %121 {offsets = [0, 256], sizes = [8, 128], strides = [1, 1]} : vector<8x384xf32> to vector<8x128xf32>
    %125 = vector.extract_strided_slice %113 {offsets = [0, 384], sizes = [8, 128], strides = [1, 1]} : vector<8x512xf32> to vector<8x128xf32>
    %126 = math.tanh %125 : vector<8x128xf32>
    %127 = arith.mulf %123, %83 : vector<8x128xf32>
    %128 = arith.mulf %122, %126 : vector<8x128xf32>
    %129 = arith.addf %127, %128 : vector<8x128xf32>
    %130 = math.tanh %129 : vector<8x128xf32>
    %131 = arith.mulf %124, %130 : vector<8x128xf32>
    %c16 = arith.constant 16 : index
    %c0_53 = arith.constant 0 : index
    %132 = vector.load %arg14[%c16, %c0_53] : memref<64x512xf32, #tpu.memory_space<vmem>>, vector<8x512xf32>
    %133 = arith.truncf %107 : vector<8x128xf32> to vector<8x128xbf16>
    %cst_54 = arith.constant dense<0.000000e+00> : vector<8x512xf32>
    %134 = tpu.matmul %133, %33, %cst_54 {dimension_numbers = #tpu.dot_dimension_numbers<[1], [0], [0], [1], [0, 0, 1, 1], [], []>} : vector<8x128xbf16>, vector<128x512xbf16>, vector<8x512xf32> -> vector<8x512xf32>
    %135 = arith.addf %132, %134 : vector<8x512xf32>
    %136 = vector.extract_strided_slice %135 {offsets = [0, 0], sizes = [8, 384], strides = [1, 1]} : vector<8x512xf32> to vector<8x384xf32>
    %cst_55 = arith.constant 5.000000e-01 : f32
    %137 = vector.broadcast %cst_55 : f32 to vector<8x384xf32>
    %138 = arith.mulf %137, %136 : vector<8x384xf32>
    %139 = math.tanh %138 : vector<8x384xf32>
    %cst_56 = arith.constant 5.000000e-01 : f32
    %140 = vector.broadcast %cst_56 : f32 to vector<8x384xf32>
    %141 = arith.mulf %140, %139 : vector<8x384xf32>
    %cst_57 = arith.constant 5.000000e-01 : f32
    %142 = vector.broadcast %cst_57 : f32 to vector<8x384xf32>
    %143 = arith.addf %141, %142 : vector<8x384xf32>
    %144 = vector.extract_strided_slice %143 {offsets = [0, 0], sizes = [8, 128], strides = [1, 1]} : vector<8x384xf32> to vector<8x128xf32>
    %145 = vector.extract_strided_slice %143 {offsets = [0, 128], sizes = [8, 128], strides = [1, 1]} : vector<8x384xf32> to vector<8x128xf32>
    %146 = vector.extract_strided_slice %143 {offsets = [0, 256], sizes = [8, 128], strides = [1, 1]} : vector<8x384xf32> to vector<8x128xf32>
    %147 = vector.extract_strided_slice %135 {offsets = [0, 384], sizes = [8, 128], strides = [1, 1]} : vector<8x512xf32> to vector<8x128xf32>
    %148 = math.tanh %147 : vector<8x128xf32>
    %149 = arith.mulf %145, %105 : vector<8x128xf32>
    %150 = arith.mulf %144, %148 : vector<8x128xf32>
    %151 = arith.addf %149, %150 : vector<8x128xf32>
    %152 = math.tanh %151 : vector<8x128xf32>
    %153 = arith.mulf %146, %152 : vector<8x128xf32>
    %154 = arith.truncf %131 : vector<8x128xf32> to vector<8x128xbf16>
    %cst_58 = arith.constant dense<0.000000e+00> : vector<8x512xf32>
    %155 = tpu.matmul %154, %35, %cst_58 {dimension_numbers = #tpu.dot_dimension_numbers<[1], [0], [0], [1], [0, 0, 1, 1], [], []>} : vector<8x128xbf16>, vector<128x512xbf16>, vector<8x512xf32> -> vector<8x512xf32>
    %156 = arith.truncf %153 : vector<8x128xf32> to vector<8x128xbf16>
    %cst_59 = arith.constant dense<0.000000e+00> : vector<8x512xf32>
    %157 = tpu.matmul %156, %34, %cst_59 {dimension_numbers = #tpu.dot_dimension_numbers<[1], [0], [0], [1], [0, 0, 1, 1], [], []>} : vector<8x128xbf16>, vector<128x512xbf16>, vector<8x512xf32> -> vector<8x512xf32>
    %158 = arith.addf %155, %157 : vector<8x512xf32>
    %159 = arith.addf %158, %38 : vector<8x512xf32>
    %160 = vector.extract_strided_slice %159 {offsets = [0, 0], sizes = [8, 384], strides = [1, 1]} : vector<8x512xf32> to vector<8x384xf32>
    %cst_60 = arith.constant 5.000000e-01 : f32
    %161 = vector.broadcast %cst_60 : f32 to vector<8x384xf32>
    %162 = arith.mulf %161, %160 : vector<8x384xf32>
    %163 = math.tanh %162 : vector<8x384xf32>
    %cst_61 = arith.constant 5.000000e-01 : f32
    %164 = vector.broadcast %cst_61 : f32 to vector<8x384xf32>
    %165 = arith.mulf %164, %163 : vector<8x384xf32>
    %cst_62 = arith.constant 5.000000e-01 : f32
    %166 = vector.broadcast %cst_62 : f32 to vector<8x384xf32>
    %167 = arith.addf %165, %166 : vector<8x384xf32>
    %168 = vector.extract_strided_slice %167 {offsets = [0, 0], sizes = [8, 128], strides = [1, 1]} : vector<8x384xf32> to vector<8x128xf32>
    %169 = vector.extract_strided_slice %167 {offsets = [0, 128], sizes = [8, 128], strides = [1, 1]} : vector<8x384xf32> to vector<8x128xf32>
    %170 = vector.extract_strided_slice %167 {offsets = [0, 256], sizes = [8, 128], strides = [1, 1]} : vector<8x384xf32> to vector<8x128xf32>
    %171 = vector.extract_strided_slice %159 {offsets = [0, 384], sizes = [8, 128], strides = [1, 1]} : vector<8x512xf32> to vector<8x128xf32>
    %172 = math.tanh %171 : vector<8x128xf32>
    %173 = arith.mulf %169, %129 : vector<8x128xf32>
    %174 = arith.mulf %168, %172 : vector<8x128xf32>
    %175 = arith.addf %173, %174 : vector<8x128xf32>
    %176 = math.tanh %175 : vector<8x128xf32>
    %177 = arith.mulf %170, %176 : vector<8x128xf32>
    %c24 = arith.constant 24 : index
    %c0_63 = arith.constant 0 : index
    %178 = vector.load %arg14[%c24, %c0_63] : memref<64x512xf32, #tpu.memory_space<vmem>>, vector<8x512xf32>
    %179 = arith.truncf %153 : vector<8x128xf32> to vector<8x128xbf16>
    %cst_64 = arith.constant dense<0.000000e+00> : vector<8x512xf32>
    %180 = tpu.matmul %179, %33, %cst_64 {dimension_numbers = #tpu.dot_dimension_numbers<[1], [0], [0], [1], [0, 0, 1, 1], [], []>} : vector<8x128xbf16>, vector<128x512xbf16>, vector<8x512xf32> -> vector<8x512xf32>
    %181 = arith.addf %178, %180 : vector<8x512xf32>
    %182 = vector.extract_strided_slice %181 {offsets = [0, 0], sizes = [8, 384], strides = [1, 1]} : vector<8x512xf32> to vector<8x384xf32>
    %cst_65 = arith.constant 5.000000e-01 : f32
    %183 = vector.broadcast %cst_65 : f32 to vector<8x384xf32>
    %184 = arith.mulf %183, %182 : vector<8x384xf32>
    %185 = math.tanh %184 : vector<8x384xf32>
    %cst_66 = arith.constant 5.000000e-01 : f32
    %186 = vector.broadcast %cst_66 : f32 to vector<8x384xf32>
    %187 = arith.mulf %186, %185 : vector<8x384xf32>
    %cst_67 = arith.constant 5.000000e-01 : f32
    %188 = vector.broadcast %cst_67 : f32 to vector<8x384xf32>
    %189 = arith.addf %187, %188 : vector<8x384xf32>
    %190 = vector.extract_strided_slice %189 {offsets = [0, 0], sizes = [8, 128], strides = [1, 1]} : vector<8x384xf32> to vector<8x128xf32>
    %191 = vector.extract_strided_slice %189 {offsets = [0, 128], sizes = [8, 128], strides = [1, 1]} : vector<8x384xf32> to vector<8x128xf32>
    %192 = vector.extract_strided_slice %189 {offsets = [0, 256], sizes = [8, 128], strides = [1, 1]} : vector<8x384xf32> to vector<8x128xf32>
    %193 = vector.extract_strided_slice %181 {offsets = [0, 384], sizes = [8, 128], strides = [1, 1]} : vector<8x512xf32> to vector<8x128xf32>
    %194 = math.tanh %193 : vector<8x128xf32>
    %195 = arith.mulf %191, %151 : vector<8x128xf32>
    %196 = arith.mulf %190, %194 : vector<8x128xf32>
    %197 = arith.addf %195, %196 : vector<8x128xf32>
    %198 = math.tanh %197 : vector<8x128xf32>
    %199 = arith.mulf %192, %198 : vector<8x128xf32>
    %200 = arith.truncf %177 : vector<8x128xf32> to vector<8x128xbf16>
    %cst_68 = arith.constant dense<0.000000e+00> : vector<8x512xf32>
    %201 = tpu.matmul %200, %35, %cst_68 {dimension_numbers = #tpu.dot_dimension_numbers<[1], [0], [0], [1], [0, 0, 1, 1], [], []>} : vector<8x128xbf16>, vector<128x512xbf16>, vector<8x512xf32> -> vector<8x512xf32>
    %202 = arith.truncf %199 : vector<8x128xf32> to vector<8x128xbf16>
    %cst_69 = arith.constant dense<0.000000e+00> : vector<8x512xf32>
    %203 = tpu.matmul %202, %34, %cst_69 {dimension_numbers = #tpu.dot_dimension_numbers<[1], [0], [0], [1], [0, 0, 1, 1], [], []>} : vector<8x128xbf16>, vector<128x512xbf16>, vector<8x512xf32> -> vector<8x512xf32>
    %204 = arith.addf %201, %203 : vector<8x512xf32>
    %205 = arith.addf %204, %38 : vector<8x512xf32>
    %206 = vector.extract_strided_slice %205 {offsets = [0, 0], sizes = [8, 384], strides = [1, 1]} : vector<8x512xf32> to vector<8x384xf32>
    %cst_70 = arith.constant 5.000000e-01 : f32
    %207 = vector.broadcast %cst_70 : f32 to vector<8x384xf32>
    %208 = arith.mulf %207, %206 : vector<8x384xf32>
    %209 = math.tanh %208 : vector<8x384xf32>
    %cst_71 = arith.constant 5.000000e-01 : f32
    %210 = vector.broadcast %cst_71 : f32 to vector<8x384xf32>
    %211 = arith.mulf %210, %209 : vector<8x384xf32>
    %cst_72 = arith.constant 5.000000e-01 : f32
    %212 = vector.broadcast %cst_72 : f32 to vector<8x384xf32>
    %213 = arith.addf %211, %212 : vector<8x384xf32>
    %214 = vector.extract_strided_slice %213 {offsets = [0, 0], sizes = [8, 128], strides = [1, 1]} : vector<8x384xf32> to vector<8x128xf32>
    %215 = vector.extract_strided_slice %213 {offsets = [0, 128], sizes = [8, 128], strides = [1, 1]} : vector<8x384xf32> to vector<8x128xf32>
    %216 = vector.extract_strided_slice %213 {offsets = [0, 256], sizes = [8, 128], strides = [1, 1]} : vector<8x384xf32> to vector<8x128xf32>
    %217 = vector.extract_strided_slice %205 {offsets = [0, 384], sizes = [8, 128], strides = [1, 1]} : vector<8x512xf32> to vector<8x128xf32>
    %218 = math.tanh %217 : vector<8x128xf32>
    %219 = arith.mulf %215, %175 : vector<8x128xf32>
    %220 = arith.mulf %214, %218 : vector<8x128xf32>
    %221 = arith.addf %219, %220 : vector<8x128xf32>
    %222 = math.tanh %221 : vector<8x128xf32>
    %223 = arith.mulf %216, %222 : vector<8x128xf32>
    %c32 = arith.constant 32 : index
    %c0_73 = arith.constant 0 : index
    %224 = vector.load %arg14[%c32, %c0_73] : memref<64x512xf32, #tpu.memory_space<vmem>>, vector<8x512xf32>
    %225 = arith.truncf %199 : vector<8x128xf32> to vector<8x128xbf16>
    %cst_74 = arith.constant dense<0.000000e+00> : vector<8x512xf32>
    %226 = tpu.matmul %225, %33, %cst_74 {dimension_numbers = #tpu.dot_dimension_numbers<[1], [0], [0], [1], [0, 0, 1, 1], [], []>} : vector<8x128xbf16>, vector<128x512xbf16>, vector<8x512xf32> -> vector<8x512xf32>
    %227 = arith.addf %224, %226 : vector<8x512xf32>
    %228 = vector.extract_strided_slice %227 {offsets = [0, 0], sizes = [8, 384], strides = [1, 1]} : vector<8x512xf32> to vector<8x384xf32>
    %cst_75 = arith.constant 5.000000e-01 : f32
    %229 = vector.broadcast %cst_75 : f32 to vector<8x384xf32>
    %230 = arith.mulf %229, %228 : vector<8x384xf32>
    %231 = math.tanh %230 : vector<8x384xf32>
    %cst_76 = arith.constant 5.000000e-01 : f32
    %232 = vector.broadcast %cst_76 : f32 to vector<8x384xf32>
    %233 = arith.mulf %232, %231 : vector<8x384xf32>
    %cst_77 = arith.constant 5.000000e-01 : f32
    %234 = vector.broadcast %cst_77 : f32 to vector<8x384xf32>
    %235 = arith.addf %233, %234 : vector<8x384xf32>
    %236 = vector.extract_strided_slice %235 {offsets = [0, 0], sizes = [8, 128], strides = [1, 1]} : vector<8x384xf32> to vector<8x128xf32>
    %237 = vector.extract_strided_slice %235 {offsets = [0, 128], sizes = [8, 128], strides = [1, 1]} : vector<8x384xf32> to vector<8x128xf32>
    %238 = vector.extract_strided_slice %235 {offsets = [0, 256], sizes = [8, 128], strides = [1, 1]} : vector<8x384xf32> to vector<8x128xf32>
    %239 = vector.extract_strided_slice %227 {offsets = [0, 384], sizes = [8, 128], strides = [1, 1]} : vector<8x512xf32> to vector<8x128xf32>
    %240 = math.tanh %239 : vector<8x128xf32>
    %241 = arith.mulf %237, %197 : vector<8x128xf32>
    %242 = arith.mulf %236, %240 : vector<8x128xf32>
    %243 = arith.addf %241, %242 : vector<8x128xf32>
    %244 = math.tanh %243 : vector<8x128xf32>
    %245 = arith.mulf %238, %244 : vector<8x128xf32>
    %246 = arith.truncf %223 : vector<8x128xf32> to vector<8x128xbf16>
    %cst_78 = arith.constant dense<0.000000e+00> : vector<8x512xf32>
    %247 = tpu.matmul %246, %35, %cst_78 {dimension_numbers = #tpu.dot_dimension_numbers<[1], [0], [0], [1], [0, 0, 1, 1], [], []>} : vector<8x128xbf16>, vector<128x512xbf16>, vector<8x512xf32> -> vector<8x512xf32>
    %248 = arith.truncf %245 : vector<8x128xf32> to vector<8x128xbf16>
    %cst_79 = arith.constant dense<0.000000e+00> : vector<8x512xf32>
    %249 = tpu.matmul %248, %34, %cst_79 {dimension_numbers = #tpu.dot_dimension_numbers<[1], [0], [0], [1], [0, 0, 1, 1], [], []>} : vector<8x128xbf16>, vector<128x512xbf16>, vector<8x512xf32> -> vector<8x512xf32>
    %250 = arith.addf %247, %249 : vector<8x512xf32>
    %251 = arith.addf %250, %38 : vector<8x512xf32>
    %252 = vector.extract_strided_slice %251 {offsets = [0, 0], sizes = [8, 384], strides = [1, 1]} : vector<8x512xf32> to vector<8x384xf32>
    %cst_80 = arith.constant 5.000000e-01 : f32
    %253 = vector.broadcast %cst_80 : f32 to vector<8x384xf32>
    %254 = arith.mulf %253, %252 : vector<8x384xf32>
    %255 = math.tanh %254 : vector<8x384xf32>
    %cst_81 = arith.constant 5.000000e-01 : f32
    %256 = vector.broadcast %cst_81 : f32 to vector<8x384xf32>
    %257 = arith.mulf %256, %255 : vector<8x384xf32>
    %cst_82 = arith.constant 5.000000e-01 : f32
    %258 = vector.broadcast %cst_82 : f32 to vector<8x384xf32>
    %259 = arith.addf %257, %258 : vector<8x384xf32>
    %260 = vector.extract_strided_slice %259 {offsets = [0, 0], sizes = [8, 128], strides = [1, 1]} : vector<8x384xf32> to vector<8x128xf32>
    %261 = vector.extract_strided_slice %259 {offsets = [0, 128], sizes = [8, 128], strides = [1, 1]} : vector<8x384xf32> to vector<8x128xf32>
    %262 = vector.extract_strided_slice %259 {offsets = [0, 256], sizes = [8, 128], strides = [1, 1]} : vector<8x384xf32> to vector<8x128xf32>
    %263 = vector.extract_strided_slice %251 {offsets = [0, 384], sizes = [8, 128], strides = [1, 1]} : vector<8x512xf32> to vector<8x128xf32>
    %264 = math.tanh %263 : vector<8x128xf32>
    %265 = arith.mulf %261, %221 : vector<8x128xf32>
    %266 = arith.mulf %260, %264 : vector<8x128xf32>
    %267 = arith.addf %265, %266 : vector<8x128xf32>
    %268 = math.tanh %267 : vector<8x128xf32>
    %269 = arith.mulf %262, %268 : vector<8x128xf32>
    %c40 = arith.constant 40 : index
    %c0_83 = arith.constant 0 : index
    %270 = vector.load %arg14[%c40, %c0_83] : memref<64x512xf32, #tpu.memory_space<vmem>>, vector<8x512xf32>
    %271 = arith.truncf %245 : vector<8x128xf32> to vector<8x128xbf16>
    %cst_84 = arith.constant dense<0.000000e+00> : vector<8x512xf32>
    %272 = tpu.matmul %271, %33, %cst_84 {dimension_numbers = #tpu.dot_dimension_numbers<[1], [0], [0], [1], [0, 0, 1, 1], [], []>} : vector<8x128xbf16>, vector<128x512xbf16>, vector<8x512xf32> -> vector<8x512xf32>
    %273 = arith.addf %270, %272 : vector<8x512xf32>
    %274 = vector.extract_strided_slice %273 {offsets = [0, 0], sizes = [8, 384], strides = [1, 1]} : vector<8x512xf32> to vector<8x384xf32>
    %cst_85 = arith.constant 5.000000e-01 : f32
    %275 = vector.broadcast %cst_85 : f32 to vector<8x384xf32>
    %276 = arith.mulf %275, %274 : vector<8x384xf32>
    %277 = math.tanh %276 : vector<8x384xf32>
    %cst_86 = arith.constant 5.000000e-01 : f32
    %278 = vector.broadcast %cst_86 : f32 to vector<8x384xf32>
    %279 = arith.mulf %278, %277 : vector<8x384xf32>
    %cst_87 = arith.constant 5.000000e-01 : f32
    %280 = vector.broadcast %cst_87 : f32 to vector<8x384xf32>
    %281 = arith.addf %279, %280 : vector<8x384xf32>
    %282 = vector.extract_strided_slice %281 {offsets = [0, 0], sizes = [8, 128], strides = [1, 1]} : vector<8x384xf32> to vector<8x128xf32>
    %283 = vector.extract_strided_slice %281 {offsets = [0, 128], sizes = [8, 128], strides = [1, 1]} : vector<8x384xf32> to vector<8x128xf32>
    %284 = vector.extract_strided_slice %281 {offsets = [0, 256], sizes = [8, 128], strides = [1, 1]} : vector<8x384xf32> to vector<8x128xf32>
    %285 = vector.extract_strided_slice %273 {offsets = [0, 384], sizes = [8, 128], strides = [1, 1]} : vector<8x512xf32> to vector<8x128xf32>
    %286 = math.tanh %285 : vector<8x128xf32>
    %287 = arith.mulf %283, %243 : vector<8x128xf32>
    %288 = arith.mulf %282, %286 : vector<8x128xf32>
    %289 = arith.addf %287, %288 : vector<8x128xf32>
    %290 = math.tanh %289 : vector<8x128xf32>
    %291 = arith.mulf %284, %290 : vector<8x128xf32>
    %292 = arith.truncf %269 : vector<8x128xf32> to vector<8x128xbf16>
    %cst_88 = arith.constant dense<0.000000e+00> : vector<8x512xf32>
    %293 = tpu.matmul %292, %35, %cst_88 {dimension_numbers = #tpu.dot_dimension_numbers<[1], [0], [0], [1], [0, 0, 1, 1], [], []>} : vector<8x128xbf16>, vector<128x512xbf16>, vector<8x512xf32> -> vector<8x512xf32>
    %294 = arith.truncf %291 : vector<8x128xf32> to vector<8x128xbf16>
    %cst_89 = arith.constant dense<0.000000e+00> : vector<8x512xf32>
    %295 = tpu.matmul %294, %34, %cst_89 {dimension_numbers = #tpu.dot_dimension_numbers<[1], [0], [0], [1], [0, 0, 1, 1], [], []>} : vector<8x128xbf16>, vector<128x512xbf16>, vector<8x512xf32> -> vector<8x512xf32>
    %296 = arith.addf %293, %295 : vector<8x512xf32>
    %297 = arith.addf %296, %38 : vector<8x512xf32>
    %298 = vector.extract_strided_slice %297 {offsets = [0, 0], sizes = [8, 384], strides = [1, 1]} : vector<8x512xf32> to vector<8x384xf32>
    %cst_90 = arith.constant 5.000000e-01 : f32
    %299 = vector.broadcast %cst_90 : f32 to vector<8x384xf32>
    %300 = arith.mulf %299, %298 : vector<8x384xf32>
    %301 = math.tanh %300 : vector<8x384xf32>
    %cst_91 = arith.constant 5.000000e-01 : f32
    %302 = vector.broadcast %cst_91 : f32 to vector<8x384xf32>
    %303 = arith.mulf %302, %301 : vector<8x384xf32>
    %cst_92 = arith.constant 5.000000e-01 : f32
    %304 = vector.broadcast %cst_92 : f32 to vector<8x384xf32>
    %305 = arith.addf %303, %304 : vector<8x384xf32>
    %306 = vector.extract_strided_slice %305 {offsets = [0, 0], sizes = [8, 128], strides = [1, 1]} : vector<8x384xf32> to vector<8x128xf32>
    %307 = vector.extract_strided_slice %305 {offsets = [0, 128], sizes = [8, 128], strides = [1, 1]} : vector<8x384xf32> to vector<8x128xf32>
    %308 = vector.extract_strided_slice %305 {offsets = [0, 256], sizes = [8, 128], strides = [1, 1]} : vector<8x384xf32> to vector<8x128xf32>
    %309 = vector.extract_strided_slice %297 {offsets = [0, 384], sizes = [8, 128], strides = [1, 1]} : vector<8x512xf32> to vector<8x128xf32>
    %310 = math.tanh %309 : vector<8x128xf32>
    %311 = arith.mulf %307, %267 : vector<8x128xf32>
    %312 = arith.mulf %306, %310 : vector<8x128xf32>
    %313 = arith.addf %311, %312 : vector<8x128xf32>
    %314 = math.tanh %313 : vector<8x128xf32>
    %315 = arith.mulf %308, %314 : vector<8x128xf32>
    %c48 = arith.constant 48 : index
    %c0_93 = arith.constant 0 : index
    %316 = vector.load %arg14[%c48, %c0_93] : memref<64x512xf32, #tpu.memory_space<vmem>>, vector<8x512xf32>
    %317 = arith.truncf %291 : vector<8x128xf32> to vector<8x128xbf16>
    %cst_94 = arith.constant dense<0.000000e+00> : vector<8x512xf32>
    %318 = tpu.matmul %317, %33, %cst_94 {dimension_numbers = #tpu.dot_dimension_numbers<[1], [0], [0], [1], [0, 0, 1, 1], [], []>} : vector<8x128xbf16>, vector<128x512xbf16>, vector<8x512xf32> -> vector<8x512xf32>
    %319 = arith.addf %316, %318 : vector<8x512xf32>
    %320 = vector.extract_strided_slice %319 {offsets = [0, 0], sizes = [8, 384], strides = [1, 1]} : vector<8x512xf32> to vector<8x384xf32>
    %cst_95 = arith.constant 5.000000e-01 : f32
    %321 = vector.broadcast %cst_95 : f32 to vector<8x384xf32>
    %322 = arith.mulf %321, %320 : vector<8x384xf32>
    %323 = math.tanh %322 : vector<8x384xf32>
    %cst_96 = arith.constant 5.000000e-01 : f32
    %324 = vector.broadcast %cst_96 : f32 to vector<8x384xf32>
    %325 = arith.mulf %324, %323 : vector<8x384xf32>
    %cst_97 = arith.constant 5.000000e-01 : f32
    %326 = vector.broadcast %cst_97 : f32 to vector<8x384xf32>
    %327 = arith.addf %325, %326 : vector<8x384xf32>
    %328 = vector.extract_strided_slice %327 {offsets = [0, 0], sizes = [8, 128], strides = [1, 1]} : vector<8x384xf32> to vector<8x128xf32>
    %329 = vector.extract_strided_slice %327 {offsets = [0, 128], sizes = [8, 128], strides = [1, 1]} : vector<8x384xf32> to vector<8x128xf32>
    %330 = vector.extract_strided_slice %327 {offsets = [0, 256], sizes = [8, 128], strides = [1, 1]} : vector<8x384xf32> to vector<8x128xf32>
    %331 = vector.extract_strided_slice %319 {offsets = [0, 384], sizes = [8, 128], strides = [1, 1]} : vector<8x512xf32> to vector<8x128xf32>
    %332 = math.tanh %331 : vector<8x128xf32>
    %333 = arith.mulf %329, %289 : vector<8x128xf32>
    %334 = arith.mulf %328, %332 : vector<8x128xf32>
    %335 = arith.addf %333, %334 : vector<8x128xf32>
    %336 = math.tanh %335 : vector<8x128xf32>
    %337 = arith.mulf %330, %336 : vector<8x128xf32>
    %338 = arith.truncf %315 : vector<8x128xf32> to vector<8x128xbf16>
    %cst_98 = arith.constant dense<0.000000e+00> : vector<8x512xf32>
    %339 = tpu.matmul %338, %35, %cst_98 {dimension_numbers = #tpu.dot_dimension_numbers<[1], [0], [0], [1], [0, 0, 1, 1], [], []>} : vector<8x128xbf16>, vector<128x512xbf16>, vector<8x512xf32> -> vector<8x512xf32>
    %340 = arith.truncf %337 : vector<8x128xf32> to vector<8x128xbf16>
    %cst_99 = arith.constant dense<0.000000e+00> : vector<8x512xf32>
    %341 = tpu.matmul %340, %34, %cst_99 {dimension_numbers = #tpu.dot_dimension_numbers<[1], [0], [0], [1], [0, 0, 1, 1], [], []>} : vector<8x128xbf16>, vector<128x512xbf16>, vector<8x512xf32> -> vector<8x512xf32>
    %342 = arith.addf %339, %341 : vector<8x512xf32>
    %343 = arith.addf %342, %38 : vector<8x512xf32>
    %344 = vector.extract_strided_slice %343 {offsets = [0, 0], sizes = [8, 384], strides = [1, 1]} : vector<8x512xf32> to vector<8x384xf32>
    %cst_100 = arith.constant 5.000000e-01 : f32
    %345 = vector.broadcast %cst_100 : f32 to vector<8x384xf32>
    %346 = arith.mulf %345, %344 : vector<8x384xf32>
    %347 = math.tanh %346 : vector<8x384xf32>
    %cst_101 = arith.constant 5.000000e-01 : f32
    %348 = vector.broadcast %cst_101 : f32 to vector<8x384xf32>
    %349 = arith.mulf %348, %347 : vector<8x384xf32>
    %cst_102 = arith.constant 5.000000e-01 : f32
    %350 = vector.broadcast %cst_102 : f32 to vector<8x384xf32>
    %351 = arith.addf %349, %350 : vector<8x384xf32>
    %352 = vector.extract_strided_slice %351 {offsets = [0, 0], sizes = [8, 128], strides = [1, 1]} : vector<8x384xf32> to vector<8x128xf32>
    %353 = vector.extract_strided_slice %351 {offsets = [0, 128], sizes = [8, 128], strides = [1, 1]} : vector<8x384xf32> to vector<8x128xf32>
    %354 = vector.extract_strided_slice %351 {offsets = [0, 256], sizes = [8, 128], strides = [1, 1]} : vector<8x384xf32> to vector<8x128xf32>
    %355 = vector.extract_strided_slice %343 {offsets = [0, 384], sizes = [8, 128], strides = [1, 1]} : vector<8x512xf32> to vector<8x128xf32>
    %356 = math.tanh %355 : vector<8x128xf32>
    %357 = arith.mulf %353, %313 : vector<8x128xf32>
    %358 = arith.mulf %352, %356 : vector<8x128xf32>
    %359 = arith.addf %357, %358 : vector<8x128xf32>
    %360 = math.tanh %359 : vector<8x128xf32>
    %361 = arith.mulf %354, %360 : vector<8x128xf32>
    %c56 = arith.constant 56 : index
    %c0_103 = arith.constant 0 : index
    %362 = vector.load %arg14[%c56, %c0_103] : memref<64x512xf32, #tpu.memory_space<vmem>>, vector<8x512xf32>
    %363 = arith.truncf %337 : vector<8x128xf32> to vector<8x128xbf16>
    %cst_104 = arith.constant dense<0.000000e+00> : vector<8x512xf32>
    %364 = tpu.matmul %363, %33, %cst_104 {dimension_numbers = #tpu.dot_dimension_numbers<[1], [0], [0], [1], [0, 0, 1, 1], [], []>} : vector<8x128xbf16>, vector<128x512xbf16>, vector<8x512xf32> -> vector<8x512xf32>
    %365 = arith.addf %362, %364 : vector<8x512xf32>
    %366 = vector.extract_strided_slice %365 {offsets = [0, 0], sizes = [8, 384], strides = [1, 1]} : vector<8x512xf32> to vector<8x384xf32>
    %cst_105 = arith.constant 5.000000e-01 : f32
    %367 = vector.broadcast %cst_105 : f32 to vector<8x384xf32>
    %368 = arith.mulf %367, %366 : vector<8x384xf32>
    %369 = math.tanh %368 : vector<8x384xf32>
    %cst_106 = arith.constant 5.000000e-01 : f32
    %370 = vector.broadcast %cst_106 : f32 to vector<8x384xf32>
    %371 = arith.mulf %370, %369 : vector<8x384xf32>
    %cst_107 = arith.constant 5.000000e-01 : f32
    %372 = vector.broadcast %cst_107 : f32 to vector<8x384xf32>
    %373 = arith.addf %371, %372 : vector<8x384xf32>
    %374 = vector.extract_strided_slice %373 {offsets = [0, 0], sizes = [8, 128], strides = [1, 1]} : vector<8x384xf32> to vector<8x128xf32>
    %375 = vector.extract_strided_slice %373 {offsets = [0, 128], sizes = [8, 128], strides = [1, 1]} : vector<8x384xf32> to vector<8x128xf32>
    %376 = vector.extract_strided_slice %373 {offsets = [0, 256], sizes = [8, 128], strides = [1, 1]} : vector<8x384xf32> to vector<8x128xf32>
    %377 = vector.extract_strided_slice %365 {offsets = [0, 384], sizes = [8, 128], strides = [1, 1]} : vector<8x512xf32> to vector<8x128xf32>
    %378 = math.tanh %377 : vector<8x128xf32>
    %379 = arith.mulf %375, %335 : vector<8x128xf32>
    %380 = arith.mulf %374, %378 : vector<8x128xf32>
    %381 = arith.addf %379, %380 : vector<8x128xf32>
    %382 = math.tanh %381 : vector<8x128xf32>
    %383 = arith.mulf %376, %382 : vector<8x128xf32>
    %384 = arith.truncf %361 : vector<8x128xf32> to vector<8x128xbf16>
    %cst_108 = arith.constant dense<0.000000e+00> : vector<8x512xf32>
    %385 = tpu.matmul %384, %35, %cst_108 {dimension_numbers = #tpu.dot_dimension_numbers<[1], [0], [0], [1], [0, 0, 1, 1], [], []>} : vector<8x128xbf16>, vector<128x512xbf16>, vector<8x512xf32> -> vector<8x512xf32>
    %386 = arith.truncf %383 : vector<8x128xf32> to vector<8x128xbf16>
    %cst_109 = arith.constant dense<0.000000e+00> : vector<8x512xf32>
    %387 = tpu.matmul %386, %34, %cst_109 {dimension_numbers = #tpu.dot_dimension_numbers<[1], [0], [0], [1], [0, 0, 1, 1], [], []>} : vector<8x128xbf16>, vector<128x512xbf16>, vector<8x512xf32> -> vector<8x512xf32>
    %388 = arith.addf %385, %387 : vector<8x512xf32>
    %389 = arith.addf %388, %38 : vector<8x512xf32>
    %390 = vector.extract_strided_slice %389 {offsets = [0, 0], sizes = [8, 384], strides = [1, 1]} : vector<8x512xf32> to vector<8x384xf32>
    %cst_110 = arith.constant 5.000000e-01 : f32
    %391 = vector.broadcast %cst_110 : f32 to vector<8x384xf32>
    %392 = arith.mulf %391, %390 : vector<8x384xf32>
    %393 = math.tanh %392 : vector<8x384xf32>
    %cst_111 = arith.constant 5.000000e-01 : f32
    %394 = vector.broadcast %cst_111 : f32 to vector<8x384xf32>
    %395 = arith.mulf %394, %393 : vector<8x384xf32>
    %cst_112 = arith.constant 5.000000e-01 : f32
    %396 = vector.broadcast %cst_112 : f32 to vector<8x384xf32>
    %397 = arith.addf %395, %396 : vector<8x384xf32>
    %398 = vector.extract_strided_slice %397 {offsets = [0, 0], sizes = [8, 128], strides = [1, 1]} : vector<8x384xf32> to vector<8x128xf32>
    %399 = vector.extract_strided_slice %397 {offsets = [0, 128], sizes = [8, 128], strides = [1, 1]} : vector<8x384xf32> to vector<8x128xf32>
    %400 = vector.extract_strided_slice %397 {offsets = [0, 256], sizes = [8, 128], strides = [1, 1]} : vector<8x384xf32> to vector<8x128xf32>
    %401 = vector.extract_strided_slice %389 {offsets = [0, 384], sizes = [8, 128], strides = [1, 1]} : vector<8x512xf32> to vector<8x128xf32>
    %402 = math.tanh %401 : vector<8x128xf32>
    %403 = arith.mulf %399, %359 : vector<8x128xf32>
    %404 = arith.mulf %398, %402 : vector<8x128xf32>
    %405 = arith.addf %403, %404 : vector<8x128xf32>
    %406 = math.tanh %405 : vector<8x128xf32>
    %407 = arith.mulf %400, %406 : vector<8x128xf32>
    %cst_113 = arith.constant 0.000000e+00 : f32
    %408 = vector.broadcast %cst_113 : f32 to vector<8x128xf32>
    %409 = arith.maximumf %407, %408 : vector<8x128xf32>
    %c0_114 = arith.constant 0 : index
    %c0_115 = arith.constant 0 : index
    %410 = vector.load %arg11[%c0_114, %c0_115] : memref<128x128xf32, #tpu.memory_space<vmem>>, vector<128x128xf32>
    %cst_116 = arith.constant dense<0.000000e+00> : vector<8x128xf32>
    %411 = tpu.matmul %409, %410, %cst_116 {dimension_numbers = #tpu.dot_dimension_numbers<[1], [0], [0], [1], [0, 0, 1, 1], [], []>} : vector<8x128xf32>, vector<128x128xf32>, vector<8x128xf32> -> vector<8x128xf32>
    %412 = arith.addf %17, %411 : vector<8x128xf32>
    %c0_117 = arith.constant 0 : index
    %c0_118 = arith.constant 0 : index
    %413 = vector.load %arg12[%c0_117, %c0_118] : memref<1x128xf32, #tpu.memory_space<vmem>>, vector<1x128xf32>
    %414 = vector.broadcast %413 : vector<1x128xf32> to vector<8x128xf32>
    %415 = arith.addf %412, %414 : vector<8x128xf32>
    %c0_119 = arith.constant 0 : index
    %c0_120 = arith.constant 0 : index
    %416 = vector.load %arg13[%c0_119, %c0_120] : memref<8x128xf32, #tpu.memory_space<vmem>>, vector<8x128xf32>
    tpu.vector_store %arg13[%c0_119, %c0_120], %415 {strides = array<i32>} : memref<8x128xf32, #tpu.memory_space<vmem>>, vector<8x128xf32>,
    return
  }
}

</mosaic_0001>

<llo_original>
// kernel: tpu_custom_call.1
$region0: #{tpu_custom_call.1}
  #allocation0 [shape = 'u32[]', space=smem, size = 0x4, offset = 0x4, fixed_abs, tag = 'smem constant byte address 0x4 - core index']
  #allocation1 [shape = 'u32[72,128]{1,0:T(1,128)}', space=vmem, size = 0x9000, scoped, tag = 'internal scratch']
  #allocation2 [shape = 'f32[64,512]{1,0:T(8,128)}', space=vmem, size = 0x20000, scoped, tag = 'scratch operand']
  %s0 = inlined_call_operand.vmem [shape: f32[64,2], index: 0, kind: input, shape index: {}]
  %s1 = inlined_call_operand.vmem [shape: f32[8,2], index: 1, kind: input, shape index: {}]
  %s2 = inlined_call_operand.vmem [shape: f32[2,128], index: 2, kind: input, shape index: {}]
  %s3 = inlined_call_operand.vmem [shape: f32[1,128], index: 3, kind: input, shape index: {}]
  %s4 = inlined_call_operand.vmem [shape: f32[2,512], index: 4, kind: input, shape index: {}]
  %s5 = inlined_call_operand.hbm [shape: bf16[128,512], index: 5, kind: input, shape index: {}]
  %s6 = inlined_call_operand.vmem [shape: f32[1,512], index: 6, kind: input, shape index: {}]
  %s7 = inlined_call_operand.hbm [shape: bf16[128,512], index: 7, kind: input, shape index: {}]
  %s8 = inlined_call_operand.hbm [shape: bf16[128,512], index: 8, kind: input, shape index: {}]
  %s9 = inlined_call_operand.vmem [shape: f32[1,512], index: 9, kind: input, shape index: {}]
  %s10 = inlined_call_operand.hbm [shape: f32[128,128], index: 10, kind: input, shape index: {}]
  %s11 = inlined_call_operand.hbm [shape: f32[128,128], index: 11, kind: input, shape index: {}]
  %s12 = inlined_call_operand.vmem [shape: f32[1,128], index: 12, kind: input, shape index: {}]
  %s13 = inlined_call_operand.hbm [shape: f32[8,128], index: 13, kind: output, shape index: {}]
  %s14 = sld [smem:[#allocation0]]
  $region82: #{tpu_custom_call.1} parent=0
    _
  %s16 = ssub.s32 1, %s14
  %s17 = scalar_select 0, %s16, %s14
  $region1: #{tpu_custom_call.1} parent=0
    #allocation3 [shape = 'u8[131072]{0}', space=vmem, size = 0x20000, scoped, tag = 'input window, operand 5, single buffered']
    #allocation4 [shape = 's32[1]{0}', space=sflag, size = 0x4, scoped, tag = 'scoped memory for tpu_custom_call.1']
    #allocation5 [shape = 's32[1]{0}', space=sflag, size = 0x4, scoped, tag = 'scoped memory for tpu_custom_call.1']
    #allocation6 [shape = 'u8[131072]{0}', space=vmem, size = 0x20000, scoped, tag = 'input window, operand 7, single buffered']
    #allocation7 [shape = 's32[1]{0}', space=sflag, size = 0x4, scoped, tag = 'scoped memory for tpu_custom_call.1']
    #allocation8 [shape = 'u8[131072]{0}', space=vmem, size = 0x20000, scoped, tag = 'input window, operand 8, single buffered']
    #allocation9 [shape = 'u8[65536]{0}', space=vmem, size = 0x10000, scoped, tag = 'input window, operand 10, single buffered']
    #allocation10 [shape = 's32[1]{0}', space=sflag, size = 0x4, scoped, tag = 'scoped memory for tpu_custom_call.1']
    #allocation11 [shape = 'u8[65536]{0}', space=vmem, size = 0x10000, scoped, tag = 'input window, operand 11, single buffered']
    #allocation12 [shape = 'u8[4096]{0}', space=vmem, size = 0x1000, scoped, tag = 'output window, operand 0, single buffered']
    %18 = vsyncpa [#allocation4], 0
    %19 = vsyncpa [#allocation7], 0
    %20 = vsyncpa [#allocation10], 0
    %21 = vsyncpa [#allocation5], 0
    // Predicated region
    $region2: #{tpu_custom_call.1} parent=1 // pred_check
      _
    $region3: #{tpu_custom_call.1} parent=1 // pred_check_branch
      %23 = sbr.rel (0) target = $region5
    $region4: #{tpu_custom_call.1} parent=1 // pred_region
      _
    $region5: #{tpu_custom_call.1} parent=1 // pred_fallthru
      _
    // Predicated region
    $region6: #{tpu_custom_call.1} parent=1 // pred_check
      _
    $region7: #{tpu_custom_call.1} parent=1 // pred_check_branch
      %25 = sbr.rel (0) target = $region9
    $region8: #{tpu_custom_call.1} parent=1 // pred_region
      _
    $region9: #{tpu_custom_call.1} parent=1 // pred_fallthru
      _
    // Predicated region
    $region10: #{tpu_custom_call.1} parent=1 // pred_check
      _
    $region11: #{tpu_custom_call.1} parent=1 // pred_check_branch
      %27 = sbr.rel (0) target = $region13
    $region12: #{tpu_custom_call.1} parent=1 // pred_region
      _
    $region13: #{tpu_custom_call.1} parent=1 // pred_fallthru
      _
    // Predicated region
    $region14: #{tpu_custom_call.1} parent=1 // pred_check
      _
    $region15: #{tpu_custom_call.1} parent=1 // pred_check_branch
      %29 = sbr.rel (0) target = $region17
    $region16: #{tpu_custom_call.1} parent=1 // pred_region
      _
    $region17: #{tpu_custom_call.1} parent=1 // pred_fallthru
      _
    // Predicated region
    $region18: #{tpu_custom_call.1} parent=1 // pred_check
      _
    $region19: #{tpu_custom_call.1} parent=1 // pred_check_branch
      %31 = sbr.rel (0) target = $region21
    $region20: #{tpu_custom_call.1} parent=1 // pred_region
      _
    $region21: #{tpu_custom_call.1} parent=1 // pred_fallthru
      _
    // Predicated region
    $region22: #{tpu_custom_call.1} parent=1 // pred_check
      _
    $region23: #{tpu_custom_call.1} parent=1 // pred_check_branch
      %33 = sbr.rel (0) target = $region25
    $region24: #{tpu_custom_call.1} parent=1 // pred_region
      %35 = vsyncadd [#allocation4], 0
      %s36 = sshll.u32 %s5, 4
      %s37 = int_to_ptr.hbm [resolvable:$true] %s36
      %s38 = sshll.u32 [#allocation3], 4
      %s39 = int_to_ptr.vmem [resolvable:$true] %s38
      %44 = dma.hbm_to_vmem [thread:$0]  %s37, 4096, %s39, [#allocation4], 256, 256, 16
    $region25: #{tpu_custom_call.1} parent=1 // pred_fallthru
      _
    // Predicated region
    $region26: #{tpu_custom_call.1} parent=1 // pred_check
      _
    $region27: #{tpu_custom_call.1} parent=1 // pred_check_branch
      %46 = sbr.rel (0) target = $region29
    $region28: #{tpu_custom_call.1} parent=1 // pred_region
      _
    $region29: #{tpu_custom_call.1} parent=1 // pred_fallthru
      _
    // Predicated region
    $region30: #{tpu_custom_call.1} parent=1 // pred_check
      _
    $region31: #{tpu_custom_call.1} parent=1 // pred_check_branch
      %48 = sbr.rel (0) target = $region33
    $region32: #{tpu_custom_call.1} parent=1 // pred_region
      %50 = vsyncadd [#allocation7], 0
      %s51 = sshll.u32 %s7, 4
      %s52 = int_to_ptr.hbm [resolvable:$true] %s51
      %s53 = sshll.u32 [#allocation6], 4
      %s54 = int_to_ptr.vmem [resolvable:$true] %s53
      %59 = dma.hbm_to_vmem [thread:$0]  %s52, 4096, %s54, [#allocation7], 256, 256, 16
    $region33: #{tpu_custom_call.1} parent=1 // pred_fallthru
      _
    // Predicated region
    $region34: #{tpu_custom_call.1} parent=1 // pred_check
      _
    $region35: #{tpu_custom_call.1} parent=1 // pred_check_branch
      %61 = sbr.rel (0) target = $region37
    $region36: #{tpu_custom_call.1} parent=1 // pred_region
      %63 = vsyncadd [#allocation7], 0
      %s64 = sshll.u32 %s8, 4
      %s65 = int_to_ptr.hbm [resolvable:$true] %s64
      %s66 = sshll.u32 [#allocation8], 4
      %s67 = int_to_ptr.vmem [resolvable:$true] %s66
      %72 = dma.hbm_to_vmem [thread:$0]  %s65, 4096, %s67, [#allocation7], 256, 256, 16
    $region37: #{tpu_custom_call.1} parent=1 // pred_fallthru
      _
    // Predicated region
    $region38: #{tpu_custom_call.1} parent=1 // pred_check
      _
    $region39: #{tpu_custom_call.1} parent=1 // pred_check_branch
      %74 = sbr.rel (0) target = $region41
    $region40: #{tpu_custom_call.1} parent=1 // pred_region
      _
    $region41: #{tpu_custom_call.1} parent=1 // pred_fallthru
      _
    // Predicated region
    $region42: #{tpu_custom_call.1} parent=1 // pred_check
      _
    $region43: #{tpu_custom_call.1} parent=1 // pred_check_branch
      %76 = sbr.rel (0) target = $region45
    $region44: #{tpu_custom_call.1} parent=1 // pred_region
      %78 = vsyncadd [#allocation10], 0
      %s79 = sshll.u32 %s10, 4
      %s80 = int_to_ptr.hbm [resolvable:$true] %s79
      %s81 = sshll.u32 [#allocation9], 4
      %s82 = int_to_ptr.vmem [resolvable:$true] %s81
      %87 = dma.hbm_to_vmem [thread:$0]  %s80, 2048, %s82, [#allocation10], 128, 128, 8
    $region45: #{tpu_custom_call.1} parent=1 // pred_fallthru
      _
    // Predicated region
    $region46: #{tpu_custom_call.1} parent=1 // pred_check
      _
    $region47: #{tpu_custom_call.1} parent=1 // pred_check_branch
      %89 = sbr.rel (0) target = $region49
    $region48: #{tpu_custom_call.1} parent=1 // pred_region
      %91 = vsyncadd [#allocation10], 0
      %s92 = sshll.u32 %s11, 4
      %s93 = int_to_ptr.hbm [resolvable:$true] %s92
      %s94 = sshll.u32 [#allocation11], 4
      %s95 = int_to_ptr.vmem [resolvable:$true] %s94
      %100 = dma.hbm_to_vmem [thread:$0]  %s93, 2048, %s95, [#allocation10], 128, 128, 8
    $region49: #{tpu_custom_call.1} parent=1 // pred_fallthru
      _
    // Predicated region
    $region50: #{tpu_custom_call.1} parent=1 // pred_check
      _
    $region51: #{tpu_custom_call.1} parent=1 // pred_check_branch
      %102 = sbr.rel (0) target = $region53
    $region52: #{tpu_custom_call.1} parent=1 // pred_region
      _
    $region53: #{tpu_custom_call.1} parent=1 // pred_fallthru
      _
    // Predicated region
    $region54: #{tpu_custom_call.1} parent=1 // pred_check
      _
    $region55: #{tpu_custom_call.1} parent=1 // pred_check_branch
      %104 = sbr.rel (0) target = $region57
    $region56: #{tpu_custom_call.1} parent=1 // pred_region
      %106 = dma.done [#allocation4], 4096
    $region57: #{tpu_custom_call.1} parent=1 // pred_fallthru
      _
    // Predicated region
    $region58: #{tpu_custom_call.1} parent=1 // pred_check
      _
    $region59: #{tpu_custom_call.1} parent=1 // pred_check_branch
      %108 = sbr.rel (0) target = $region61
    $region60: #{tpu_custom_call.1} parent=1 // pred_region
      %110 = dma.done [#allocation7], 4096
    $region61: #{tpu_custom_call.1} parent=1 // pred_fallthru
      _
    // Predicated region
    $region62: #{tpu_custom_call.1} parent=1 // pred_check
      _
    $region63: #{tpu_custom_call.1} parent=1 // pred_check_branch
      %112 = sbr.rel (0) target = $region65
    $region64: #{tpu_custom_call.1} parent=1 // pred_region
      %114 = dma.done [#allocation7], 4096
    $region65: #{tpu_custom_call.1} parent=1 // pred_fallthru
      _
    // Predicated region
    $region66: #{tpu_custom_call.1} parent=1 // pred_check
      _
    $region67: #{tpu_custom_call.1} parent=1 // pred_check_branch
      %116 = sbr.rel (0) target = $region69
    $region68: #{tpu_custom_call.1} parent=1 // pred_region
      %118 = dma.done [#allocation10], 2048
    $region69: #{tpu_custom_call.1} parent=1 // pred_fallthru
      _
    // Predicated region
    $region70: #{tpu_custom_call.1} parent=1 // pred_check
      _
    $region71: #{tpu_custom_call.1} parent=1 // pred_check_branch
      %120 = sbr.rel (0) target = $region73
    $region72: #{tpu_custom_call.1} parent=1 // pred_region
      %122 = dma.done [#allocation10], 2048
    $region73: #{tpu_custom_call.1} parent=1 // pred_fallthru
      _
    %v124 = vld [vmem:[%s1] sm:$0xff]
    %v125 = vld [vmem:[%s2] sm:$0x1]
    %127 = vset.pattern.permute.xlu0 0
    %128 = vperm.xlu0 %127, %v124
    %v129 = vpop.permute.xlu0 %128
    %v131 = vperm.slane %v125, 0
    %v132 = vmul.f32 %v129, %v131
    %v133 = vld [vmem:[%s2 + $0x1] sm:$0x1]
    %134 = vset.pattern.permute.xlu0 1
    %135 = vperm.xlu0 %134, %v124
    %v136 = vpop.permute.xlu0 %135
    %v138 = vperm.slane %v133, 0
    %v139 = vmul.f32 %v136, %v138
    %v140 = vadd.f32 %v132, %v139
    %v141 = vld [vmem:[%s3] sm:$0x1]
    %v143 = vperm.slane %v141, 0
    %v145 = vadd.f32 %v140, %v143
    %v146 = vmax.f32 %v145, 0.0
    %v147 = vld [vmem:[#allocation9] sm:$0xff]
    %v148 = vld [vmem:[#allocation9 + $0x8] sm:$0xff]
    %v149 = vld [vmem:[#allocation9 + $0x10] sm:$0xff]
    %v150 = vld [vmem:[#allocation9 + $0x18] sm:$0xff]
    %v151 = vld [vmem:[#allocation9 + $0x20] sm:$0xff]
    %v152 = vld [vmem:[#allocation9 + $0x28] sm:$0xff]
    %v153 = vld [vmem:[#allocation9 + $0x30] sm:$0xff]
    %v154 = vld [vmem:[#allocation9 + $0x38] sm:$0xff]
    %v155 = vld [vmem:[#allocation9 + $0x40] sm:$0xff]
    %v156 = vld [vmem:[#allocation9 + $0x48] sm:$0xff]
    %v157 = vld [vmem:[#allocation9 + $0x50] sm:$0xff]
    %v158 = vld [vmem:[#allocation9 + $0x58] sm:$0xff]
    %v159 = vld [vmem:[#allocation9 + $0x60] sm:$0xff]
    %v160 = vld [vmem:[#allocation9 + $0x68] sm:$0xff]
    %v161 = vld [vmem:[#allocation9 + $0x70] sm:$0xff]
    %v162 = vld [vmem:[#allocation9 + $0x78] sm:$0xff]
    %v163 = vld [vmem:[%s0] sm:$0xff]
    %v164 = vld [vmem:[%s0 + $0x8] sm:$0xff]
    %v165 = vld [vmem:[%s0 + $0x10] sm:$0xff]
    %v166 = vld [vmem:[%s0 + $0x18] sm:$0xff]
    %v167 = vld [vmem:[%s0 + $0x20] sm:$0xff]
    %v168 = vld [vmem:[%s0 + $0x28] sm:$0xff]
    %v169 = vld [vmem:[%s0 + $0x30] sm:$0xff]
    %v170 = vld [vmem:[%s0 + $0x38] sm:$0xff]
    %v171 = vld [vmem:[%s4] ss:$2 sm:$0xf]
    %173 = vset.pattern.permute.xlu0 0
    %174 = vperm.xlu0 %173, %v163
    %v175 = vpop.permute.xlu0 %174
    %178 = vset.pattern.permute.xlu0 0
    %179 = vperm.xlu0 %178, %v164
    %v180 = vpop.permute.xlu0 %179
    %183 = vset.pattern.permute.xlu0 0
    %184 = vperm.xlu0 %183, %v165
    %v185 = vpop.permute.xlu0 %184
    %188 = vset.pattern.permute.xlu0 0
    %189 = vperm.xlu0 %188, %v166
    %v190 = vpop.permute.xlu0 %189
    %193 = vset.pattern.permute.xlu0 0
    %194 = vperm.xlu0 %193, %v167
    %v195 = vpop.permute.xlu0 %194
    %198 = vset.pattern.permute.xlu0 0
    %199 = vperm.xlu0 %198, %v168
    %v200 = vpop.permute.xlu0 %199
    %203 = vset.pattern.permute.xlu0 0
    %204 = vperm.xlu0 %203, %v169
    %v205 = vpop.permute.xlu0 %204
    %208 = vset.pattern.permute.xlu0 0
    %209 = vperm.xlu0 %208, %v170
    %v210 = vpop.permute.xlu0 %209
    %v213 = vperm.slane %v171, 0
    %v214 = vperm.slane %v171, 1
    %v215 = vperm.slane %v171, 2
    %v216 = vperm.slane %v171, 3
    %v221 = vmul.f32 %v175, %v213
    %v222 = vmul.f32 %v175, %v214
    %v223 = vmul.f32 %v175, %v215
    %v224 = vmul.f32 %v175, %v216
    %v225 = vmul.f32 %v180, %v213
    %v226 = vmul.f32 %v180, %v214
    %v227 = vmul.f32 %v180, %v215
    %v228 = vmul.f32 %v180, %v216
    %v229 = vmul.f32 %v185, %v213
    %v230 = vmul.f32 %v185, %v214
    %v231 = vmul.f32 %v185, %v215
    %v232 = vmul.f32 %v185, %v216
    %v233 = vmul.f32 %v190, %v213
    %v234 = vmul.f32 %v190, %v214
    %v235 = vmul.f32 %v190, %v215
    %v236 = vmul.f32 %v190, %v216
    %v237 = vmul.f32 %v195, %v213
    %v238 = vmul.f32 %v195, %v214
    %v239 = vmul.f32 %v195, %v215
    %v240 = vmul.f32 %v195, %v216
    %v241 = vmul.f32 %v200, %v213
    %v242 = vmul.f32 %v200, %v214
    %v243 = vmul.f32 %v200, %v215
    %v244 = vmul.f32 %v200, %v216
    %v245 = vmul.f32 %v205, %v213
    %v246 = vmul.f32 %v205, %v214
    %v247 = vmul.f32 %v205, %v215
    %v248 = vmul.f32 %v205, %v216
    %v249 = vmul.f32 %v210, %v213
    %v250 = vmul.f32 %v210, %v214
    %v251 = vmul.f32 %v210, %v215
    %v252 = vmul.f32 %v210, %v216
    %s253 = scalar_lea.vmem %s4, 1
    %v254 = vld [vmem:[%s253] ss:$2 sm:$0xf]
    %255 = vset.pattern.permute.xlu0 1
    %256 = vperm.xlu0 %255, %v163
    %v257 = vpop.permute.xlu0 %256
    %259 = vset.pattern.permute.xlu0 1
    %260 = vperm.xlu0 %259, %v164
    %v261 = vpop.permute.xlu0 %260
    %263 = vset.pattern.permute.xlu0 1
    %264 = vperm.xlu0 %263, %v165
    %v265 = vpop.permute.xlu0 %264
    %267 = vset.pattern.permute.xlu0 1
    %268 = vperm.xlu0 %267, %v166
    %v269 = vpop.permute.xlu0 %268
    %271 = vset.pattern.permute.xlu0 1
    %272 = vperm.xlu0 %271, %v167
    %v273 = vpop.permute.xlu0 %272
    %275 = vset.pattern.permute.xlu0 1
    %276 = vperm.xlu0 %275, %v168
    %v277 = vpop.permute.xlu0 %276
    %279 = vset.pattern.permute.xlu0 1
    %280 = vperm.xlu0 %279, %v169
    %v281 = vpop.permute.xlu0 %280
    %283 = vset.pattern.permute.xlu0 1
    %284 = vperm.xlu0 %283, %v170
    %v285 = vpop.permute.xlu0 %284
    %v288 = vperm.slane %v254, 0
    %v289 = vperm.slane %v254, 1
    %v290 = vperm.slane %v254, 2
    %v291 = vperm.slane %v254, 3
    %v296 = vmul.f32 %v257, %v288
    %v297 = vmul.f32 %v257, %v289
    %v298 = vmul.f32 %v257, %v290
    %v299 = vmul.f32 %v257, %v291
    %v300 = vmul.f32 %v261, %v288
    %v301 = vmul.f32 %v261, %v289
    %v302 = vmul.f32 %v261, %v290
    %v303 = vmul.f32 %v261, %v291
    %v304 = vmul.f32 %v265, %v288
    %v305 = vmul.f32 %v265, %v289
    %v306 = vmul.f32 %v265, %v290
    %v307 = vmul.f32 %v265, %v291
    %v308 = vmul.f32 %v269, %v288
    %v309 = vmul.f32 %v269, %v289
    %v310 = vmul.f32 %v269, %v290
    %v311 = vmul.f32 %v269, %v291
    %v312 = vmul.f32 %v273, %v288
    %v313 = vmul.f32 %v273, %v289
    %v314 = vmul.f32 %v273, %v290
    %v315 = vmul.f32 %v273, %v291
    %v316 = vmul.f32 %v277, %v288
    %v317 = vmul.f32 %v277, %v289
    %v318 = vmul.f32 %v277, %v290
    %v319 = vmul.f32 %v277, %v291
    %v320 = vmul.f32 %v281, %v288
    %v321 = vmul.f32 %v281, %v289
    %v322 = vmul.f32 %v281, %v290
    %v323 = vmul.f32 %v281, %v291
    %v324 = vmul.f32 %v285, %v288
    %v325 = vmul.f32 %v285, %v289
    %v326 = vmul.f32 %v285, %v290
    %v327 = vmul.f32 %v285, %v291
    %v328 = vadd.f32 %v221, %v296
    %v329 = vadd.f32 %v222, %v297
    %v330 = vadd.f32 %v223, %v298
    %v331 = vadd.f32 %v224, %v299
    %v332 = vadd.f32 %v225, %v300
    %v333 = vadd.f32 %v226, %v301
    %v334 = vadd.f32 %v227, %v302
    %v335 = vadd.f32 %v228, %v303
    %v336 = vadd.f32 %v229, %v304
    %v337 = vadd.f32 %v230, %v305
    %v338 = vadd.f32 %v231, %v306
    %v339 = vadd.f32 %v232, %v307
    %v340 = vadd.f32 %v233, %v308
    %v341 = vadd.f32 %v234, %v309
    %v342 = vadd.f32 %v235, %v310
    %v343 = vadd.f32 %v236, %v311
    %v344 = vadd.f32 %v237, %v312
    %v345 = vadd.f32 %v238, %v313
    %v346 = vadd.f32 %v239, %v314
    %v347 = vadd.f32 %v240, %v315
    %v348 = vadd.f32 %v241, %v316
    %v349 = vadd.f32 %v242, %v317
    %v350 = vadd.f32 %v243, %v318
    %v351 = vadd.f32 %v244, %v319
    %v352 = vadd.f32 %v245, %v320
    %v353 = vadd.f32 %v246, %v321
    %v354 = vadd.f32 %v247, %v322
    %v355 = vadd.f32 %v248, %v323
    %v356 = vadd.f32 %v249, %v324
    %v357 = vadd.f32 %v250, %v325
    %v358 = vadd.f32 %v251, %v326
    %v359 = vadd.f32 %v252, %v327
    %v360 = vld [vmem:[%s6] sm:$0xf]
    %v362 = vperm.slane %v360, 0
    %v363 = vperm.slane %v360, 1
    %v364 = vperm.slane %v360, 2
    %v365 = vperm.slane %v360, 3
    %v370 = vadd.f32 %v328, %v362
    %v371 = vadd.f32 %v329, %v363
    %v372 = vadd.f32 %v330, %v364
    %v373 = vadd.f32 %v331, %v365
    %v374 = vadd.f32 %v332, %v362
    %v375 = vadd.f32 %v333, %v363
    %v376 = vadd.f32 %v334, %v364
    %v377 = vadd.f32 %v335, %v365
    %v378 = vadd.f32 %v336, %v362
    %v379 = vadd.f32 %v337, %v363
    %v380 = vadd.f32 %v338, %v364
    %v381 = vadd.f32 %v339, %v365
    %v382 = vadd.f32 %v340, %v362
    %v383 = vadd.f32 %v341, %v363
    %v384 = vadd.f32 %v342, %v364
    %v385 = vadd.f32 %v343, %v365
    %v386 = vadd.f32 %v344, %v362
    %v387 = vadd.f32 %v345, %v363
    %v388 = vadd.f32 %v346, %v364
    %v389 = vadd.f32 %v347, %v365
    %v390 = vadd.f32 %v348, %v362
    %v391 = vadd.f32 %v349, %v363
    %v392 = vadd.f32 %v350, %v364
    %v393 = vadd.f32 %v351, %v365
    %v394 = vadd.f32 %v352, %v362
    %v395 = vadd.f32 %v353, %v363
    %v396 = vadd.f32 %v354, %v364
    %v397 = vadd.f32 %v355, %v365
    %v398 = vadd.f32 %v356, %v362
    %v399 = vadd.f32 %v357, %v363
    %v400 = vadd.f32 %v358, %v364
    %v401 = vadd.f32 %v359, %v365
    %402 = vst [vmem:[#allocation2] sm:$0xff] %v370
    %403 = vst [vmem:[#allocation2 + $0x8] sm:$0xff] %v371
    %404 = vst [vmem:[#allocation2 + $0x10] sm:$0xff] %v372
    %405 = vst [vmem:[#allocation2 + $0x18] sm:$0xff] %v373
    %406 = vst [vmem:[#allocation2 + $0x20] sm:$0xff] %v374
    %407 = vst [vmem:[#allocation2 + $0x28] sm:$0xff] %v375
    %408 = vst [vmem:[#allocation2 + $0x30] sm:$0xff] %v376
    %409 = vst [vmem:[#allocation2 + $0x38] sm:$0xff] %v377
    %410 = vst [vmem:[#allocation2 + $0x40] sm:$0xff] %v378
    %411 = vst [vmem:[#allocation2 + $0x48] sm:$0xff] %v379
    %412 = vst [vmem:[#allocation2 + $0x50] sm:$0xff] %v380
    %413 = vst [vmem:[#allocation2 + $0x58] sm:$0xff] %v381
    %414 = vst [vmem:[#allocation2 + $0x60] sm:$0xff] %v382
    %415 = vst [vmem:[#allocation2 + $0x68] sm:$0xff] %v383
    %416 = vst [vmem:[#allocation2 + $0x70] sm:$0xff] %v384
    %417 = vst [vmem:[#allocation2 + $0x78] sm:$0xff] %v385
    %418 = vst [vmem:[#allocation2 + $0x80] sm:$0xff] %v386
    %419 = vst [vmem:[#allocation2 + $0x88] sm:$0xff] %v387
    %420 = vst [vmem:[#allocation2 + $0x90] sm:$0xff] %v388
    %421 = vst [vmem:[#allocation2 + $0x98] sm:$0xff] %v389
    %422 = vst [vmem:[#allocation2 + $0xa0] sm:$0xff] %v390
    %423 = vst [vmem:[#allocation2 + $0xa8] sm:$0xff] %v391
    %424 = vst [vmem:[#allocation2 + $0xb0] sm:$0xff] %v392
    %425 = vst [vmem:[#allocation2 + $0xb8] sm:$0xff] %v393
    %426 = vst [vmem:[#allocation2 + $0xc0] sm:$0xff] %v394
    %427 = vst [vmem:[#allocation2 + $0xc8] sm:$0xff] %v395
    %428 = vst [vmem:[#allocation2 + $0xd0] sm:$0xff] %v396
    %429 = vst [vmem:[#allocation2 + $0xd8] sm:$0xff] %v397
    %430 = vst [vmem:[#allocation2 + $0xe0] sm:$0xff] %v398
    %431 = vst [vmem:[#allocation2 + $0xe8] sm:$0xff] %v399
    %432 = vst [vmem:[#allocation2 + $0xf0] sm:$0xff] %v400
    %433 = vst [vmem:[#allocation2 + $0xf8] sm:$0xff] %v401
    %v434 = vld [vmem:[#allocation3] sm:$0xff]
    %v435 = vld [vmem:[#allocation3 + $0x8] sm:$0xff]
    %v436 = vld [vmem:[#allocation3 + $0x10] sm:$0xff]
    %v437 = vld [vmem:[#allocation3 + $0x18] sm:$0xff]
    %v438 = vld [vmem:[#allocation3 + $0x20] sm:$0xff]
    %v439 = vld [vmem:[#allocation3 + $0x28] sm:$0xff]
    %v440 = vld [vmem:[#allocation3 + $0x30] sm:$0xff]
    %v441 = vld [vmem:[#allocation3 + $0x38] sm:$0xff]
    %v442 = vld [vmem:[#allocation3 + $0x40] sm:$0xff]
    %v443 = vld [vmem:[#allocation3 + $0x48] sm:$0xff]
    %v444 = vld [vmem:[#allocation3 + $0x50] sm:$0xff]
    %v445 = vld [vmem:[#allocation3 + $0x58] sm:$0xff]
    %v446 = vld [vmem:[#allocation3 + $0x60] sm:$0xff]
    %v447 = vld [vmem:[#allocation3 + $0x68] sm:$0xff]
    %v448 = vld [vmem:[#allocation3 + $0x70] sm:$0xff]
    %v449 = vld [vmem:[#allocation3 + $0x78] sm:$0xff]
    %v450 = vld [vmem:[#allocation3 + $0x80] sm:$0xff]
    %v451 = vld [vmem:[#allocation3 + $0x88] sm:$0xff]
    %v452 = vld [vmem:[#allocation3 + $0x90] sm:$0xff]
    %v453 = vld [vmem:[#allocation3 + $0x98] sm:$0xff]
    %v454 = vld [vmem:[#allocation3 + $0xa0] sm:$0xff]
    %v455 = vld [vmem:[#allocation3 + $0xa8] sm:$0xff]
    %v456 = vld [vmem:[#allocation3 + $0xb0] sm:$0xff]
    %v457 = vld [vmem:[#allocation3 + $0xb8] sm:$0xff]
    %v458 = vld [vmem:[#allocation3 + $0xc0] sm:$0xff]
    %v459 = vld [vmem:[#allocation3 + $0xc8] sm:$0xff]
    %v460 = vld [vmem:[#allocation3 + $0xd0] sm:$0xff]
    %v461 = vld [vmem:[#allocation3 + $0xd8] sm:$0xff]
    %v462 = vld [vmem:[#allocation3 + $0xe0] sm:$0xff]
    %v463 = vld [vmem:[#allocation3 + $0xe8] sm:$0xff]
    %v464 = vld [vmem:[#allocation3 + $0xf0] sm:$0xff]
    %v465 = vld [vmem:[#allocation3 + $0xf8] sm:$0xff]
    %v466 = vld [vmem:[#allocation6] sm:$0xff]
    %v467 = vld [vmem:[#allocation6 + $0x8] sm:$0xff]
    %v468 = vld [vmem:[#allocation6 + $0x10] sm:$0xff]
    %v469 = vld [vmem:[#allocation6 + $0x18] sm:$0xff]
    %v470 = vld [vmem:[#allocation6 + $0x20] sm:$0xff]
    %v471 = vld [vmem:[#allocation6 + $0x28] sm:$0xff]
    %v472 = vld [vmem:[#allocation6 + $0x30] sm:$0xff]
    %v473 = vld [vmem:[#allocation6 + $0x38] sm:$0xff]
    %v474 = vld [vmem:[#allocation6 + $0x40] sm:$0xff]
    %v475 = vld [vmem:[#allocation6 + $0x48] sm:$0xff]
    %v476 = vld [vmem:[#allocation6 + $0x50] sm:$0xff]
    %v477 = vld [vmem:[#allocation6 + $0x58] sm:$0xff]
    %v478 = vld [vmem:[#allocation6 + $0x60] sm:$0xff]
    %v479 = vld [vmem:[#allocation6 + $0x68] sm:$0xff]
    %v480 = vld [vmem:[#allocation6 + $0x70] sm:$0xff]
    %v481 = vld [vmem:[#allocation6 + $0x78] sm:$0xff]
    %v482 = vld [vmem:[#allocation6 + $0x80] sm:$0xff]
    %v483 = vld [vmem:[#allocation6 + $0x88] sm:$0xff]
    %v484 = vld [vmem:[#allocation6 + $0x90] sm:$0xff]
    %v485 = vld [vmem:[#allocation6 + $0x98] sm:$0xff]
    %v486 = vld [vmem:[#allocation6 + $0xa0] sm:$0xff]
    %v487 = vld [vmem:[#allocation6 + $0xa8] sm:$0xff]
    %v488 = vld [vmem:[#allocation6 + $0xb0] sm:$0xff]
    %v489 = vld [vmem:[#allocation6 + $0xb8] sm:$0xff]
    %v490 = vld [vmem:[#allocation6 + $0xc0] sm:$0xff]
    %v491 = vld [vmem:[#allocation6 + $0xc8] sm:$0xff]
    %v492 = vld [vmem:[#allocation6 + $0xd0] sm:$0xff]
    %v493 = vld [vmem:[#allocation6 + $0xd8] sm:$0xff]
    %v494 = vld [vmem:[#allocation6 + $0xe0] sm:$0xff]
    %v495 = vld [vmem:[#allocation6 + $0xe8] sm:$0xff]
    %v496 = vld [vmem:[#allocation6 + $0xf0] sm:$0xff]
    %v497 = vld [vmem:[#allocation6 + $0xf8] sm:$0xff]
    %v498 = vld [vmem:[#allocation8] sm:$0xff]
    %v499 = vld [vmem:[#allocation8 + $0x8] sm:$0xff]
    %v500 = vld [vmem:[#allocation8 + $0x10] sm:$0xff]
    %v501 = vld [vmem:[#allocation8 + $0x18] sm:$0xff]
    %v502 = vld [vmem:[#allocation8 + $0x20] sm:$0xff]
    %v503 = vld [vmem:[#allocation8 + $0x28] sm:$0xff]
    %v504 = vld [vmem:[#allocation8 + $0x30] sm:$0xff]
    %v505 = vld [vmem:[#allocation8 + $0x38] sm:$0xff]
    %v506 = vld [vmem:[#allocation8 + $0x40] sm:$0xff]
    %v507 = vld [vmem:[#allocation8 + $0x48] sm:$0xff]
    %v508 = vld [vmem:[#allocation8 + $0x50] sm:$0xff]
    %v509 = vld [vmem:[#allocation8 + $0x58] sm:$0xff]
    %v510 = vld [vmem:[#allocation8 + $0x60] sm:$0xff]
    %v511 = vld [vmem:[#allocation8 + $0x68] sm:$0xff]
    %v512 = vld [vmem:[#allocation8 + $0x70] sm:$0xff]
    %v513 = vld [vmem:[#allocation8 + $0x78] sm:$0xff]
    %v514 = vld [vmem:[#allocation8 + $0x80] sm:$0xff]
    %v515 = vld [vmem:[#allocation8 + $0x88] sm:$0xff]
    %v516 = vld [vmem:[#allocation8 + $0x90] sm:$0xff]
    %v517 = vld [vmem:[#allocation8 + $0x98] sm:$0xff]
    %v518 = vld [vmem:[#allocation8 + $0xa0] sm:$0xff]
    %v519 = vld [vmem:[#allocation8 + $0xa8] sm:$0xff]
    %v520 = vld [vmem:[#allocation8 + $0xb0] sm:$0xff]
    %v521 = vld [vmem:[#allocation8 + $0xb8] sm:$0xff]
    %v522 = vld [vmem:[#allocation8 + $0xc0] sm:$0xff]
    %v523 = vld [vmem:[#allocation8 + $0xc8] sm:$0xff]
    %v524 = vld [vmem:[#allocation8 + $0xd0] sm:$0xff]
    %v525 = vld [vmem:[#allocation8 + $0xd8] sm:$0xff]
    %v526 = vld [vmem:[#allocation8 + $0xe0] sm:$0xff]
    %v527 = vld [vmem:[#allocation8 + $0xe8] sm:$0xff]
    %v528 = vld [vmem:[#allocation8 + $0xf0] sm:$0xff]
    %v529 = vld [vmem:[#allocation8 + $0xf8] sm:$0xff]
    %v530 = vld [vmem:[%s9] sm:$0xf]
    %v532 = vperm.slane %v530, 0
    %v533 = vperm.slane %v530, 1
    %v534 = vperm.slane %v530, 2
    %v535 = vperm.slane %v530, 3
    %v540 = vld [vmem:[#allocation2] sm:$0xff]
    %v541 = vld [vmem:[#allocation2 + $0x8] sm:$0xff]
    %v542 = vld [vmem:[#allocation2 + $0x10] sm:$0xff]
    %v543 = vld [vmem:[#allocation2 + $0x18] sm:$0xff]
    %v576 = vunpack.c.l.b16 %v434
    %v577 = vunpack.c.h.b16 %v434
    %v578 = vunpack.c.l.b16 %v435
    %v579 = vunpack.c.h.b16 %v435
    %v580 = vunpack.c.l.b16 %v436
    %v581 = vunpack.c.h.b16 %v436
    %v582 = vunpack.c.l.b16 %v437
    %v583 = vunpack.c.h.b16 %v437
    %v584 = vunpack.c.l.b16 %v438
    %v585 = vunpack.c.h.b16 %v438
    %v586 = vunpack.c.l.b16 %v439
    %v587 = vunpack.c.h.b16 %v439
    %v588 = vunpack.c.l.b16 %v440
    %v589 = vunpack.c.h.b16 %v440
    %v590 = vunpack.c.l.b16 %v441
    %v591 = vunpack.c.h.b16 %v441
    %v592 = vunpack.c.l.b16 %v442
    %v593 = vunpack.c.h.b16 %v442
    %v594 = vunpack.c.l.b16 %v443
    %v595 = vunpack.c.h.b16 %v443
    %v596 = vunpack.c.l.b16 %v444
    %v597 = vunpack.c.h.b16 %v444
    %v598 = vunpack.c.l.b16 %v445
    %v599 = vunpack.c.h.b16 %v445
    %v600 = vunpack.c.l.b16 %v446
    %v601 = vunpack.c.h.b16 %v446
    %v602 = vunpack.c.l.b16 %v447
    %v603 = vunpack.c.h.b16 %v447
    %v604 = vunpack.c.l.b16 %v448
    %v605 = vunpack.c.h.b16 %v448
    %v606 = vunpack.c.l.b16 %v449
    %v607 = vunpack.c.h.b16 %v449
    %v608 = vunpack.c.l.b16 %v450
    %v609 = vunpack.c.h.b16 %v450
    %v610 = vunpack.c.l.b16 %v451
    %v611 = vunpack.c.h.b16 %v451
    %v612 = vunpack.c.l.b16 %v452
    %v613 = vunpack.c.h.b16 %v452
    %v614 = vunpack.c.l.b16 %v453
    %v615 = vunpack.c.h.b16 %v453
    %v616 = vunpack.c.l.b16 %v454
    %v617 = vunpack.c.h.b16 %v454
    %v618 = vunpack.c.l.b16 %v455
    %v619 = vunpack.c.h.b16 %v455
    %v620 = vunpack.c.l.b16 %v456
    %v621 = vunpack.c.h.b16 %v456
    %v622 = vunpack.c.l.b16 %v457
    %v623 = vunpack.c.h.b16 %v457
    %v624 = vunpack.c.l.b16 %v458
    %v625 = vunpack.c.h.b16 %v458
    %v626 = vunpack.c.l.b16 %v459
    %v627 = vunpack.c.h.b16 %v459
    %v628 = vunpack.c.l.b16 %v460
    %v629 = vunpack.c.h.b16 %v460
    %v630 = vunpack.c.l.b16 %v461
    %v631 = vunpack.c.h.b16 %v461
    %v632 = vunpack.c.l.b16 %v462
    %v633 = vunpack.c.h.b16 %v462
    %v634 = vunpack.c.l.b16 %v463
    %v635 = vunpack.c.h.b16 %v463
    %v636 = vunpack.c.l.b16 %v464
    %v637 = vunpack.c.h.b16 %v464
    %v638 = vunpack.c.l.b16 %v465
    %v639 = vunpack.c.h.b16 %v465
    %v640 = vpack.c.b16 %v580, %v576
    %v641 = vpack.c.b16 %v581, %v577
    %v642 = vpack.c.b16 %v582, %v578
    %v643 = vpack.c.b16 %v583, %v579
    %v644 = vpack.c.b16 %v588, %v584
    %v645 = vpack.c.b16 %v589, %v585
    %v646 = vpack.c.b16 %v590, %v586
    %v647 = vpack.c.b16 %v591, %v587
    %v648 = vpack.c.b16 %v596, %v592
    %v649 = vpack.c.b16 %v597, %v593
    %v650 = vpack.c.b16 %v598, %v594
    %v651 = vpack.c.b16 %v599, %v595
    %v652 = vpack.c.b16 %v604, %v600
    %v653 = vpack.c.b16 %v605, %v601
    %v654 = vpack.c.b16 %v606, %v602
    %v655 = vpack.c.b16 %v607, %v603
    %v656 = vpack.c.b16 %v612, %v608
    %v657 = vpack.c.b16 %v613, %v609
    %v658 = vpack.c.b16 %v614, %v610
    %v659 = vpack.c.b16 %v615, %v611
    %v660 = vpack.c.b16 %v620, %v616
    %v661 = vpack.c.b16 %v621, %v617
    %v662 = vpack.c.b16 %v622, %v618
    %v663 = vpack.c.b16 %v623, %v619
    %v664 = vpack.c.b16 %v628, %v624
    %v665 = vpack.c.b16 %v629, %v625
    %v666 = vpack.c.b16 %v630, %v626
    %v667 = vpack.c.b16 %v631, %v627
    %v668 = vpack.c.b16 %v636, %v632
    %v669 = vpack.c.b16 %v637, %v633
    %v670 = vpack.c.b16 %v638, %v634
    %v671 = vpack.c.b16 %v639, %v635
    %704 = vmatpush.bf16.msra.mxu0 %v668
    %705 = vmatpush.bf16.msra.mxu0 %v664
    %706 = vmatpush.bf16.msra.mxu0 %v660
    %707 = vmatpush.bf16.msra.mxu0 %v656
    %708 = vmatpush.bf16.msra.mxu0 %v652
    %709 = vmatpush.bf16.msra.mxu0 %v648
    %710 = vmatpush.bf16.msra.mxu0 %v644
    %711 = vmatpush.bf16.msra.mxu0 %v640
    %712 = vmatmul.bf16.gmra.mxu0 0
    %v713 = vpop.f32.mrf.mxu0
    %v714 = vadd.f32 0.0, %v713
    %v715 = vpop.f32.mrf.mxu0
    %716 = vdwg.mxu0
    %717 = vmatpush.bf16.msra.mxu0 %v669
    %718 = vmatpush.bf16.msra.mxu0 %v665
    %719 = vmatpush.bf16.msra.mxu0 %v661
    %720 = vmatpush.bf16.msra.mxu0 %v657
    %721 = vmatpush.bf16.msra.mxu0 %v653
    %722 = vmatpush.bf16.msra.mxu0 %v649
    %723 = vmatpush.bf16.msra.mxu0 %v645
    %724 = vmatpush.bf16.msra.mxu0 %v641
    %725 = vmatmul.bf16.gmra.mxu0 0
    %v726 = vpop.f32.mrf.mxu0
    %v727 = vadd.f32 0.0, %v726
    %v728 = vpop.f32.mrf.mxu0
    %729 = vdwg.mxu0
    %730 = vmatpush.bf16.msra.mxu0 %v670
    %731 = vmatpush.bf16.msra.mxu0 %v666
    %732 = vmatpush.bf16.msra.mxu0 %v662
    %733 = vmatpush.bf16.msra.mxu0 %v658
    %734 = vmatpush.bf16.msra.mxu0 %v654
    %735 = vmatpush.bf16.msra.mxu0 %v650
    %736 = vmatpush.bf16.msra.mxu0 %v646
    %737 = vmatpush.bf16.msra.mxu0 %v642
    %738 = vmatmul.bf16.gmra.mxu0 0
    %v739 = vpop.f32.mrf.mxu0
    %v740 = vadd.f32 0.0, %v739
    %v741 = vpop.f32.mrf.mxu0
    %742 = vdwg.mxu0
    %743 = vmatpush.bf16.msra.mxu0 %v671
    %744 = vmatpush.bf16.msra.mxu0 %v667
    %745 = vmatpush.bf16.msra.mxu0 %v663
    %746 = vmatpush.bf16.msra.mxu0 %v659
    %747 = vmatpush.bf16.msra.mxu0 %v655
    %748 = vmatpush.bf16.msra.mxu0 %v651
    %749 = vmatpush.bf16.msra.mxu0 %v647
    %750 = vmatpush.bf16.msra.mxu0 %v643
    %751 = vmatmul.bf16.gmra.mxu0 0
    %v752 = vpop.f32.mrf.mxu0
    %v753 = vadd.f32 0.0, %v752
    %v754 = vpop.f32.mrf.mxu0
    %755 = vdwg.mxu0
    %v756 = vadd.f32 %v540, %v714
    %v757 = vadd.f32 %v541, %v727
    %v758 = vadd.f32 %v542, %v740
    %v759 = vadd.f32 %v543, %v753
    %v760 = vmul.f32 %v756, 0.5
    %v761 = vmul.f32 %v757, 0.5
    %v762 = vmul.f32 %v758, 0.5
    %v763 = vtanh.pop %v760
    %v764 = vtanh.pop %v761
    %v765 = vtanh.pop %v762
    %v766 = vmul.f32 %v763, 0.5
    %v767 = vmul.f32 %v764, 0.5
    %v768 = vmul.f32 %v765, 0.5
    %v769 = vadd.f32 %v766, 0.5
    %v770 = vadd.f32 %v767, 0.5
    %v771 = vadd.f32 %v768, 0.5
    %v772 = vtanh.pop %v759
    %v773 = vmul.f32 %v770, 0.0
    %v774 = vmul.f32 %v769, %v772
    %v775 = vadd.f32 %v773, %v774
    %v776 = vtanh.pop %v775
    %v777 = vmul.f32 %v771, %v776
    %v778 = vpack.c.bf16 %v777, %v777
    %v811 = vunpack.c.l.b16 %v466
    %v812 = vunpack.c.h.b16 %v466
    %v813 = vunpack.c.l.b16 %v467
    %v814 = vunpack.c.h.b16 %v467
    %v815 = vunpack.c.l.b16 %v468
    %v816 = vunpack.c.h.b16 %v468
    %v817 = vunpack.c.l.b16 %v469
    %v818 = vunpack.c.h.b16 %v469
    %v819 = vunpack.c.l.b16 %v470
    %v820 = vunpack.c.h.b16 %v470
    %v821 = vunpack.c.l.b16 %v471
    %v822 = vunpack.c.h.b16 %v471
    %v823 = vunpack.c.l.b16 %v472
    %v824 = vunpack.c.h.b16 %v472
    %v825 = vunpack.c.l.b16 %v473
    %v826 = vunpack.c.h.b16 %v473
    %v827 = vunpack.c.l.b16 %v474
    %v828 = vunpack.c.h.b16 %v474
    %v829 = vunpack.c.l.b16 %v475
    %v830 = vunpack.c.h.b16 %v475
    %v831 = vunpack.c.l.b16 %v476
    %v832 = vunpack.c.h.b16 %v476
    %v833 = vunpack.c.l.b16 %v477
    %v834 = vunpack.c.h.b16 %v477
    %v835 = vunpack.c.l.b16 %v478
    %v836 = vunpack.c.h.b16 %v478
    %v837 = vunpack.c.l.b16 %v479
    %v838 = vunpack.c.h.b16 %v479
    %v839 = vunpack.c.l.b16 %v480
    %v840 = vunpack.c.h.b16 %v480
    %v841 = vunpack.c.l.b16 %v481
    %v842 = vunpack.c.h.b16 %v481
    %v843 = vunpack.c.l.b16 %v482
    %v844 = vunpack.c.h.b16 %v482
    %v845 = vunpack.c.l.b16 %v483
    %v846 = vunpack.c.h.b16 %v483
    %v847 = vunpack.c.l.b16 %v484
    %v848 = vunpack.c.h.b16 %v484
    %v849 = vunpack.c.l.b16 %v485
    %v850 = vunpack.c.h.b16 %v485
    %v851 = vunpack.c.l.b16 %v486
    %v852 = vunpack.c.h.b16 %v486
    %v853 = vunpack.c.l.b16 %v487
    %v854 = vunpack.c.h.b16 %v487
    %v855 = vunpack.c.l.b16 %v488
    %v856 = vunpack.c.h.b16 %v488
    %v857 = vunpack.c.l.b16 %v489
    %v858 = vunpack.c.h.b16 %v489
    %v859 = vunpack.c.l.b16 %v490
    %v860 = vunpack.c.h.b16 %v490
    %v861 = vunpack.c.l.b16 %v491
    %v862 = vunpack.c.h.b16 %v491
    %v863 = vunpack.c.l.b16 %v492
    %v864 = vunpack.c.h.b16 %v492
    %v865 = vunpack.c.l.b16 %v493
    %v866 = vunpack.c.h.b16 %v493
    %v867 = vunpack.c.l.b16 %v494
    %v868 = vunpack.c.h.b16 %v494
    %v869 = vunpack.c.l.b16 %v495
    %v870 = vunpack.c.h.b16 %v495
    %v871 = vunpack.c.l.b16 %v496
    %v872 = vunpack.c.h.b16 %v496
    %v873 = vunpack.c.l.b16 %v497
    %v874 = vunpack.c.h.b16 %v497
    %v875 = vpack.c.b16 %v815, %v811
    %v876 = vpack.c.b16 %v816, %v812
    %v877 = vpack.c.b16 %v817, %v813
    %v878 = vpack.c.b16 %v818, %v814
    %v879 = vpack.c.b16 %v823, %v819
    %v880 = vpack.c.b16 %v824, %v820
    %v881 = vpack.c.b16 %v825, %v821
    %v882 = vpack.c.b16 %v826, %v822
    %v883 = vpack.c.b16 %v831, %v827
    %v884 = vpack.c.b16 %v832, %v828
    %v885 = vpack.c.b16 %v833, %v829
    %v886 = vpack.c.b16 %v834, %v830
    %v887 = vpack.c.b16 %v839, %v835
    %v888 = vpack.c.b16 %v840, %v836
    %v889 = vpack.c.b16 %v841, %v837
    %v890 = vpack.c.b16 %v842, %v838
    %v891 = vpack.c.b16 %v847, %v843
    %v892 = vpack.c.b16 %v848, %v844
    %v893 = vpack.c.b16 %v849, %v845
    %v894 = vpack.c.b16 %v850, %v846
    %v895 = vpack.c.b16 %v855, %v851
    %v896 = vpack.c.b16 %v856, %v852
    %v897 = vpack.c.b16 %v857, %v853
    %v898 = vpack.c.b16 %v858, %v854
    %v899 = vpack.c.b16 %v863, %v859
    %v900 = vpack.c.b16 %v864, %v860
    %v901 = vpack.c.b16 %v865, %v861
    %v902 = vpack.c.b16 %v866, %v862
    %v903 = vpack.c.b16 %v871, %v867
    %v904 = vpack.c.b16 %v872, %v868
    %v905 = vpack.c.b16 %v873, %v869
    %v906 = vpack.c.b16 %v874, %v870
    %939 = vmatpush.bf16.msra.mxu0 %v903
    %940 = vmatpush.bf16.msra.mxu0 %v899
    %941 = vmatpush.bf16.msra.mxu0 %v895
    %942 = vmatpush.bf16.msra.mxu0 %v891
    %943 = vmatpush.bf16.msra.mxu0 %v887
    %944 = vmatpush.bf16.msra.mxu0 %v883
    %945 = vmatpush.bf16.msra.mxu0 %v879
    %946 = vmatpush.bf16.msra.mxu0 %v875
    %947 = vmatmul.bf16.gmra.mxu0 %v778
    %v948 = vpop.f32.mrf.mxu0
    %v949 = vadd.f32 0.0, %v948
    %v950 = vpop.f32.mrf.mxu0
    %951 = vdwg.mxu0
    %952 = vmatpush.bf16.msra.mxu0 %v904
    %953 = vmatpush.bf16.msra.mxu0 %v900
    %954 = vmatpush.bf16.msra.mxu0 %v896
    %955 = vmatpush.bf16.msra.mxu0 %v892
    %956 = vmatpush.bf16.msra.mxu0 %v888
    %957 = vmatpush.bf16.msra.mxu0 %v884
    %958 = vmatpush.bf16.msra.mxu0 %v880
    %959 = vmatpush.bf16.msra.mxu0 %v876
    %960 = vmatmul.bf16.gmra.mxu0 %v778
    %v961 = vpop.f32.mrf.mxu0
    %v962 = vadd.f32 0.0, %v961
    %v963 = vpop.f32.mrf.mxu0
    %964 = vdwg.mxu0
    %965 = vmatpush.bf16.msra.mxu0 %v905
    %966 = vmatpush.bf16.msra.mxu0 %v901
    %967 = vmatpush.bf16.msra.mxu0 %v897
    %968 = vmatpush.bf16.msra.mxu0 %v893
    %969 = vmatpush.bf16.msra.mxu0 %v889
    %970 = vmatpush.bf16.msra.mxu0 %v885
    %971 = vmatpush.bf16.msra.mxu0 %v881
    %972 = vmatpush.bf16.msra.mxu0 %v877
    %973 = vmatmul.bf16.gmra.mxu0 %v778
    %v974 = vpop.f32.mrf.mxu0
    %v975 = vadd.f32 0.0, %v974
    %v976 = vpop.f32.mrf.mxu0
    %977 = vdwg.mxu0
    %978 = vmatpush.bf16.msra.mxu0 %v906
    %979 = vmatpush.bf16.msra.mxu0 %v902
    %980 = vmatpush.bf16.msra.mxu0 %v898
    %981 = vmatpush.bf16.msra.mxu0 %v894
    %982 = vmatpush.bf16.msra.mxu0 %v890
    %983 = vmatpush.bf16.msra.mxu0 %v886
    %984 = vmatpush.bf16.msra.mxu0 %v882
    %985 = vmatpush.bf16.msra.mxu0 %v878
    %986 = vmatmul.bf16.gmra.mxu0 %v778
    %v987 = vpop.f32.mrf.mxu0
    %v988 = vadd.f32 0.0, %v987
    %v989 = vpop.f32.mrf.mxu0
    %990 = vdwg.mxu0
    %v1023 = vunpack.c.l.b16 %v498
    %v1024 = vunpack.c.h.b16 %v498
    %v1025 = vunpack.c.l.b16 %v499
    %v1026 = vunpack.c.h.b16 %v499
    %v1027 = vunpack.c.l.b16 %v500
    %v1028 = vunpack.c.h.b16 %v500
    %v1029 = vunpack.c.l.b16 %v501
    %v1030 = vunpack.c.h.b16 %v501
    %v1031 = vunpack.c.l.b16 %v502
    %v1032 = vunpack.c.h.b16 %v502
    %v1033 = vunpack.c.l.b16 %v503
    %v1034 = vunpack.c.h.b16 %v503
    %v1035 = vunpack.c.l.b16 %v504
    %v1036 = vunpack.c.h.b16 %v504
    %v1037 = vunpack.c.l.b16 %v505
    %v1038 = vunpack.c.h.b16 %v505
    %v1039 = vunpack.c.l.b16 %v506
    %v1040 = vunpack.c.h.b16 %v506
    %v1041 = vunpack.c.l.b16 %v507
    %v1042 = vunpack.c.h.b16 %v507
    %v1043 = vunpack.c.l.b16 %v508
    %v1044 = vunpack.c.h.b16 %v508
    %v1045 = vunpack.c.l.b16 %v509
    %v1046 = vunpack.c.h.b16 %v509
    %v1047 = vunpack.c.l.b16 %v510
    %v1048 = vunpack.c.h.b16 %v510
    %v1049 = vunpack.c.l.b16 %v511
    %v1050 = vunpack.c.h.b16 %v511
    %v1051 = vunpack.c.l.b16 %v512
    %v1052 = vunpack.c.h.b16 %v512
    %v1053 = vunpack.c.l.b16 %v513
    %v1054 = vunpack.c.h.b16 %v513
    %v1055 = vunpack.c.l.b16 %v514
    %v1056 = vunpack.c.h.b16 %v514
    %v1057 = vunpack.c.l.b16 %v515
    %v1058 = vunpack.c.h.b16 %v515
    %v1059 = vunpack.c.l.b16 %v516
    %v1060 = vunpack.c.h.b16 %v516
    %v1061 = vunpack.c.l.b16 %v517
    %v1062 = vunpack.c.h.b16 %v517
    %v1063 = vunpack.c.l.b16 %v518
    %v1064 = vunpack.c.h.b16 %v518
    %v1065 = vunpack.c.l.b16 %v519
    %v1066 = vunpack.c.h.b16 %v519
    %v1067 = vunpack.c.l.b16 %v520
    %v1068 = vunpack.c.h.b16 %v520
    %v1069 = vunpack.c.l.b16 %v521
    %v1070 = vunpack.c.h.b16 %v521
    %v1071 = vunpack.c.l.b16 %v522
    %v1072 = vunpack.c.h.b16 %v522
    %v1073 = vunpack.c.l.b16 %v523
    %v1074 = vunpack.c.h.b16 %v523
    %v1075 = vunpack.c.l.b16 %v524
    %v1076 = vunpack.c.h.b16 %v524
    %v1077 = vunpack.c.l.b16 %v525
    %v1078 = vunpack.c.h.b16 %v525
    %v1079 = vunpack.c.l.b16 %v526
    %v1080 = vunpack.c.h.b16 %v526
    %v1081 = vunpack.c.l.b16 %v527
    %v1082 = vunpack.c.h.b16 %v527
    %v1083 = vunpack.c.l.b16 %v528
    %v1084 = vunpack.c.h.b16 %v528
    %v1085 = vunpack.c.l.b16 %v529
    %v1086 = vunpack.c.h.b16 %v529
    %v1087 = vpack.c.b16 %v1027, %v1023
    %v1088 = vpack.c.b16 %v1028, %v1024
    %v1089 = vpack.c.b16 %v1029, %v1025
    %v1090 = vpack.c.b16 %v1030, %v1026
    %v1091 = vpack.c.b16 %v1035, %v1031
    %v1092 = vpack.c.b16 %v1036, %v1032
    %v1093 = vpack.c.b16 %v1037, %v1033
    %v1094 = vpack.c.b16 %v1038, %v1034
    %v1095 = vpack.c.b16 %v1043, %v1039
    %v1096 = vpack.c.b16 %v1044, %v1040
    %v1097 = vpack.c.b16 %v1045, %v1041
    %v1098 = vpack.c.b16 %v1046, %v1042
    %v1099 = vpack.c.b16 %v1051, %v1047
    %v1100 = vpack.c.b16 %v1052, %v1048
    %v1101 = vpack.c.b16 %v1053, %v1049
    %v1102 = vpack.c.b16 %v1054, %v1050
    %v1103 = vpack.c.b16 %v1059, %v1055
    %v1104 = vpack.c.b16 %v1060, %v1056
    %v1105 = vpack.c.b16 %v1061, %v1057
    %v1106 = vpack.c.b16 %v1062, %v1058
    %v1107 = vpack.c.b16 %v1067, %v1063
    %v1108 = vpack.c.b16 %v1068, %v1064
    %v1109 = vpack.c.b16 %v1069, %v1065
    %v1110 = vpack.c.b16 %v1070, %v1066
    %v1111 = vpack.c.b16 %v1075, %v1071
    %v1112 = vpack.c.b16 %v1076, %v1072
    %v1113 = vpack.c.b16 %v1077, %v1073
    %v1114 = vpack.c.b16 %v1078, %v1074
    %v1115 = vpack.c.b16 %v1083, %v1079
    %v1116 = vpack.c.b16 %v1084, %v1080
    %v1117 = vpack.c.b16 %v1085, %v1081
    %v1118 = vpack.c.b16 %v1086, %v1082
    %1151 = vmatpush.bf16.msra.mxu0 %v1115
    %1152 = vmatpush.bf16.msra.mxu0 %v1111
    %1153 = vmatpush.bf16.msra.mxu0 %v1107
    %1154 = vmatpush.bf16.msra.mxu0 %v1103
    %1155 = vmatpush.bf16.msra.mxu0 %v1099
    %1156 = vmatpush.bf16.msra.mxu0 %v1095
    %1157 = vmatpush.bf16.msra.mxu0 %v1091
    %1158 = vmatpush.bf16.msra.mxu0 %v1087
    %1159 = vmatmul.bf16.gmra.mxu0 0
    %v1160 = vpop.f32.mrf.mxu0
    %v1161 = vadd.f32 %v949, %v1160
    %v1162 = vpop.f32.mrf.mxu0
    %1163 = vdwg.mxu0
    %1164 = vmatpush.bf16.msra.mxu0 %v1116
    %1165 = vmatpush.bf16.msra.mxu0 %v1112
    %1166 = vmatpush.bf16.msra.mxu0 %v1108
    %1167 = vmatpush.bf16.msra.mxu0 %v1104
    %1168 = vmatpush.bf16.msra.mxu0 %v1100
    %1169 = vmatpush.bf16.msra.mxu0 %v1096
    %1170 = vmatpush.bf16.msra.mxu0 %v1092
    %1171 = vmatpush.bf16.msra.mxu0 %v1088
    %1172 = vmatmul.bf16.gmra.mxu0 0
    %v1173 = vpop.f32.mrf.mxu0
    %v1174 = vadd.f32 %v962, %v1173
    %v1175 = vpop.f32.mrf.mxu0
    %1176 = vdwg.mxu0
    %1177 = vmatpush.bf16.msra.mxu0 %v1117
    %1178 = vmatpush.bf16.msra.mxu0 %v1113
    %1179 = vmatpush.bf16.msra.mxu0 %v1109
    %1180 = vmatpush.bf16.msra.mxu0 %v1105
    %1181 = vmatpush.bf16.msra.mxu0 %v1101
    %1182 = vmatpush.bf16.msra.mxu0 %v1097
    %1183 = vmatpush.bf16.msra.mxu0 %v1093
    %1184 = vmatpush.bf16.msra.mxu0 %v1089
    %1185 = vmatmul.bf16.gmra.mxu0 0
    %v1186 = vpop.f32.mrf.mxu0
    %v1187 = vadd.f32 %v975, %v1186
    %v1188 = vpop.f32.mrf.mxu0
    %1189 = vdwg.mxu0
    %1190 = vmatpush.bf16.msra.mxu0 %v1118
    %1191 = vmatpush.bf16.msra.mxu0 %v1114
    %1192 = vmatpush.bf16.msra.mxu0 %v1110
    %1193 = vmatpush.bf16.msra.mxu0 %v1106
    %1194 = vmatpush.bf16.msra.mxu0 %v1102
    %1195 = vmatpush.bf16.msra.mxu0 %v1098
    %1196 = vmatpush.bf16.msra.mxu0 %v1094
    %1197 = vmatpush.bf16.msra.mxu0 %v1090
    %1198 = vmatmul.bf16.gmra.mxu0 0
    %v1199 = vpop.f32.mrf.mxu0
    %v1200 = vadd.f32 %v988, %v1199
    %v1201 = vpop.f32.mrf.mxu0
    %1202 = vdwg.mxu0
    %v1203 = vadd.f32 %v1161, %v532
    %v1204 = vadd.f32 %v1174, %v533
    %v1205 = vadd.f32 %v1187, %v534
    %v1206 = vadd.f32 %v1200, %v535
    %v1207 = vmul.f32 %v1203, 0.5
    %v1208 = vmul.f32 %v1204, 0.5
    %v1209 = vmul.f32 %v1205, 0.5
    %v1210 = vtanh.pop %v1207
    %v1211 = vtanh.pop %v1208
    %v1212 = vtanh.pop %v1209
    %v1213 = vmul.f32 %v1210, 0.5
    %v1214 = vmul.f32 %v1211, 0.5
    %v1215 = vmul.f32 %v1212, 0.5
    %v1216 = vadd.f32 %v1213, 0.5
    %v1217 = vadd.f32 %v1214, 0.5
    %v1218 = vadd.f32 %v1215, 0.5
    %v1219 = vtanh.pop %v1206
    %v1220 = vmul.f32 %v1217, 0.0
    %v1221 = vmul.f32 %v1216, %v1219
    %v1222 = vadd.f32 %v1220, %v1221
    %v1223 = vtanh.pop %v1222
    %v1224 = vmul.f32 %v1218, %v1223
    %v1225 = vld [vmem:[#allocation2 + $0x20] sm:$0xff]
    %v1226 = vld [vmem:[#allocation2 + $0x28] sm:$0xff]
    %v1227 = vld [vmem:[#allocation2 + $0x30] sm:$0xff]
    %v1228 = vld [vmem:[#allocation2 + $0x38] sm:$0xff]
    %1229 = vmatpush.bf16.msra.mxu0 %v668
    %1230 = vmatpush.bf16.msra.mxu0 %v664
    %1231 = vmatpush.bf16.msra.mxu0 %v660
    %1232 = vmatpush.bf16.msra.mxu0 %v656
    %1233 = vmatpush.bf16.msra.mxu0 %v652
    %1234 = vmatpush.bf16.msra.mxu0 %v648
    %1235 = vmatpush.bf16.msra.mxu0 %v644
    %1236 = vmatpush.bf16.msra.mxu0 %v640
    %1237 = vmatmul.bf16.gmra.mxu0 %v778
    %v1238 = vpop.f32.mrf.mxu0
    %v1239 = vadd.f32 0.0, %v1238
    %v1240 = vpop.f32.mrf.mxu0
    %1241 = vdwg.mxu0
    %1242 = vmatpush.bf16.msra.mxu0 %v669
    %1243 = vmatpush.bf16.msra.mxu0 %v665
    %1244 = vmatpush.bf16.msra.mxu0 %v661
    %1245 = vmatpush.bf16.msra.mxu0 %v657
    %1246 = vmatpush.bf16.msra.mxu0 %v653
    %1247 = vmatpush.bf16.msra.mxu0 %v649
    %1248 = vmatpush.bf16.msra.mxu0 %v645
    %1249 = vmatpush.bf16.msra.mxu0 %v641
    %1250 = vmatmul.bf16.gmra.mxu0 %v778
    %v1251 = vpop.f32.mrf.mxu0
    %v1252 = vadd.f32 0.0, %v1251
    %v1253 = vpop.f32.mrf.mxu0
    %1254 = vdwg.mxu0
    %1255 = vmatpush.bf16.msra.mxu0 %v670
    %1256 = vmatpush.bf16.msra.mxu0 %v666
    %1257 = vmatpush.bf16.msra.mxu0 %v662
    %1258 = vmatpush.bf16.msra.mxu0 %v658
    %1259 = vmatpush.bf16.msra.mxu0 %v654
    %1260 = vmatpush.bf16.msra.mxu0 %v650
    %1261 = vmatpush.bf16.msra.mxu0 %v646
    %1262 = vmatpush.bf16.msra.mxu0 %v642
    %1263 = vmatmul.bf16.gmra.mxu0 %v778
    %v1264 = vpop.f32.mrf.mxu0
    %v1265 = vadd.f32 0.0, %v1264
    %v1266 = vpop.f32.mrf.mxu0
    %1267 = vdwg.mxu0
    %1268 = vmatpush.bf16.msra.mxu0 %v671
    %1269 = vmatpush.bf16.msra.mxu0 %v667
    %1270 = vmatpush.bf16.msra.mxu0 %v663
    %1271 = vmatpush.bf16.msra.mxu0 %v659
    %1272 = vmatpush.bf16.msra.mxu0 %v655
    %1273 = vmatpush.bf16.msra.mxu0 %v651
    %1274 = vmatpush.bf16.msra.mxu0 %v647
    %1275 = vmatpush.bf16.msra.mxu0 %v643
    %1276 = vmatmul.bf16.gmra.mxu0 %v778
    %v1277 = vpop.f32.mrf.mxu0
    %v1278 = vadd.f32 0.0, %v1277
    %v1279 = vpop.f32.mrf.mxu0
    %1280 = vdwg.mxu0
    %v1281 = vadd.f32 %v1225, %v1239
    %v1282 = vadd.f32 %v1226, %v1252
    %v1283 = vadd.f32 %v1227, %v1265
    %v1284 = vadd.f32 %v1228, %v1278
    %v1285 = vmul.f32 %v1281, 0.5
    %v1286 = vmul.f32 %v1282, 0.5
    %v1287 = vmul.f32 %v1283, 0.5
    %v1288 = vtanh.pop %v1285
    %v1289 = vtanh.pop %v1286
    %v1290 = vtanh.pop %v1287
    %v1291 = vmul.f32 %v1288, 0.5
    %v1292 = vmul.f32 %v1289, 0.5
    %v1293 = vmul.f32 %v1290, 0.5
    %v1294 = vadd.f32 %v1291, 0.5
    %v1295 = vadd.f32 %v1292, 0.5
    %v1296 = vadd.f32 %v1293, 0.5
    %v1297 = vtanh.pop %v1284
    %v1298 = vmul.f32 %v1295, %v775
    %v1299 = vmul.f32 %v1294, %v1297
    %v1300 = vadd.f32 %v1298, %v1299
    %v1301 = vtanh.pop %v1300
    %v1302 = vmul.f32 %v1296, %v1301
    %v1303 = vpack.c.bf16 %v1224, %v1224
    %v1304 = vpack.c.bf16 %v1302, %v1302
    %1305 = vmatpush.bf16.msra.mxu0 %v903
    %1306 = vmatpush.bf16.msra.mxu0 %v899
    %1307 = vmatpush.bf16.msra.mxu0 %v895
    %1308 = vmatpush.bf16.msra.mxu0 %v891
    %1309 = vmatpush.bf16.msra.mxu0 %v887
    %1310 = vmatpush.bf16.msra.mxu0 %v883
    %1311 = vmatpush.bf16.msra.mxu0 %v879
    %1312 = vmatpush.bf16.msra.mxu0 %v875
    %1313 = vmatmul.bf16.gmra.mxu0 %v1304
    %v1314 = vpop.f32.mrf.mxu0
    %v1315 = vadd.f32 0.0, %v1314
    %v1316 = vpop.f32.mrf.mxu0
    %1317 = vdwg.mxu0
    %1318 = vmatpush.bf16.msra.mxu0 %v904
    %1319 = vmatpush.bf16.msra.mxu0 %v900
    %1320 = vmatpush.bf16.msra.mxu0 %v896
    %1321 = vmatpush.bf16.msra.mxu0 %v892
    %1322 = vmatpush.bf16.msra.mxu0 %v888
    %1323 = vmatpush.bf16.msra.mxu0 %v884
    %1324 = vmatpush.bf16.msra.mxu0 %v880
    %1325 = vmatpush.bf16.msra.mxu0 %v876
    %1326 = vmatmul.bf16.gmra.mxu0 %v1304
    %v1327 = vpop.f32.mrf.mxu0
    %v1328 = vadd.f32 0.0, %v1327
    %v1329 = vpop.f32.mrf.mxu0
    %1330 = vdwg.mxu0
    %1331 = vmatpush.bf16.msra.mxu0 %v905
    %1332 = vmatpush.bf16.msra.mxu0 %v901
    %1333 = vmatpush.bf16.msra.mxu0 %v897
    %1334 = vmatpush.bf16.msra.mxu0 %v893
    %1335 = vmatpush.bf16.msra.mxu0 %v889
    %1336 = vmatpush.bf16.msra.mxu0 %v885
    %1337 = vmatpush.bf16.msra.mxu0 %v881
    %1338 = vmatpush.bf16.msra.mxu0 %v877
    %1339 = vmatmul.bf16.gmra.mxu0 %v1304
    %v1340 = vpop.f32.mrf.mxu0
    %v1341 = vadd.f32 0.0, %v1340
    %v1342 = vpop.f32.mrf.mxu0
    %1343 = vdwg.mxu0
    %1344 = vmatpush.bf16.msra.mxu0 %v906
    %1345 = vmatpush.bf16.msra.mxu0 %v902
    %1346 = vmatpush.bf16.msra.mxu0 %v898
    %1347 = vmatpush.bf16.msra.mxu0 %v894
    %1348 = vmatpush.bf16.msra.mxu0 %v890
    %1349 = vmatpush.bf16.msra.mxu0 %v886
    %1350 = vmatpush.bf16.msra.mxu0 %v882
    %1351 = vmatpush.bf16.msra.mxu0 %v878
    %1352 = vmatmul.bf16.gmra.mxu0 %v1304
    %v1353 = vpop.f32.mrf.mxu0
    %v1354 = vadd.f32 0.0, %v1353
    %v1355 = vpop.f32.mrf.mxu0
    %1356 = vdwg.mxu0
    %1357 = vmatpush.bf16.msra.mxu0 %v1115
    %1358 = vmatpush.bf16.msra.mxu0 %v1111
    %1359 = vmatpush.bf16.msra.mxu0 %v1107
    %1360 = vmatpush.bf16.msra.mxu0 %v1103
    %1361 = vmatpush.bf16.msra.mxu0 %v1099
    %1362 = vmatpush.bf16.msra.mxu0 %v1095
    %1363 = vmatpush.bf16.msra.mxu0 %v1091
    %1364 = vmatpush.bf16.msra.mxu0 %v1087
    %1365 = vmatmul.bf16.gmra.mxu0 %v1303
    %v1366 = vpop.f32.mrf.mxu0
    %v1367 = vadd.f32 %v1315, %v1366
    %v1368 = vpop.f32.mrf.mxu0
    %1369 = vdwg.mxu0
    %1370 = vmatpush.bf16.msra.mxu0 %v1116
    %1371 = vmatpush.bf16.msra.mxu0 %v1112
    %1372 = vmatpush.bf16.msra.mxu0 %v1108
    %1373 = vmatpush.bf16.msra.mxu0 %v1104
    %1374 = vmatpush.bf16.msra.mxu0 %v1100
    %1375 = vmatpush.bf16.msra.mxu0 %v1096
    %1376 = vmatpush.bf16.msra.mxu0 %v1092
    %1377 = vmatpush.bf16.msra.mxu0 %v1088
    %1378 = vmatmul.bf16.gmra.mxu0 %v1303
    %v1379 = vpop.f32.mrf.mxu0
    %v1380 = vadd.f32 %v1328, %v1379
    %v1381 = vpop.f32.mrf.mxu0
    %1382 = vdwg.mxu0
    %1383 = vmatpush.bf16.msra.mxu0 %v1117
    %1384 = vmatpush.bf16.msra.mxu0 %v1113
    %1385 = vmatpush.bf16.msra.mxu0 %v1109
    %1386 = vmatpush.bf16.msra.mxu0 %v1105
    %1387 = vmatpush.bf16.msra.mxu0 %v1101
    %1388 = vmatpush.bf16.msra.mxu0 %v1097
    %1389 = vmatpush.bf16.msra.mxu0 %v1093
    %1390 = vmatpush.bf16.msra.mxu0 %v1089
    %1391 = vmatmul.bf16.gmra.mxu0 %v1303
    %v1392 = vpop.f32.mrf.mxu0
    %v1393 = vadd.f32 %v1341, %v1392
    %v1394 = vpop.f32.mrf.mxu0
    %1395 = vdwg.mxu0
    %1396 = vmatpush.bf16.msra.mxu0 %v1118
    %1397 = vmatpush.bf16.msra.mxu0 %v1114
    %1398 = vmatpush.bf16.msra.mxu0 %v1110
    %1399 = vmatpush.bf16.msra.mxu0 %v1106
    %1400 = vmatpush.bf16.msra.mxu0 %v1102
    %1401 = vmatpush.bf16.msra.mxu0 %v1098
    %1402 = vmatpush.bf16.msra.mxu0 %v1094
    %1403 = vmatpush.bf16.msra.mxu0 %v1090
    %1404 = vmatmul.bf16.gmra.mxu0 %v1303
    %v1405 = vpop.f32.mrf.mxu0
    %v1406 = vadd.f32 %v1354, %v1405
    %v1407 = vpop.f32.mrf.mxu0
    %1408 = vdwg.mxu0
    %v1409 = vadd.f32 %v1367, %v532
    %v1410 = vadd.f32 %v1380, %v533
    %v1411 = vadd.f32 %v1393, %v534
    %v1412 = vadd.f32 %v1406, %v535
    %v1413 = vmul.f32 %v1409, 0.5
    %v1414 = vmul.f32 %v1410, 0.5
    %v1415 = vmul.f32 %v1411, 0.5
    %v1416 = vtanh.pop %v1413
    %v1417 = vtanh.pop %v1414
    %v1418 = vtanh.pop %v1415
    %v1419 = vmul.f32 %v1416, 0.5
    %v1420 = vmul.f32 %v1417, 0.5
    %v1421 = vmul.f32 %v1418, 0.5
    %v1422 = vadd.f32 %v1419, 0.5
    %v1423 = vadd.f32 %v1420, 0.5
    %v1424 = vadd.f32 %v1421, 0.5
    %v1425 = vtanh.pop %v1412
    %v1426 = vmul.f32 %v1423, %v1222
    %v1427 = vmul.f32 %v1422, %v1425
    %v1428 = vadd.f32 %v1426, %v1427
    %v1429 = vtanh.pop %v1428
    %v1430 = vmul.f32 %v1424, %v1429
    %v1431 = vld [vmem:[#allocation2 + $0x40] sm:$0xff]
    %v1432 = vld [vmem:[#allocation2 + $0x48] sm:$0xff]
    %v1433 = vld [vmem:[#allocation2 + $0x50] sm:$0xff]
    %v1434 = vld [vmem:[#allocation2 + $0x58] sm:$0xff]
    %1435 = vmatpush.bf16.msra.mxu0 %v668
    %1436 = vmatpush.bf16.msra.mxu0 %v664
    %1437 = vmatpush.bf16.msra.mxu0 %v660
    %1438 = vmatpush.bf16.msra.mxu0 %v656
    %1439 = vmatpush.bf16.msra.mxu0 %v652
    %1440 = vmatpush.bf16.msra.mxu0 %v648
    %1441 = vmatpush.bf16.msra.mxu0 %v644
    %1442 = vmatpush.bf16.msra.mxu0 %v640
    %1443 = vmatmul.bf16.gmra.mxu0 %v1304
    %v1444 = vpop.f32.mrf.mxu0
    %v1445 = vadd.f32 0.0, %v1444
    %v1446 = vpop.f32.mrf.mxu0
    %1447 = vdwg.mxu0
    %1448 = vmatpush.bf16.msra.mxu0 %v669
    %1449 = vmatpush.bf16.msra.mxu0 %v665
    %1450 = vmatpush.bf16.msra.mxu0 %v661
    %1451 = vmatpush.bf16.msra.mxu0 %v657
    %1452 = vmatpush.bf16.msra.mxu0 %v653
    %1453 = vmatpush.bf16.msra.mxu0 %v649
    %1454 = vmatpush.bf16.msra.mxu0 %v645
    %1455 = vmatpush.bf16.msra.mxu0 %v641
    %1456 = vmatmul.bf16.gmra.mxu0 %v1304
    %v1457 = vpop.f32.mrf.mxu0
    %v1458 = vadd.f32 0.0, %v1457
    %v1459 = vpop.f32.mrf.mxu0
    %1460 = vdwg.mxu0
    %1461 = vmatpush.bf16.msra.mxu0 %v670
    %1462 = vmatpush.bf16.msra.mxu0 %v666
    %1463 = vmatpush.bf16.msra.mxu0 %v662
    %1464 = vmatpush.bf16.msra.mxu0 %v658
    %1465 = vmatpush.bf16.msra.mxu0 %v654
    %1466 = vmatpush.bf16.msra.mxu0 %v650
    %1467 = vmatpush.bf16.msra.mxu0 %v646
    %1468 = vmatpush.bf16.msra.mxu0 %v642
    %1469 = vmatmul.bf16.gmra.mxu0 %v1304
    %v1470 = vpop.f32.mrf.mxu0
    %v1471 = vadd.f32 0.0, %v1470
    %v1472 = vpop.f32.mrf.mxu0
    %1473 = vdwg.mxu0
    %1474 = vmatpush.bf16.msra.mxu0 %v671
    %1475 = vmatpush.bf16.msra.mxu0 %v667
    %1476 = vmatpush.bf16.msra.mxu0 %v663
    %1477 = vmatpush.bf16.msra.mxu0 %v659
    %1478 = vmatpush.bf16.msra.mxu0 %v655
    %1479 = vmatpush.bf16.msra.mxu0 %v651
    %1480 = vmatpush.bf16.msra.mxu0 %v647
    %1481 = vmatpush.bf16.msra.mxu0 %v643
    %1482 = vmatmul.bf16.gmra.mxu0 %v1304
    %v1483 = vpop.f32.mrf.mxu0
    %v1484 = vadd.f32 0.0, %v1483
    %v1485 = vpop.f32.mrf.mxu0
    %1486 = vdwg.mxu0
    %v1487 = vadd.f32 %v1431, %v1445
    %v1488 = vadd.f32 %v1432, %v1458
    %v1489 = vadd.f32 %v1433, %v1471
    %v1490 = vadd.f32 %v1434, %v1484
    %v1491 = vmul.f32 %v1487, 0.5
    %v1492 = vmul.f32 %v1488, 0.5
    %v1493 = vmul.f32 %v1489, 0.5
    %v1494 = vtanh.pop %v1491
    %v1495 = vtanh.pop %v1492
    %v1496 = vtanh.pop %v1493
    %v1497 = vmul.f32 %v1494, 0.5
    %v1498 = vmul.f32 %v1495, 0.5
    %v1499 = vmul.f32 %v1496, 0.5
    %v1500 = vadd.f32 %v1497, 0.5
    %v1501 = vadd.f32 %v1498, 0.5
    %v1502 = vadd.f32 %v1499, 0.5
    %v1503 = vtanh.pop %v1490
    %v1504 = vmul.f32 %v1501, %v1300
    %v1505 = vmul.f32 %v1500, %v1503
    %v1506 = vadd.f32 %v1504, %v1505
    %v1507 = vtanh.pop %v1506
    %v1508 = vmul.f32 %v1502, %v1507
    %v1509 = vpack.c.bf16 %v1430, %v1430
    %v1510 = vpack.c.bf16 %v1508, %v1508
    %1511 = vmatpush.bf16.msra.mxu0 %v903
    %1512 = vmatpush.bf16.msra.mxu0 %v899
    %1513 = vmatpush.bf16.msra.mxu0 %v895
    %1514 = vmatpush.bf16.msra.mxu0 %v891
    %1515 = vmatpush.bf16.msra.mxu0 %v887
    %1516 = vmatpush.bf16.msra.mxu0 %v883
    %1517 = vmatpush.bf16.msra.mxu0 %v879
    %1518 = vmatpush.bf16.msra.mxu0 %v875
    %1519 = vmatmul.bf16.gmra.mxu0 %v1510
    %v1520 = vpop.f32.mrf.mxu0
    %v1521 = vadd.f32 0.0, %v1520
    %v1522 = vpop.f32.mrf.mxu0
    %1523 = vdwg.mxu0
    %1524 = vmatpush.bf16.msra.mxu0 %v904
    %1525 = vmatpush.bf16.msra.mxu0 %v900
    %1526 = vmatpush.bf16.msra.mxu0 %v896
    %1527 = vmatpush.bf16.msra.mxu0 %v892
    %1528 = vmatpush.bf16.msra.mxu0 %v888
    %1529 = vmatpush.bf16.msra.mxu0 %v884
    %1530 = vmatpush.bf16.msra.mxu0 %v880
    %1531 = vmatpush.bf16.msra.mxu0 %v876
    %1532 = vmatmul.bf16.gmra.mxu0 %v1510
    %v1533 = vpop.f32.mrf.mxu0
    %v1534 = vadd.f32 0.0, %v1533
    %v1535 = vpop.f32.mrf.mxu0
    %1536 = vdwg.mxu0
    %1537 = vmatpush.bf16.msra.mxu0 %v905
    %1538 = vmatpush.bf16.msra.mxu0 %v901
    %1539 = vmatpush.bf16.msra.mxu0 %v897
    %1540 = vmatpush.bf16.msra.mxu0 %v893
    %1541 = vmatpush.bf16.msra.mxu0 %v889
    %1542 = vmatpush.bf16.msra.mxu0 %v885
    %1543 = vmatpush.bf16.msra.mxu0 %v881
    %1544 = vmatpush.bf16.msra.mxu0 %v877
    %1545 = vmatmul.bf16.gmra.mxu0 %v1510
    %v1546 = vpop.f32.mrf.mxu0
    %v1547 = vadd.f32 0.0, %v1546
    %v1548 = vpop.f32.mrf.mxu0
    %1549 = vdwg.mxu0
    %1550 = vmatpush.bf16.msra.mxu0 %v906
    %1551 = vmatpush.bf16.msra.mxu0 %v902
    %1552 = vmatpush.bf16.msra.mxu0 %v898
    %1553 = vmatpush.bf16.msra.mxu0 %v894
    %1554 = vmatpush.bf16.msra.mxu0 %v890
    %1555 = vmatpush.bf16.msra.mxu0 %v886
    %1556 = vmatpush.bf16.msra.mxu0 %v882
    %1557 = vmatpush.bf16.msra.mxu0 %v878
    %1558 = vmatmul.bf16.gmra.mxu0 %v1510
    %v1559 = vpop.f32.mrf.mxu0
    %v1560 = vadd.f32 0.0, %v1559
    %v1561 = vpop.f32.mrf.mxu0
    %1562 = vdwg.mxu0
    %1563 = vmatpush.bf16.msra.mxu0 %v1115
    %1564 = vmatpush.bf16.msra.mxu0 %v1111
    %1565 = vmatpush.bf16.msra.mxu0 %v1107
    %1566 = vmatpush.bf16.msra.mxu0 %v1103
    %1567 = vmatpush.bf16.msra.mxu0 %v1099
    %1568 = vmatpush.bf16.msra.mxu0 %v1095
    %1569 = vmatpush.bf16.msra.mxu0 %v1091
    %1570 = vmatpush.bf16.msra.mxu0 %v1087
    %1571 = vmatmul.bf16.gmra.mxu0 %v1509
    %v1572 = vpop.f32.mrf.mxu0
    %v1573 = vadd.f32 %v1521, %v1572
    %v1574 = vpop.f32.mrf.mxu0
    %1575 = vdwg.mxu0
    %1576 = vmatpush.bf16.msra.mxu0 %v1116
    %1577 = vmatpush.bf16.msra.mxu0 %v1112
    %1578 = vmatpush.bf16.msra.mxu0 %v1108
    %1579 = vmatpush.bf16.msra.mxu0 %v1104
    %1580 = vmatpush.bf16.msra.mxu0 %v1100
    %1581 = vmatpush.bf16.msra.mxu0 %v1096
    %1582 = vmatpush.bf16.msra.mxu0 %v1092
    %1583 = vmatpush.bf16.msra.mxu0 %v1088
    %1584 = vmatmul.bf16.gmra.mxu0 %v1509
    %v1585 = vpop.f32.mrf.mxu0
    %v1586 = vadd.f32 %v1534, %v1585
    %v1587 = vpop.f32.mrf.mxu0
    %1588 = vdwg.mxu0
    %1589 = vmatpush.bf16.msra.mxu0 %v1117
    %1590 = vmatpush.bf16.msra.mxu0 %v1113
    %1591 = vmatpush.bf16.msra.mxu0 %v1109
    %1592 = vmatpush.bf16.msra.mxu0 %v1105
    %1593 = vmatpush.bf16.msra.mxu0 %v1101
    %1594 = vmatpush.bf16.msra.mxu0 %v1097
    %1595 = vmatpush.bf16.msra.mxu0 %v1093
    %1596 = vmatpush.bf16.msra.mxu0 %v1089
    %1597 = vmatmul.bf16.gmra.mxu0 %v1509
    %v1598 = vpop.f32.mrf.mxu0
    %v1599 = vadd.f32 %v1547, %v1598
    %v1600 = vpop.f32.mrf.mxu0
    %1601 = vdwg.mxu0
    %1602 = vmatpush.bf16.msra.mxu0 %v1118
    %1603 = vmatpush.bf16.msra.mxu0 %v1114
    %1604 = vmatpush.bf16.msra.mxu0 %v1110
    %1605 = vmatpush.bf16.msra.mxu0 %v1106
    %1606 = vmatpush.bf16.msra.mxu0 %v1102
    %1607 = vmatpush.bf16.msra.mxu0 %v1098
    %1608 = vmatpush.bf16.msra.mxu0 %v1094
    %1609 = vmatpush.bf16.msra.mxu0 %v1090
    %1610 = vmatmul.bf16.gmra.mxu0 %v1509
    %v1611 = vpop.f32.mrf.mxu0
    %v1612 = vadd.f32 %v1560, %v1611
    %v1613 = vpop.f32.mrf.mxu0
    %1614 = vdwg.mxu0
    %v1615 = vadd.f32 %v1573, %v532
    %v1616 = vadd.f32 %v1586, %v533
    %v1617 = vadd.f32 %v1599, %v534
    %v1618 = vadd.f32 %v1612, %v535
    %v1619 = vmul.f32 %v1615, 0.5
    %v1620 = vmul.f32 %v1616, 0.5
    %v1621 = vmul.f32 %v1617, 0.5
    %v1622 = vtanh.pop %v1619
    %v1623 = vtanh.pop %v1620
    %v1624 = vtanh.pop %v1621
    %v1625 = vmul.f32 %v1622, 0.5
    %v1626 = vmul.f32 %v1623, 0.5
    %v1627 = vmul.f32 %v1624, 0.5
    %v1628 = vadd.f32 %v1625, 0.5
    %v1629 = vadd.f32 %v1626, 0.5
    %v1630 = vadd.f32 %v1627, 0.5
    %v1631 = vtanh.pop %v1618
    %v1632 = vmul.f32 %v1629, %v1428
    %v1633 = vmul.f32 %v1628, %v1631
    %v1634 = vadd.f32 %v1632, %v1633
    %v1635 = vtanh.pop %v1634
    %v1636 = vmul.f32 %v1630, %v1635
    %v1637 = vld [vmem:[#allocation2 + $0x60] sm:$0xff]
    %v1638 = vld [vmem:[#allocation2 + $0x68] sm:$0xff]
    %v1639 = vld [vmem:[#allocation2 + $0x70] sm:$0xff]
    %v1640 = vld [vmem:[#allocation2 + $0x78] sm:$0xff]
    %1641 = vmatpush.bf16.msra.mxu0 %v668
    %1642 = vmatpush.bf16.msra.mxu0 %v664
    %1643 = vmatpush.bf16.msra.mxu0 %v660
    %1644 = vmatpush.bf16.msra.mxu0 %v656
    %1645 = vmatpush.bf16.msra.mxu0 %v652
    %1646 = vmatpush.bf16.msra.mxu0 %v648
    %1647 = vmatpush.bf16.msra.mxu0 %v644
    %1648 = vmatpush.bf16.msra.mxu0 %v640
    %1649 = vmatmul.bf16.gmra.mxu0 %v1510
    %v1650 = vpop.f32.mrf.mxu0
    %v1651 = vadd.f32 0.0, %v1650
    %v1652 = vpop.f32.mrf.mxu0
    %1653 = vdwg.mxu0
    %1654 = vmatpush.bf16.msra.mxu0 %v669
    %1655 = vmatpush.bf16.msra.mxu0 %v665
    %1656 = vmatpush.bf16.msra.mxu0 %v661
    %1657 = vmatpush.bf16.msra.mxu0 %v657
    %1658 = vmatpush.bf16.msra.mxu0 %v653
    %1659 = vmatpush.bf16.msra.mxu0 %v649
    %1660 = vmatpush.bf16.msra.mxu0 %v645
    %1661 = vmatpush.bf16.msra.mxu0 %v641
    %1662 = vmatmul.bf16.gmra.mxu0 %v1510
    %v1663 = vpop.f32.mrf.mxu0
    %v1664 = vadd.f32 0.0, %v1663
    %v1665 = vpop.f32.mrf.mxu0
    %1666 = vdwg.mxu0
    %1667 = vmatpush.bf16.msra.mxu0 %v670
    %1668 = vmatpush.bf16.msra.mxu0 %v666
    %1669 = vmatpush.bf16.msra.mxu0 %v662
    %1670 = vmatpush.bf16.msra.mxu0 %v658
    %1671 = vmatpush.bf16.msra.mxu0 %v654
    %1672 = vmatpush.bf16.msra.mxu0 %v650
    %1673 = vmatpush.bf16.msra.mxu0 %v646
    %1674 = vmatpush.bf16.msra.mxu0 %v642
    %1675 = vmatmul.bf16.gmra.mxu0 %v1510
    %v1676 = vpop.f32.mrf.mxu0
    %v1677 = vadd.f32 0.0, %v1676
    %v1678 = vpop.f32.mrf.mxu0
    %1679 = vdwg.mxu0
    %1680 = vmatpush.bf16.msra.mxu0 %v671
    %1681 = vmatpush.bf16.msra.mxu0 %v667
    %1682 = vmatpush.bf16.msra.mxu0 %v663
    %1683 = vmatpush.bf16.msra.mxu0 %v659
    %1684 = vmatpush.bf16.msra.mxu0 %v655
    %1685 = vmatpush.bf16.msra.mxu0 %v651
    %1686 = vmatpush.bf16.msra.mxu0 %v647
    %1687 = vmatpush.bf16.msra.mxu0 %v643
    %1688 = vmatmul.bf16.gmra.mxu0 %v1510
    %v1689 = vpop.f32.mrf.mxu0
    %v1690 = vadd.f32 0.0, %v1689
    %v1691 = vpop.f32.mrf.mxu0
    %1692 = vdwg.mxu0
    %v1693 = vadd.f32 %v1637, %v1651
    %v1694 = vadd.f32 %v1638, %v1664
    %v1695 = vadd.f32 %v1639, %v1677
    %v1696 = vadd.f32 %v1640, %v1690
    %v1697 = vmul.f32 %v1693, 0.5
    %v1698 = vmul.f32 %v1694, 0.5
    %v1699 = vmul.f32 %v1695, 0.5
    %v1700 = vtanh.pop %v1697
    %v1701 = vtanh.pop %v1698
    %v1702 = vtanh.pop %v1699
    %v1703 = vmul.f32 %v1700, 0.5
    %v1704 = vmul.f32 %v1701, 0.5
    %v1705 = vmul.f32 %v1702, 0.5
    %v1706 = vadd.f32 %v1703, 0.5
    %v1707 = vadd.f32 %v1704, 0.5
    %v1708 = vadd.f32 %v1705, 0.5
    %v1709 = vtanh.pop %v1696
    %v1710 = vmul.f32 %v1707, %v1506
    %v1711 = vmul.f32 %v1706, %v1709
    %v1712 = vadd.f32 %v1710, %v1711
    %v1713 = vtanh.pop %v1712
    %v1714 = vmul.f32 %v1708, %v1713
    %v1715 = vpack.c.bf16 %v1636, %v1636
    %v1716 = vpack.c.bf16 %v1714, %v1714
    %1717 = vmatpush.bf16.msra.mxu0 %v903
    %1718 = vmatpush.bf16.msra.mxu0 %v899
    %1719 = vmatpush.bf16.msra.mxu0 %v895
    %1720 = vmatpush.bf16.msra.mxu0 %v891
    %1721 = vmatpush.bf16.msra.mxu0 %v887
    %1722 = vmatpush.bf16.msra.mxu0 %v883
    %1723 = vmatpush.bf16.msra.mxu0 %v879
    %1724 = vmatpush.bf16.msra.mxu0 %v875
    %1725 = vmatmul.bf16.gmra.mxu0 %v1716
    %v1726 = vpop.f32.mrf.mxu0
    %v1727 = vadd.f32 0.0, %v1726
    %v1728 = vpop.f32.mrf.mxu0
    %1729 = vdwg.mxu0
    %1730 = vmatpush.bf16.msra.mxu0 %v904
    %1731 = vmatpush.bf16.msra.mxu0 %v900
    %1732 = vmatpush.bf16.msra.mxu0 %v896
    %1733 = vmatpush.bf16.msra.mxu0 %v892
    %1734 = vmatpush.bf16.msra.mxu0 %v888
    %1735 = vmatpush.bf16.msra.mxu0 %v884
    %1736 = vmatpush.bf16.msra.mxu0 %v880
    %1737 = vmatpush.bf16.msra.mxu0 %v876
    %1738 = vmatmul.bf16.gmra.mxu0 %v1716
    %v1739 = vpop.f32.mrf.mxu0
    %v1740 = vadd.f32 0.0, %v1739
    %v1741 = vpop.f32.mrf.mxu0
    %1742 = vdwg.mxu0
    %1743 = vmatpush.bf16.msra.mxu0 %v905
    %1744 = vmatpush.bf16.msra.mxu0 %v901
    %1745 = vmatpush.bf16.msra.mxu0 %v897
    %1746 = vmatpush.bf16.msra.mxu0 %v893
    %1747 = vmatpush.bf16.msra.mxu0 %v889
    %1748 = vmatpush.bf16.msra.mxu0 %v885
    %1749 = vmatpush.bf16.msra.mxu0 %v881
    %1750 = vmatpush.bf16.msra.mxu0 %v877
    %1751 = vmatmul.bf16.gmra.mxu0 %v1716
    %v1752 = vpop.f32.mrf.mxu0
    %v1753 = vadd.f32 0.0, %v1752
    %v1754 = vpop.f32.mrf.mxu0
    %1755 = vdwg.mxu0
    %1756 = vmatpush.bf16.msra.mxu0 %v906
    %1757 = vmatpush.bf16.msra.mxu0 %v902
    %1758 = vmatpush.bf16.msra.mxu0 %v898
    %1759 = vmatpush.bf16.msra.mxu0 %v894
    %1760 = vmatpush.bf16.msra.mxu0 %v890
    %1761 = vmatpush.bf16.msra.mxu0 %v886
    %1762 = vmatpush.bf16.msra.mxu0 %v882
    %1763 = vmatpush.bf16.msra.mxu0 %v878
    %1764 = vmatmul.bf16.gmra.mxu0 %v1716
    %v1765 = vpop.f32.mrf.mxu0
    %v1766 = vadd.f32 0.0, %v1765
    %v1767 = vpop.f32.mrf.mxu0
    %1768 = vdwg.mxu0
    %1769 = vmatpush.bf16.msra.mxu0 %v1115
    %1770 = vmatpush.bf16.msra.mxu0 %v1111
    %1771 = vmatpush.bf16.msra.mxu0 %v1107
    %1772 = vmatpush.bf16.msra.mxu0 %v1103
    %1773 = vmatpush.bf16.msra.mxu0 %v1099
    %1774 = vmatpush.bf16.msra.mxu0 %v1095
    %1775 = vmatpush.bf16.msra.mxu0 %v1091
    %1776 = vmatpush.bf16.msra.mxu0 %v1087
    %1777 = vmatmul.bf16.gmra.mxu0 %v1715
    %v1778 = vpop.f32.mrf.mxu0
    %v1779 = vadd.f32 %v1727, %v1778
    %v1780 = vpop.f32.mrf.mxu0
    %1781 = vdwg.mxu0
    %1782 = vmatpush.bf16.msra.mxu0 %v1116
    %1783 = vmatpush.bf16.msra.mxu0 %v1112
    %1784 = vmatpush.bf16.msra.mxu0 %v1108
    %1785 = vmatpush.bf16.msra.mxu0 %v1104
    %1786 = vmatpush.bf16.msra.mxu0 %v1100
    %1787 = vmatpush.bf16.msra.mxu0 %v1096
    %1788 = vmatpush.bf16.msra.mxu0 %v1092
    %1789 = vmatpush.bf16.msra.mxu0 %v1088
    %1790 = vmatmul.bf16.gmra.mxu0 %v1715
    %v1791 = vpop.f32.mrf.mxu0
    %v1792 = vadd.f32 %v1740, %v1791
    %v1793 = vpop.f32.mrf.mxu0
    %1794 = vdwg.mxu0
    %1795 = vmatpush.bf16.msra.mxu0 %v1117
    %1796 = vmatpush.bf16.msra.mxu0 %v1113
    %1797 = vmatpush.bf16.msra.mxu0 %v1109
    %1798 = vmatpush.bf16.msra.mxu0 %v1105
    %1799 = vmatpush.bf16.msra.mxu0 %v1101
    %1800 = vmatpush.bf16.msra.mxu0 %v1097
    %1801 = vmatpush.bf16.msra.mxu0 %v1093
    %1802 = vmatpush.bf16.msra.mxu0 %v1089
    %1803 = vmatmul.bf16.gmra.mxu0 %v1715
    %v1804 = vpop.f32.mrf.mxu0
    %v1805 = vadd.f32 %v1753, %v1804
    %v1806 = vpop.f32.mrf.mxu0
    %1807 = vdwg.mxu0
    %1808 = vmatpush.bf16.msra.mxu0 %v1118
    %1809 = vmatpush.bf16.msra.mxu0 %v1114
    %1810 = vmatpush.bf16.msra.mxu0 %v1110
    %1811 = vmatpush.bf16.msra.mxu0 %v1106
    %1812 = vmatpush.bf16.msra.mxu0 %v1102
    %1813 = vmatpush.bf16.msra.mxu0 %v1098
    %1814 = vmatpush.bf16.msra.mxu0 %v1094
    %1815 = vmatpush.bf16.msra.mxu0 %v1090
    %1816 = vmatmul.bf16.gmra.mxu0 %v1715
    %v1817 = vpop.f32.mrf.mxu0
    %v1818 = vadd.f32 %v1766, %v1817
    %v1819 = vpop.f32.mrf.mxu0
    %1820 = vdwg.mxu0
    %v1821 = vadd.f32 %v1779, %v532
    %v1822 = vadd.f32 %v1792, %v533
    %v1823 = vadd.f32 %v1805, %v534
    %v1824 = vadd.f32 %v1818, %v535
    %v1825 = vmul.f32 %v1821, 0.5
    %v1826 = vmul.f32 %v1822, 0.5
    %v1827 = vmul.f32 %v1823, 0.5
    %v1828 = vtanh.pop %v1825
    %v1829 = vtanh.pop %v1826
    %v1830 = vtanh.pop %v1827
    %v1831 = vmul.f32 %v1828, 0.5
    %v1832 = vmul.f32 %v1829, 0.5
    %v1833 = vmul.f32 %v1830, 0.5
    %v1834 = vadd.f32 %v1831, 0.5
    %v1835 = vadd.f32 %v1832, 0.5
    %v1836 = vadd.f32 %v1833, 0.5
    %v1837 = vtanh.pop %v1824
    %v1838 = vmul.f32 %v1835, %v1634
    %v1839 = vmul.f32 %v1834, %v1837
    %v1840 = vadd.f32 %v1838, %v1839
    %v1841 = vtanh.pop %v1840
    %v1842 = vmul.f32 %v1836, %v1841
    %v1843 = vld [vmem:[#allocation2 + $0x80] sm:$0xff]
    %v1844 = vld [vmem:[#allocation2 + $0x88] sm:$0xff]
    %v1845 = vld [vmem:[#allocation2 + $0x90] sm:$0xff]
    %v1846 = vld [vmem:[#allocation2 + $0x98] sm:$0xff]
    %1847 = vmatpush.bf16.msra.mxu0 %v668
    %1848 = vmatpush.bf16.msra.mxu0 %v664
    %1849 = vmatpush.bf16.msra.mxu0 %v660
    %1850 = vmatpush.bf16.msra.mxu0 %v656
    %1851 = vmatpush.bf16.msra.mxu0 %v652
    %1852 = vmatpush.bf16.msra.mxu0 %v648
    %1853 = vmatpush.bf16.msra.mxu0 %v644
    %1854 = vmatpush.bf16.msra.mxu0 %v640
    %1855 = vmatmul.bf16.gmra.mxu0 %v1716
    %v1856 = vpop.f32.mrf.mxu0
    %v1857 = vadd.f32 0.0, %v1856
    %v1858 = vpop.f32.mrf.mxu0
    %1859 = vdwg.mxu0
    %1860 = vmatpush.bf16.msra.mxu0 %v669
    %1861 = vmatpush.bf16.msra.mxu0 %v665
    %1862 = vmatpush.bf16.msra.mxu0 %v661
    %1863 = vmatpush.bf16.msra.mxu0 %v657
    %1864 = vmatpush.bf16.msra.mxu0 %v653
    %1865 = vmatpush.bf16.msra.mxu0 %v649
    %1866 = vmatpush.bf16.msra.mxu0 %v645
    %1867 = vmatpush.bf16.msra.mxu0 %v641
    %1868 = vmatmul.bf16.gmra.mxu0 %v1716
    %v1869 = vpop.f32.mrf.mxu0
    %v1870 = vadd.f32 0.0, %v1869
    %v1871 = vpop.f32.mrf.mxu0
    %1872 = vdwg.mxu0
    %1873 = vmatpush.bf16.msra.mxu0 %v670
    %1874 = vmatpush.bf16.msra.mxu0 %v666
    %1875 = vmatpush.bf16.msra.mxu0 %v662
    %1876 = vmatpush.bf16.msra.mxu0 %v658
    %1877 = vmatpush.bf16.msra.mxu0 %v654
    %1878 = vmatpush.bf16.msra.mxu0 %v650
    %1879 = vmatpush.bf16.msra.mxu0 %v646
    %1880 = vmatpush.bf16.msra.mxu0 %v642
    %1881 = vmatmul.bf16.gmra.mxu0 %v1716
    %v1882 = vpop.f32.mrf.mxu0
    %v1883 = vadd.f32 0.0, %v1882
    %v1884 = vpop.f32.mrf.mxu0
    %1885 = vdwg.mxu0
    %1886 = vmatpush.bf16.msra.mxu0 %v671
    %1887 = vmatpush.bf16.msra.mxu0 %v667
    %1888 = vmatpush.bf16.msra.mxu0 %v663
    %1889 = vmatpush.bf16.msra.mxu0 %v659
    %1890 = vmatpush.bf16.msra.mxu0 %v655
    %1891 = vmatpush.bf16.msra.mxu0 %v651
    %1892 = vmatpush.bf16.msra.mxu0 %v647
    %1893 = vmatpush.bf16.msra.mxu0 %v643
    %1894 = vmatmul.bf16.gmra.mxu0 %v1716
    %v1895 = vpop.f32.mrf.mxu0
    %v1896 = vadd.f32 0.0, %v1895
    %v1897 = vpop.f32.mrf.mxu0
    %1898 = vdwg.mxu0
    %v1899 = vadd.f32 %v1843, %v1857
    %v1900 = vadd.f32 %v1844, %v1870
    %v1901 = vadd.f32 %v1845, %v1883
    %v1902 = vadd.f32 %v1846, %v1896
    %v1903 = vmul.f32 %v1899, 0.5
    %v1904 = vmul.f32 %v1900, 0.5
    %v1905 = vmul.f32 %v1901, 0.5
    %v1906 = vtanh.pop %v1903
    %v1907 = vtanh.pop %v1904
    %v1908 = vtanh.pop %v1905
    %v1909 = vmul.f32 %v1906, 0.5
    %v1910 = vmul.f32 %v1907, 0.5
    %v1911 = vmul.f32 %v1908, 0.5
    %v1912 = vadd.f32 %v1909, 0.5
    %v1913 = vadd.f32 %v1910, 0.5
    %v1914 = vadd.f32 %v1911, 0.5
    %v1915 = vtanh.pop %v1902
    %v1916 = vmul.f32 %v1913, %v1712
    %v1917 = vmul.f32 %v1912, %v1915
    %v1918 = vadd.f32 %v1916, %v1917
    %v1919 = vtanh.pop %v1918
    %v1920 = vmul.f32 %v1914, %v1919
    %v1921 = vpack.c.bf16 %v1842, %v1842
    %v1922 = vpack.c.bf16 %v1920, %v1920
    %1923 = vmatpush.bf16.msra.mxu0 %v903
    %1924 = vmatpush.bf16.msra.mxu0 %v899
    %1925 = vmatpush.bf16.msra.mxu0 %v895
    %1926 = vmatpush.bf16.msra.mxu0 %v891
    %1927 = vmatpush.bf16.msra.mxu0 %v887
    %1928 = vmatpush.bf16.msra.mxu0 %v883
    %1929 = vmatpush.bf16.msra.mxu0 %v879
    %1930 = vmatpush.bf16.msra.mxu0 %v875
    %1931 = vmatmul.bf16.gmra.mxu0 %v1922
    %v1932 = vpop.f32.mrf.mxu0
    %v1933 = vadd.f32 0.0, %v1932
    %v1934 = vpop.f32.mrf.mxu0
    %1935 = vdwg.mxu0
    %1936 = vmatpush.bf16.msra.mxu0 %v904
    %1937 = vmatpush.bf16.msra.mxu0 %v900
    %1938 = vmatpush.bf16.msra.mxu0 %v896
    %1939 = vmatpush.bf16.msra.mxu0 %v892
    %1940 = vmatpush.bf16.msra.mxu0 %v888
    %1941 = vmatpush.bf16.msra.mxu0 %v884
    %1942 = vmatpush.bf16.msra.mxu0 %v880
    %1943 = vmatpush.bf16.msra.mxu0 %v876
    %1944 = vmatmul.bf16.gmra.mxu0 %v1922
    %v1945 = vpop.f32.mrf.mxu0
    %v1946 = vadd.f32 0.0, %v1945
    %v1947 = vpop.f32.mrf.mxu0
    %1948 = vdwg.mxu0
    %1949 = vmatpush.bf16.msra.mxu0 %v905
    %1950 = vmatpush.bf16.msra.mxu0 %v901
    %1951 = vmatpush.bf16.msra.mxu0 %v897
    %1952 = vmatpush.bf16.msra.mxu0 %v893
    %1953 = vmatpush.bf16.msra.mxu0 %v889
    %1954 = vmatpush.bf16.msra.mxu0 %v885
    %1955 = vmatpush.bf16.msra.mxu0 %v881
    %1956 = vmatpush.bf16.msra.mxu0 %v877
    %1957 = vmatmul.bf16.gmra.mxu0 %v1922
    %v1958 = vpop.f32.mrf.mxu0
    %v1959 = vadd.f32 0.0, %v1958
    %v1960 = vpop.f32.mrf.mxu0
    %1961 = vdwg.mxu0
    %1962 = vmatpush.bf16.msra.mxu0 %v906
    %1963 = vmatpush.bf16.msra.mxu0 %v902
    %1964 = vmatpush.bf16.msra.mxu0 %v898
    %1965 = vmatpush.bf16.msra.mxu0 %v894
    %1966 = vmatpush.bf16.msra.mxu0 %v890
    %1967 = vmatpush.bf16.msra.mxu0 %v886
    %1968 = vmatpush.bf16.msra.mxu0 %v882
    %1969 = vmatpush.bf16.msra.mxu0 %v878
    %1970 = vmatmul.bf16.gmra.mxu0 %v1922
    %v1971 = vpop.f32.mrf.mxu0
    %v1972 = vadd.f32 0.0, %v1971
    %v1973 = vpop.f32.mrf.mxu0
    %1974 = vdwg.mxu0
    %1975 = vmatpush.bf16.msra.mxu0 %v1115
    %1976 = vmatpush.bf16.msra.mxu0 %v1111
    %1977 = vmatpush.bf16.msra.mxu0 %v1107
    %1978 = vmatpush.bf16.msra.mxu0 %v1103
    %1979 = vmatpush.bf16.msra.mxu0 %v1099
    %1980 = vmatpush.bf16.msra.mxu0 %v1095
    %1981 = vmatpush.bf16.msra.mxu0 %v1091
    %1982 = vmatpush.bf16.msra.mxu0 %v1087
    %1983 = vmatmul.bf16.gmra.mxu0 %v1921
    %v1984 = vpop.f32.mrf.mxu0
    %v1985 = vadd.f32 %v1933, %v1984
    %v1986 = vpop.f32.mrf.mxu0
    %1987 = vdwg.mxu0
    %1988 = vmatpush.bf16.msra.mxu0 %v1116
    %1989 = vmatpush.bf16.msra.mxu0 %v1112
    %1990 = vmatpush.bf16.msra.mxu0 %v1108
    %1991 = vmatpush.bf16.msra.mxu0 %v1104
    %1992 = vmatpush.bf16.msra.mxu0 %v1100
    %1993 = vmatpush.bf16.msra.mxu0 %v1096
    %1994 = vmatpush.bf16.msra.mxu0 %v1092
    %1995 = vmatpush.bf16.msra.mxu0 %v1088
    %1996 = vmatmul.bf16.gmra.mxu0 %v1921
    %v1997 = vpop.f32.mrf.mxu0
    %v1998 = vadd.f32 %v1946, %v1997
    %v1999 = vpop.f32.mrf.mxu0
    %2000 = vdwg.mxu0
    %2001 = vmatpush.bf16.msra.mxu0 %v1117
    %2002 = vmatpush.bf16.msra.mxu0 %v1113
    %2003 = vmatpush.bf16.msra.mxu0 %v1109
    %2004 = vmatpush.bf16.msra.mxu0 %v1105
    %2005 = vmatpush.bf16.msra.mxu0 %v1101
    %2006 = vmatpush.bf16.msra.mxu0 %v1097
    %2007 = vmatpush.bf16.msra.mxu0 %v1093
    %2008 = vmatpush.bf16.msra.mxu0 %v1089
    %2009 = vmatmul.bf16.gmra.mxu0 %v1921
    %v2010 = vpop.f32.mrf.mxu0
    %v2011 = vadd.f32 %v1959, %v2010
    %v2012 = vpop.f32.mrf.mxu0
    %2013 = vdwg.mxu0
    %2014 = vmatpush.bf16.msra.mxu0 %v1118
    %2015 = vmatpush.bf16.msra.mxu0 %v1114
    %2016 = vmatpush.bf16.msra.mxu0 %v1110
    %2017 = vmatpush.bf16.msra.mxu0 %v1106
    %2018 = vmatpush.bf16.msra.mxu0 %v1102
    %2019 = vmatpush.bf16.msra.mxu0 %v1098
    %2020 = vmatpush.bf16.msra.mxu0 %v1094
    %2021 = vmatpush.bf16.msra.mxu0 %v1090
    %2022 = vmatmul.bf16.gmra.mxu0 %v1921
    %v2023 = vpop.f32.mrf.mxu0
    %v2024 = vadd.f32 %v1972, %v2023
    %v2025 = vpop.f32.mrf.mxu0
    %2026 = vdwg.mxu0
    %v2027 = vadd.f32 %v1985, %v532
    %v2028 = vadd.f32 %v1998, %v533
    %v2029 = vadd.f32 %v2011, %v534
    %v2030 = vadd.f32 %v2024, %v535
    %v2031 = vmul.f32 %v2027, 0.5
    %v2032 = vmul.f32 %v2028, 0.5
    %v2033 = vmul.f32 %v2029, 0.5
    %v2034 = vtanh.pop %v2031
    %v2035 = vtanh.pop %v2032
    %v2036 = vtanh.pop %v2033
    %v2037 = vmul.f32 %v2034, 0.5
    %v2038 = vmul.f32 %v2035, 0.5
    %v2039 = vmul.f32 %v2036, 0.5
    %v2040 = vadd.f32 %v2037, 0.5
    %v2041 = vadd.f32 %v2038, 0.5
    %v2042 = vadd.f32 %v2039, 0.5
    %v2043 = vtanh.pop %v2030
    %v2044 = vmul.f32 %v2041, %v1840
    %v2045 = vmul.f32 %v2040, %v2043
    %v2046 = vadd.f32 %v2044, %v2045
    %v2047 = vtanh.pop %v2046
    %v2048 = vmul.f32 %v2042, %v2047
    %v2049 = vld [vmem:[#allocation2 + $0xa0] sm:$0xff]
    %v2050 = vld [vmem:[#allocation2 + $0xa8] sm:$0xff]
    %v2051 = vld [vmem:[#allocation2 + $0xb0] sm:$0xff]
    %v2052 = vld [vmem:[#allocation2 + $0xb8] sm:$0xff]
    %2053 = vmatpush.bf16.msra.mxu0 %v668
    %2054 = vmatpush.bf16.msra.mxu0 %v664
    %2055 = vmatpush.bf16.msra.mxu0 %v660
    %2056 = vmatpush.bf16.msra.mxu0 %v656
    %2057 = vmatpush.bf16.msra.mxu0 %v652
    %2058 = vmatpush.bf16.msra.mxu0 %v648
    %2059 = vmatpush.bf16.msra.mxu0 %v644
    %2060 = vmatpush.bf16.msra.mxu0 %v640
    %2061 = vmatmul.bf16.gmra.mxu0 %v1922
    %v2062 = vpop.f32.mrf.mxu0
    %v2063 = vadd.f32 0.0, %v2062
    %v2064 = vpop.f32.mrf.mxu0
    %2065 = vdwg.mxu0
    %2066 = vmatpush.bf16.msra.mxu0 %v669
    %2067 = vmatpush.bf16.msra.mxu0 %v665
    %2068 = vmatpush.bf16.msra.mxu0 %v661
    %2069 = vmatpush.bf16.msra.mxu0 %v657
    %2070 = vmatpush.bf16.msra.mxu0 %v653
    %2071 = vmatpush.bf16.msra.mxu0 %v649
    %2072 = vmatpush.bf16.msra.mxu0 %v645
    %2073 = vmatpush.bf16.msra.mxu0 %v641
    %2074 = vmatmul.bf16.gmra.mxu0 %v1922
    %v2075 = vpop.f32.mrf.mxu0
    %v2076 = vadd.f32 0.0, %v2075
    %v2077 = vpop.f32.mrf.mxu0
    %2078 = vdwg.mxu0
    %2079 = vmatpush.bf16.msra.mxu0 %v670
    %2080 = vmatpush.bf16.msra.mxu0 %v666
    %2081 = vmatpush.bf16.msra.mxu0 %v662
    %2082 = vmatpush.bf16.msra.mxu0 %v658
    %2083 = vmatpush.bf16.msra.mxu0 %v654
    %2084 = vmatpush.bf16.msra.mxu0 %v650
    %2085 = vmatpush.bf16.msra.mxu0 %v646
    %2086 = vmatpush.bf16.msra.mxu0 %v642
    %2087 = vmatmul.bf16.gmra.mxu0 %v1922
    %v2088 = vpop.f32.mrf.mxu0
    %v2089 = vadd.f32 0.0, %v2088
    %v2090 = vpop.f32.mrf.mxu0
    %2091 = vdwg.mxu0
    %2092 = vmatpush.bf16.msra.mxu0 %v671
    %2093 = vmatpush.bf16.msra.mxu0 %v667
    %2094 = vmatpush.bf16.msra.mxu0 %v663
    %2095 = vmatpush.bf16.msra.mxu0 %v659
    %2096 = vmatpush.bf16.msra.mxu0 %v655
    %2097 = vmatpush.bf16.msra.mxu0 %v651
    %2098 = vmatpush.bf16.msra.mxu0 %v647
    %2099 = vmatpush.bf16.msra.mxu0 %v643
    %2100 = vmatmul.bf16.gmra.mxu0 %v1922
    %v2101 = vpop.f32.mrf.mxu0
    %v2102 = vadd.f32 0.0, %v2101
    %v2103 = vpop.f32.mrf.mxu0
    %2104 = vdwg.mxu0
    %v2105 = vadd.f32 %v2049, %v2063
    %v2106 = vadd.f32 %v2050, %v2076
    %v2107 = vadd.f32 %v2051, %v2089
    %v2108 = vadd.f32 %v2052, %v2102
    %v2109 = vmul.f32 %v2105, 0.5
    %v2110 = vmul.f32 %v2106, 0.5
    %v2111 = vmul.f32 %v2107, 0.5
    %v2112 = vtanh.pop %v2109
    %v2113 = vtanh.pop %v2110
    %v2114 = vtanh.pop %v2111
    %v2115 = vmul.f32 %v2112, 0.5
    %v2116 = vmul.f32 %v2113, 0.5
    %v2117 = vmul.f32 %v2114, 0.5
    %v2118 = vadd.f32 %v2115, 0.5
    %v2119 = vadd.f32 %v2116, 0.5
    %v2120 = vadd.f32 %v2117, 0.5
    %v2121 = vtanh.pop %v2108
    %v2122 = vmul.f32 %v2119, %v1918
    %v2123 = vmul.f32 %v2118, %v2121
    %v2124 = vadd.f32 %v2122, %v2123
    %v2125 = vtanh.pop %v2124
    %v2126 = vmul.f32 %v2120, %v2125
    %v2127 = vpack.c.bf16 %v2048, %v2048
    %v2128 = vpack.c.bf16 %v2126, %v2126
    %2129 = vmatpush.bf16.msra.mxu0 %v903
    %2130 = vmatpush.bf16.msra.mxu0 %v899
    %2131 = vmatpush.bf16.msra.mxu0 %v895
    %2132 = vmatpush.bf16.msra.mxu0 %v891
    %2133 = vmatpush.bf16.msra.mxu0 %v887
    %2134 = vmatpush.bf16.msra.mxu0 %v883
    %2135 = vmatpush.bf16.msra.mxu0 %v879
    %2136 = vmatpush.bf16.msra.mxu0 %v875
    %2137 = vmatmul.bf16.gmra.mxu0 %v2128
    %v2138 = vpop.f32.mrf.mxu0
    %v2139 = vadd.f32 0.0, %v2138
    %v2140 = vpop.f32.mrf.mxu0
    %2141 = vdwg.mxu0
    %2142 = vmatpush.bf16.msra.mxu0 %v904
    %2143 = vmatpush.bf16.msra.mxu0 %v900
    %2144 = vmatpush.bf16.msra.mxu0 %v896
    %2145 = vmatpush.bf16.msra.mxu0 %v892
    %2146 = vmatpush.bf16.msra.mxu0 %v888
    %2147 = vmatpush.bf16.msra.mxu0 %v884
    %2148 = vmatpush.bf16.msra.mxu0 %v880
    %2149 = vmatpush.bf16.msra.mxu0 %v876
    %2150 = vmatmul.bf16.gmra.mxu0 %v2128
    %v2151 = vpop.f32.mrf.mxu0
    %v2152 = vadd.f32 0.0, %v2151
    %v2153 = vpop.f32.mrf.mxu0
    %2154 = vdwg.mxu0
    %2155 = vmatpush.bf16.msra.mxu0 %v905
    %2156 = vmatpush.bf16.msra.mxu0 %v901
    %2157 = vmatpush.bf16.msra.mxu0 %v897
    %2158 = vmatpush.bf16.msra.mxu0 %v893
    %2159 = vmatpush.bf16.msra.mxu0 %v889
    %2160 = vmatpush.bf16.msra.mxu0 %v885
    %2161 = vmatpush.bf16.msra.mxu0 %v881
    %2162 = vmatpush.bf16.msra.mxu0 %v877
    %2163 = vmatmul.bf16.gmra.mxu0 %v2128
    %v2164 = vpop.f32.mrf.mxu0
    %v2165 = vadd.f32 0.0, %v2164
    %v2166 = vpop.f32.mrf.mxu0
    %2167 = vdwg.mxu0
    %2168 = vmatpush.bf16.msra.mxu0 %v906
    %2169 = vmatpush.bf16.msra.mxu0 %v902
    %2170 = vmatpush.bf16.msra.mxu0 %v898
    %2171 = vmatpush.bf16.msra.mxu0 %v894
    %2172 = vmatpush.bf16.msra.mxu0 %v890
    %2173 = vmatpush.bf16.msra.mxu0 %v886
    %2174 = vmatpush.bf16.msra.mxu0 %v882
    %2175 = vmatpush.bf16.msra.mxu0 %v878
    %2176 = vmatmul.bf16.gmra.mxu0 %v2128
    %v2177 = vpop.f32.mrf.mxu0
    %v2178 = vadd.f32 0.0, %v2177
    %v2179 = vpop.f32.mrf.mxu0
    %2180 = vdwg.mxu0
    %2181 = vmatpush.bf16.msra.mxu0 %v1115
    %2182 = vmatpush.bf16.msra.mxu0 %v1111
    %2183 = vmatpush.bf16.msra.mxu0 %v1107
    %2184 = vmatpush.bf16.msra.mxu0 %v1103
    %2185 = vmatpush.bf16.msra.mxu0 %v1099
    %2186 = vmatpush.bf16.msra.mxu0 %v1095
    %2187 = vmatpush.bf16.msra.mxu0 %v1091
    %2188 = vmatpush.bf16.msra.mxu0 %v1087
    %2189 = vmatmul.bf16.gmra.mxu0 %v2127
    %v2190 = vpop.f32.mrf.mxu0
    %v2191 = vadd.f32 %v2139, %v2190
    %v2192 = vpop.f32.mrf.mxu0
    %2193 = vdwg.mxu0
    %2194 = vmatpush.bf16.msra.mxu0 %v1116
    %2195 = vmatpush.bf16.msra.mxu0 %v1112
    %2196 = vmatpush.bf16.msra.mxu0 %v1108
    %2197 = vmatpush.bf16.msra.mxu0 %v1104
    %2198 = vmatpush.bf16.msra.mxu0 %v1100
    %2199 = vmatpush.bf16.msra.mxu0 %v1096
    %2200 = vmatpush.bf16.msra.mxu0 %v1092
    %2201 = vmatpush.bf16.msra.mxu0 %v1088
    %2202 = vmatmul.bf16.gmra.mxu0 %v2127
    %v2203 = vpop.f32.mrf.mxu0
    %v2204 = vadd.f32 %v2152, %v2203
    %v2205 = vpop.f32.mrf.mxu0
    %2206 = vdwg.mxu0
    %2207 = vmatpush.bf16.msra.mxu0 %v1117
    %2208 = vmatpush.bf16.msra.mxu0 %v1113
    %2209 = vmatpush.bf16.msra.mxu0 %v1109
    %2210 = vmatpush.bf16.msra.mxu0 %v1105
    %2211 = vmatpush.bf16.msra.mxu0 %v1101
    %2212 = vmatpush.bf16.msra.mxu0 %v1097
    %2213 = vmatpush.bf16.msra.mxu0 %v1093
    %2214 = vmatpush.bf16.msra.mxu0 %v1089
    %2215 = vmatmul.bf16.gmra.mxu0 %v2127
    %v2216 = vpop.f32.mrf.mxu0
    %v2217 = vadd.f32 %v2165, %v2216
    %v2218 = vpop.f32.mrf.mxu0
    %2219 = vdwg.mxu0
    %2220 = vmatpush.bf16.msra.mxu0 %v1118
    %2221 = vmatpush.bf16.msra.mxu0 %v1114
    %2222 = vmatpush.bf16.msra.mxu0 %v1110
    %2223 = vmatpush.bf16.msra.mxu0 %v1106
    %2224 = vmatpush.bf16.msra.mxu0 %v1102
    %2225 = vmatpush.bf16.msra.mxu0 %v1098
    %2226 = vmatpush.bf16.msra.mxu0 %v1094
    %2227 = vmatpush.bf16.msra.mxu0 %v1090
    %2228 = vmatmul.bf16.gmra.mxu0 %v2127
    %v2229 = vpop.f32.mrf.mxu0
    %v2230 = vadd.f32 %v2178, %v2229
    %v2231 = vpop.f32.mrf.mxu0
    %2232 = vdwg.mxu0
    %v2233 = vadd.f32 %v2191, %v532
    %v2234 = vadd.f32 %v2204, %v533
    %v2235 = vadd.f32 %v2217, %v534
    %v2236 = vadd.f32 %v2230, %v535
    %v2237 = vmul.f32 %v2233, 0.5
    %v2238 = vmul.f32 %v2234, 0.5
    %v2239 = vmul.f32 %v2235, 0.5
    %v2240 = vtanh.pop %v2237
    %v2241 = vtanh.pop %v2238
    %v2242 = vtanh.pop %v2239
    %v2243 = vmul.f32 %v2240, 0.5
    %v2244 = vmul.f32 %v2241, 0.5
    %v2245 = vmul.f32 %v2242, 0.5
    %v2246 = vadd.f32 %v2243, 0.5
    %v2247 = vadd.f32 %v2244, 0.5
    %v2248 = vadd.f32 %v2245, 0.5
    %v2249 = vtanh.pop %v2236
    %v2250 = vmul.f32 %v2247, %v2046
    %v2251 = vmul.f32 %v2246, %v2249
    %v2252 = vadd.f32 %v2250, %v2251
    %v2253 = vtanh.pop %v2252
    %v2254 = vmul.f32 %v2248, %v2253
    %v2255 = vld [vmem:[#allocation2 + $0xc0] sm:$0xff]
    %v2256 = vld [vmem:[#allocation2 + $0xc8] sm:$0xff]
    %v2257 = vld [vmem:[#allocation2 + $0xd0] sm:$0xff]
    %v2258 = vld [vmem:[#allocation2 + $0xd8] sm:$0xff]
    %2259 = vmatpush.bf16.msra.mxu0 %v668
    %2260 = vmatpush.bf16.msra.mxu0 %v664
    %2261 = vmatpush.bf16.msra.mxu0 %v660
    %2262 = vmatpush.bf16.msra.mxu0 %v656
    %2263 = vmatpush.bf16.msra.mxu0 %v652
    %2264 = vmatpush.bf16.msra.mxu0 %v648
    %2265 = vmatpush.bf16.msra.mxu0 %v644
    %2266 = vmatpush.bf16.msra.mxu0 %v640
    %2267 = vmatmul.bf16.gmra.mxu0 %v2128
    %v2268 = vpop.f32.mrf.mxu0
    %v2269 = vadd.f32 0.0, %v2268
    %v2270 = vpop.f32.mrf.mxu0
    %2271 = vdwg.mxu0
    %2272 = vmatpush.bf16.msra.mxu0 %v669
    %2273 = vmatpush.bf16.msra.mxu0 %v665
    %2274 = vmatpush.bf16.msra.mxu0 %v661
    %2275 = vmatpush.bf16.msra.mxu0 %v657
    %2276 = vmatpush.bf16.msra.mxu0 %v653
    %2277 = vmatpush.bf16.msra.mxu0 %v649
    %2278 = vmatpush.bf16.msra.mxu0 %v645
    %2279 = vmatpush.bf16.msra.mxu0 %v641
    %2280 = vmatmul.bf16.gmra.mxu0 %v2128
    %v2281 = vpop.f32.mrf.mxu0
    %v2282 = vadd.f32 0.0, %v2281
    %v2283 = vpop.f32.mrf.mxu0
    %2284 = vdwg.mxu0
    %2285 = vmatpush.bf16.msra.mxu0 %v670
    %2286 = vmatpush.bf16.msra.mxu0 %v666
    %2287 = vmatpush.bf16.msra.mxu0 %v662
    %2288 = vmatpush.bf16.msra.mxu0 %v658
    %2289 = vmatpush.bf16.msra.mxu0 %v654
    %2290 = vmatpush.bf16.msra.mxu0 %v650
    %2291 = vmatpush.bf16.msra.mxu0 %v646
    %2292 = vmatpush.bf16.msra.mxu0 %v642
    %2293 = vmatmul.bf16.gmra.mxu0 %v2128
    %v2294 = vpop.f32.mrf.mxu0
    %v2295 = vadd.f32 0.0, %v2294
    %v2296 = vpop.f32.mrf.mxu0
    %2297 = vdwg.mxu0
    %2298 = vmatpush.bf16.msra.mxu0 %v671
    %2299 = vmatpush.bf16.msra.mxu0 %v667
    %2300 = vmatpush.bf16.msra.mxu0 %v663
    %2301 = vmatpush.bf16.msra.mxu0 %v659
    %2302 = vmatpush.bf16.msra.mxu0 %v655
    %2303 = vmatpush.bf16.msra.mxu0 %v651
    %2304 = vmatpush.bf16.msra.mxu0 %v647
    %2305 = vmatpush.bf16.msra.mxu0 %v643
    %2306 = vmatmul.bf16.gmra.mxu0 %v2128
    %v2307 = vpop.f32.mrf.mxu0
    %v2308 = vadd.f32 0.0, %v2307
    %v2309 = vpop.f32.mrf.mxu0
    %2310 = vdwg.mxu0
    %v2311 = vadd.f32 %v2255, %v2269
    %v2312 = vadd.f32 %v2256, %v2282
    %v2313 = vadd.f32 %v2257, %v2295
    %v2314 = vadd.f32 %v2258, %v2308
    %v2315 = vmul.f32 %v2311, 0.5
    %v2316 = vmul.f32 %v2312, 0.5
    %v2317 = vmul.f32 %v2313, 0.5
    %v2318 = vtanh.pop %v2315
    %v2319 = vtanh.pop %v2316
    %v2320 = vtanh.pop %v2317
    %v2321 = vmul.f32 %v2318, 0.5
    %v2322 = vmul.f32 %v2319, 0.5
    %v2323 = vmul.f32 %v2320, 0.5
    %v2324 = vadd.f32 %v2321, 0.5
    %v2325 = vadd.f32 %v2322, 0.5
    %v2326 = vadd.f32 %v2323, 0.5
    %v2327 = vtanh.pop %v2314
    %v2328 = vmul.f32 %v2325, %v2124
    %v2329 = vmul.f32 %v2324, %v2327
    %v2330 = vadd.f32 %v2328, %v2329
    %v2331 = vtanh.pop %v2330
    %v2332 = vmul.f32 %v2326, %v2331
    %v2333 = vpack.c.bf16 %v2254, %v2254
    %v2334 = vpack.c.bf16 %v2332, %v2332
    %2335 = vmatpush.bf16.msra.mxu0 %v903
    %2336 = vmatpush.bf16.msra.mxu0 %v899
    %2337 = vmatpush.bf16.msra.mxu0 %v895
    %2338 = vmatpush.bf16.msra.mxu0 %v891
    %2339 = vmatpush.bf16.msra.mxu0 %v887
    %2340 = vmatpush.bf16.msra.mxu0 %v883
    %2341 = vmatpush.bf16.msra.mxu0 %v879
    %2342 = vmatpush.bf16.msra.mxu0 %v875
    %2343 = vmatmul.bf16.gmra.mxu0 %v2334
    %v2344 = vpop.f32.mrf.mxu0
    %v2345 = vadd.f32 0.0, %v2344
    %v2346 = vpop.f32.mrf.mxu0
    %2347 = vdwg.mxu0
    %2348 = vmatpush.bf16.msra.mxu0 %v904
    %2349 = vmatpush.bf16.msra.mxu0 %v900
    %2350 = vmatpush.bf16.msra.mxu0 %v896
    %2351 = vmatpush.bf16.msra.mxu0 %v892
    %2352 = vmatpush.bf16.msra.mxu0 %v888
    %2353 = vmatpush.bf16.msra.mxu0 %v884
    %2354 = vmatpush.bf16.msra.mxu0 %v880
    %2355 = vmatpush.bf16.msra.mxu0 %v876
    %2356 = vmatmul.bf16.gmra.mxu0 %v2334
    %v2357 = vpop.f32.mrf.mxu0
    %v2358 = vadd.f32 0.0, %v2357
    %v2359 = vpop.f32.mrf.mxu0
    %2360 = vdwg.mxu0
    %2361 = vmatpush.bf16.msra.mxu0 %v905
    %2362 = vmatpush.bf16.msra.mxu0 %v901
    %2363 = vmatpush.bf16.msra.mxu0 %v897
    %2364 = vmatpush.bf16.msra.mxu0 %v893
    %2365 = vmatpush.bf16.msra.mxu0 %v889
    %2366 = vmatpush.bf16.msra.mxu0 %v885
    %2367 = vmatpush.bf16.msra.mxu0 %v881
    %2368 = vmatpush.bf16.msra.mxu0 %v877
    %2369 = vmatmul.bf16.gmra.mxu0 %v2334
    %v2370 = vpop.f32.mrf.mxu0
    %v2371 = vadd.f32 0.0, %v2370
    %v2372 = vpop.f32.mrf.mxu0
    %2373 = vdwg.mxu0
    %2374 = vmatpush.bf16.msra.mxu0 %v906
    %2375 = vmatpush.bf16.msra.mxu0 %v902
    %2376 = vmatpush.bf16.msra.mxu0 %v898
    %2377 = vmatpush.bf16.msra.mxu0 %v894
    %2378 = vmatpush.bf16.msra.mxu0 %v890
    %2379 = vmatpush.bf16.msra.mxu0 %v886
    %2380 = vmatpush.bf16.msra.mxu0 %v882
    %2381 = vmatpush.bf16.msra.mxu0 %v878
    %2382 = vmatmul.bf16.gmra.mxu0 %v2334
    %v2383 = vpop.f32.mrf.mxu0
    %v2384 = vadd.f32 0.0, %v2383
    %v2385 = vpop.f32.mrf.mxu0
    %2386 = vdwg.mxu0
    %2387 = vmatpush.bf16.msra.mxu0 %v1115
    %2388 = vmatpush.bf16.msra.mxu0 %v1111
    %2389 = vmatpush.bf16.msra.mxu0 %v1107
    %2390 = vmatpush.bf16.msra.mxu0 %v1103
    %2391 = vmatpush.bf16.msra.mxu0 %v1099
    %2392 = vmatpush.bf16.msra.mxu0 %v1095
    %2393 = vmatpush.bf16.msra.mxu0 %v1091
    %2394 = vmatpush.bf16.msra.mxu0 %v1087
    %2395 = vmatmul.bf16.gmra.mxu0 %v2333
    %v2396 = vpop.f32.mrf.mxu0
    %v2397 = vadd.f32 %v2345, %v2396
    %v2398 = vpop.f32.mrf.mxu0
    %2399 = vdwg.mxu0
    %2400 = vmatpush.bf16.msra.mxu0 %v1116
    %2401 = vmatpush.bf16.msra.mxu0 %v1112
    %2402 = vmatpush.bf16.msra.mxu0 %v1108
    %2403 = vmatpush.bf16.msra.mxu0 %v1104
    %2404 = vmatpush.bf16.msra.mxu0 %v1100
    %2405 = vmatpush.bf16.msra.mxu0 %v1096
    %2406 = vmatpush.bf16.msra.mxu0 %v1092
    %2407 = vmatpush.bf16.msra.mxu0 %v1088
    %2408 = vmatmul.bf16.gmra.mxu0 %v2333
    %v2409 = vpop.f32.mrf.mxu0
    %v2410 = vadd.f32 %v2358, %v2409
    %v2411 = vpop.f32.mrf.mxu0
    %2412 = vdwg.mxu0
    %2413 = vmatpush.bf16.msra.mxu0 %v1117
    %2414 = vmatpush.bf16.msra.mxu0 %v1113
    %2415 = vmatpush.bf16.msra.mxu0 %v1109
    %2416 = vmatpush.bf16.msra.mxu0 %v1105
    %2417 = vmatpush.bf16.msra.mxu0 %v1101
    %2418 = vmatpush.bf16.msra.mxu0 %v1097
    %2419 = vmatpush.bf16.msra.mxu0 %v1093
    %2420 = vmatpush.bf16.msra.mxu0 %v1089
    %2421 = vmatmul.bf16.gmra.mxu0 %v2333
    %v2422 = vpop.f32.mrf.mxu0
    %v2423 = vadd.f32 %v2371, %v2422
    %v2424 = vpop.f32.mrf.mxu0
    %2425 = vdwg.mxu0
    %2426 = vmatpush.bf16.msra.mxu0 %v1118
    %2427 = vmatpush.bf16.msra.mxu0 %v1114
    %2428 = vmatpush.bf16.msra.mxu0 %v1110
    %2429 = vmatpush.bf16.msra.mxu0 %v1106
    %2430 = vmatpush.bf16.msra.mxu0 %v1102
    %2431 = vmatpush.bf16.msra.mxu0 %v1098
    %2432 = vmatpush.bf16.msra.mxu0 %v1094
    %2433 = vmatpush.bf16.msra.mxu0 %v1090
    %2434 = vmatmul.bf16.gmra.mxu0 %v2333
    %v2435 = vpop.f32.mrf.mxu0
    %v2436 = vadd.f32 %v2384, %v2435
    %v2437 = vpop.f32.mrf.mxu0
    %2438 = vdwg.mxu0
    %v2439 = vadd.f32 %v2397, %v532
    %v2440 = vadd.f32 %v2410, %v533
    %v2441 = vadd.f32 %v2423, %v534
    %v2442 = vadd.f32 %v2436, %v535
    %v2443 = vmul.f32 %v2439, 0.5
    %v2444 = vmul.f32 %v2440, 0.5
    %v2445 = vmul.f32 %v2441, 0.5
    %v2446 = vtanh.pop %v2443
    %v2447 = vtanh.pop %v2444
    %v2448 = vtanh.pop %v2445
    %v2449 = vmul.f32 %v2446, 0.5
    %v2450 = vmul.f32 %v2447, 0.5
    %v2451 = vmul.f32 %v2448, 0.5
    %v2452 = vadd.f32 %v2449, 0.5
    %v2453 = vadd.f32 %v2450, 0.5
    %v2454 = vadd.f32 %v2451, 0.5
    %v2455 = vtanh.pop %v2442
    %v2456 = vmul.f32 %v2453, %v2252
    %v2457 = vmul.f32 %v2452, %v2455
    %v2458 = vadd.f32 %v2456, %v2457
    %v2459 = vtanh.pop %v2458
    %v2460 = vmul.f32 %v2454, %v2459
    %v2461 = vld [vmem:[#allocation2 + $0xe0] sm:$0xff]
    %v2462 = vld [vmem:[#allocation2 + $0xe8] sm:$0xff]
    %v2463 = vld [vmem:[#allocation2 + $0xf0] sm:$0xff]
    %v2464 = vld [vmem:[#allocation2 + $0xf8] sm:$0xff]
    %2465 = vmatpush.bf16.msra.mxu0 %v668
    %2466 = vmatpush.bf16.msra.mxu0 %v664
    %2467 = vmatpush.bf16.msra.mxu0 %v660
    %2468 = vmatpush.bf16.msra.mxu0 %v656
    %2469 = vmatpush.bf16.msra.mxu0 %v652
    %2470 = vmatpush.bf16.msra.mxu0 %v648
    %2471 = vmatpush.bf16.msra.mxu0 %v644
    %2472 = vmatpush.bf16.msra.mxu0 %v640
    %2473 = vmatmul.bf16.gmra.mxu0 %v2334
    %v2474 = vpop.f32.mrf.mxu0
    %v2475 = vadd.f32 0.0, %v2474
    %v2476 = vpop.f32.mrf.mxu0
    %2477 = vdwg.mxu0
    %2478 = vmatpush.bf16.msra.mxu0 %v669
    %2479 = vmatpush.bf16.msra.mxu0 %v665
    %2480 = vmatpush.bf16.msra.mxu0 %v661
    %2481 = vmatpush.bf16.msra.mxu0 %v657
    %2482 = vmatpush.bf16.msra.mxu0 %v653
    %2483 = vmatpush.bf16.msra.mxu0 %v649
    %2484 = vmatpush.bf16.msra.mxu0 %v645
    %2485 = vmatpush.bf16.msra.mxu0 %v641
    %2486 = vmatmul.bf16.gmra.mxu0 %v2334
    %v2487 = vpop.f32.mrf.mxu0
    %v2488 = vadd.f32 0.0, %v2487
    %v2489 = vpop.f32.mrf.mxu0
    %2490 = vdwg.mxu0
    %2491 = vmatpush.bf16.msra.mxu0 %v670
    %2492 = vmatpush.bf16.msra.mxu0 %v666
    %2493 = vmatpush.bf16.msra.mxu0 %v662
    %2494 = vmatpush.bf16.msra.mxu0 %v658
    %2495 = vmatpush.bf16.msra.mxu0 %v654
    %2496 = vmatpush.bf16.msra.mxu0 %v650
    %2497 = vmatpush.bf16.msra.mxu0 %v646
    %2498 = vmatpush.bf16.msra.mxu0 %v642
    %2499 = vmatmul.bf16.gmra.mxu0 %v2334
    %v2500 = vpop.f32.mrf.mxu0
    %v2501 = vadd.f32 0.0, %v2500
    %v2502 = vpop.f32.mrf.mxu0
    %2503 = vdwg.mxu0
    %2504 = vmatpush.bf16.msra.mxu0 %v671
    %2505 = vmatpush.bf16.msra.mxu0 %v667
    %2506 = vmatpush.bf16.msra.mxu0 %v663
    %2507 = vmatpush.bf16.msra.mxu0 %v659
    %2508 = vmatpush.bf16.msra.mxu0 %v655
    %2509 = vmatpush.bf16.msra.mxu0 %v651
    %2510 = vmatpush.bf16.msra.mxu0 %v647
    %2511 = vmatpush.bf16.msra.mxu0 %v643
    %2512 = vmatmul.bf16.gmra.mxu0 %v2334
    %v2513 = vpop.f32.mrf.mxu0
    %v2514 = vadd.f32 0.0, %v2513
    %v2515 = vpop.f32.mrf.mxu0
    %2516 = vdwg.mxu0
    %v2517 = vadd.f32 %v2461, %v2475
    %v2518 = vadd.f32 %v2462, %v2488
    %v2519 = vadd.f32 %v2463, %v2501
    %v2520 = vadd.f32 %v2464, %v2514
    %v2521 = vmul.f32 %v2517, 0.5
    %v2522 = vmul.f32 %v2518, 0.5
    %v2523 = vmul.f32 %v2519, 0.5
    %v2524 = vtanh.pop %v2521
    %v2525 = vtanh.pop %v2522
    %v2526 = vtanh.pop %v2523
    %v2527 = vmul.f32 %v2524, 0.5
    %v2528 = vmul.f32 %v2525, 0.5
    %v2529 = vmul.f32 %v2526, 0.5
    %v2530 = vadd.f32 %v2527, 0.5
    %v2531 = vadd.f32 %v2528, 0.5
    %v2532 = vadd.f32 %v2529, 0.5
    %v2533 = vtanh.pop %v2520
    %v2534 = vmul.f32 %v2531, %v2330
    %v2535 = vmul.f32 %v2530, %v2533
    %v2536 = vadd.f32 %v2534, %v2535
    %v2537 = vtanh.pop %v2536
    %v2538 = vmul.f32 %v2532, %v2537
    %v2539 = vpack.c.bf16 %v2460, %v2460
    %v2540 = vpack.c.bf16 %v2538, %v2538
    %2541 = vmatpush.bf16.msra.mxu0 %v903
    %2542 = vmatpush.bf16.msra.mxu0 %v899
    %2543 = vmatpush.bf16.msra.mxu0 %v895
    %2544 = vmatpush.bf16.msra.mxu0 %v891
    %2545 = vmatpush.bf16.msra.mxu0 %v887
    %2546 = vmatpush.bf16.msra.mxu0 %v883
    %2547 = vmatpush.bf16.msra.mxu0 %v879
    %2548 = vmatpush.bf16.msra.mxu0 %v875
    %2549 = vmatmul.bf16.gmra.mxu0 %v2540
    %v2550 = vpop.f32.mrf.mxu0
    %v2551 = vadd.f32 0.0, %v2550
    %v2552 = vpop.f32.mrf.mxu0
    %2553 = vdwg.mxu0
    %2554 = vmatpush.bf16.msra.mxu0 %v904
    %2555 = vmatpush.bf16.msra.mxu0 %v900
    %2556 = vmatpush.bf16.msra.mxu0 %v896
    %2557 = vmatpush.bf16.msra.mxu0 %v892
    %2558 = vmatpush.bf16.msra.mxu0 %v888
    %2559 = vmatpush.bf16.msra.mxu0 %v884
    %2560 = vmatpush.bf16.msra.mxu0 %v880
    %2561 = vmatpush.bf16.msra.mxu0 %v876
    %2562 = vmatmul.bf16.gmra.mxu0 %v2540
    %v2563 = vpop.f32.mrf.mxu0
    %v2564 = vadd.f32 0.0, %v2563
    %v2565 = vpop.f32.mrf.mxu0
    %2566 = vdwg.mxu0
    %2567 = vmatpush.bf16.msra.mxu0 %v905
    %2568 = vmatpush.bf16.msra.mxu0 %v901
    %2569 = vmatpush.bf16.msra.mxu0 %v897
    %2570 = vmatpush.bf16.msra.mxu0 %v893
    %2571 = vmatpush.bf16.msra.mxu0 %v889
    %2572 = vmatpush.bf16.msra.mxu0 %v885
    %2573 = vmatpush.bf16.msra.mxu0 %v881
    %2574 = vmatpush.bf16.msra.mxu0 %v877
    %2575 = vmatmul.bf16.gmra.mxu0 %v2540
    %v2576 = vpop.f32.mrf.mxu0
    %v2577 = vadd.f32 0.0, %v2576
    %v2578 = vpop.f32.mrf.mxu0
    %2579 = vdwg.mxu0
    %2580 = vmatpush.bf16.msra.mxu0 %v906
    %2581 = vmatpush.bf16.msra.mxu0 %v902
    %2582 = vmatpush.bf16.msra.mxu0 %v898
    %2583 = vmatpush.bf16.msra.mxu0 %v894
    %2584 = vmatpush.bf16.msra.mxu0 %v890
    %2585 = vmatpush.bf16.msra.mxu0 %v886
    %2586 = vmatpush.bf16.msra.mxu0 %v882
    %2587 = vmatpush.bf16.msra.mxu0 %v878
    %2588 = vmatmul.bf16.gmra.mxu0 %v2540
    %v2589 = vpop.f32.mrf.mxu0
    %v2590 = vadd.f32 0.0, %v2589
    %v2591 = vpop.f32.mrf.mxu0
    %2592 = vdwg.mxu0
    %2593 = vmatpush.bf16.msra.mxu0 %v1115
    %2594 = vmatpush.bf16.msra.mxu0 %v1111
    %2595 = vmatpush.bf16.msra.mxu0 %v1107
    %2596 = vmatpush.bf16.msra.mxu0 %v1103
    %2597 = vmatpush.bf16.msra.mxu0 %v1099
    %2598 = vmatpush.bf16.msra.mxu0 %v1095
    %2599 = vmatpush.bf16.msra.mxu0 %v1091
    %2600 = vmatpush.bf16.msra.mxu0 %v1087
    %2601 = vmatmul.bf16.gmra.mxu0 %v2539
    %v2602 = vpop.f32.mrf.mxu0
    %v2603 = vadd.f32 %v2551, %v2602
    %v2604 = vpop.f32.mrf.mxu0
    %2605 = vdwg.mxu0
    %2606 = vmatpush.bf16.msra.mxu0 %v1116
    %2607 = vmatpush.bf16.msra.mxu0 %v1112
    %2608 = vmatpush.bf16.msra.mxu0 %v1108
    %2609 = vmatpush.bf16.msra.mxu0 %v1104
    %2610 = vmatpush.bf16.msra.mxu0 %v1100
    %2611 = vmatpush.bf16.msra.mxu0 %v1096
    %2612 = vmatpush.bf16.msra.mxu0 %v1092
    %2613 = vmatpush.bf16.msra.mxu0 %v1088
    %2614 = vmatmul.bf16.gmra.mxu0 %v2539
    %v2615 = vpop.f32.mrf.mxu0
    %v2616 = vadd.f32 %v2564, %v2615
    %v2617 = vpop.f32.mrf.mxu0
    %2618 = vdwg.mxu0
    %2619 = vmatpush.bf16.msra.mxu0 %v1117
    %2620 = vmatpush.bf16.msra.mxu0 %v1113
    %2621 = vmatpush.bf16.msra.mxu0 %v1109
    %2622 = vmatpush.bf16.msra.mxu0 %v1105
    %2623 = vmatpush.bf16.msra.mxu0 %v1101
    %2624 = vmatpush.bf16.msra.mxu0 %v1097
    %2625 = vmatpush.bf16.msra.mxu0 %v1093
    %2626 = vmatpush.bf16.msra.mxu0 %v1089
    %2627 = vmatmul.bf16.gmra.mxu0 %v2539
    %v2628 = vpop.f32.mrf.mxu0
    %v2629 = vadd.f32 %v2577, %v2628
    %v2630 = vpop.f32.mrf.mxu0
    %2631 = vdwg.mxu0
    %2632 = vmatpush.bf16.msra.mxu0 %v1118
    %2633 = vmatpush.bf16.msra.mxu0 %v1114
    %2634 = vmatpush.bf16.msra.mxu0 %v1110
    %2635 = vmatpush.bf16.msra.mxu0 %v1106
    %2636 = vmatpush.bf16.msra.mxu0 %v1102
    %2637 = vmatpush.bf16.msra.mxu0 %v1098
    %2638 = vmatpush.bf16.msra.mxu0 %v1094
    %2639 = vmatpush.bf16.msra.mxu0 %v1090
    %2640 = vmatmul.bf16.gmra.mxu0 %v2539
    %v2641 = vpop.f32.mrf.mxu0
    %v2642 = vadd.f32 %v2590, %v2641
    %v2643 = vpop.f32.mrf.mxu0
    %2644 = vdwg.mxu0
    %v2645 = vadd.f32 %v2603, %v532
    %v2646 = vadd.f32 %v2616, %v533
    %v2647 = vadd.f32 %v2629, %v534
    %v2648 = vadd.f32 %v2642, %v535
    %v2649 = vmul.f32 %v2645, 0.5
    %v2650 = vmul.f32 %v2646, 0.5
    %v2651 = vmul.f32 %v2647, 0.5
    %v2652 = vtanh.pop %v2649
    %v2653 = vtanh.pop %v2650
    %v2654 = vtanh.pop %v2651
    %v2655 = vmul.f32 %v2652, 0.5
    %v2656 = vmul.f32 %v2653, 0.5
    %v2657 = vmul.f32 %v2654, 0.5
    %v2658 = vadd.f32 %v2655, 0.5
    %v2659 = vadd.f32 %v2656, 0.5
    %v2660 = vadd.f32 %v2657, 0.5
    %v2661 = vtanh.pop %v2648
    %v2662 = vmul.f32 %v2659, %v2458
    %v2663 = vmul.f32 %v2658, %v2661
    %v2664 = vadd.f32 %v2662, %v2663
    %v2665 = vtanh.pop %v2664
    %v2666 = vmul.f32 %v2660, %v2665
    %v2667 = vmax.f32 %v2666, 0.0
    %v2668 = vld [vmem:[#allocation11] sm:$0xff]
    %v2669 = vld [vmem:[#allocation11 + $0x8] sm:$0xff]
    %v2670 = vld [vmem:[#allocation11 + $0x10] sm:$0xff]
    %v2671 = vld [vmem:[#allocation11 + $0x18] sm:$0xff]
    %v2672 = vld [vmem:[#allocation11 + $0x20] sm:$0xff]
    %v2673 = vld [vmem:[#allocation11 + $0x28] sm:$0xff]
    %v2674 = vld [vmem:[#allocation11 + $0x30] sm:$0xff]
    %v2675 = vld [vmem:[#allocation11 + $0x38] sm:$0xff]
    %v2676 = vld [vmem:[#allocation11 + $0x40] sm:$0xff]
    %v2677 = vld [vmem:[#allocation11 + $0x48] sm:$0xff]
    %v2678 = vld [vmem:[#allocation11 + $0x50] sm:$0xff]
    %v2679 = vld [vmem:[#allocation11 + $0x58] sm:$0xff]
    %v2680 = vld [vmem:[#allocation11 + $0x60] sm:$0xff]
    %v2681 = vld [vmem:[#allocation11 + $0x68] sm:$0xff]
    %v2682 = vld [vmem:[#allocation11 + $0x70] sm:$0xff]
    %v2683 = vld [vmem:[#allocation11 + $0x78] sm:$0xff]
    %2684 = vmatpush.msra.mxu0 %v2683
    %2685 = vmatpush.msra.mxu0 %v2682
    %2686 = vmatpush.msra.mxu0 %v2681
    %2687 = vmatpush.msra.mxu0 %v2680
    %2688 = vmatpush.msra.mxu0 %v2679
    %2689 = vmatpush.msra.mxu0 %v2678
    %2690 = vmatpush.msra.mxu0 %v2677
    %2691 = vmatpush.msra.mxu0 %v2676
    %2692 = vmatpush.msra.mxu0 %v2675
    %2693 = vmatpush.msra.mxu0 %v2674
    %2694 = vmatpush.msra.mxu0 %v2673
    %2695 = vmatpush.msra.mxu0 %v2672
    %2696 = vmatpush.msra.mxu0 %v2671
    %2697 = vmatpush.msra.mxu0 %v2670
    %2698 = vmatpush.msra.mxu0 %v2669
    %2699 = vmatpush.msra.mxu0 %v2668
    %2700 = vmatmul.f32.gmra.mxu0 %v2667
    %v2701 = vpop.f32.mrf.mxu0
    %v2702 = vadd.f32 0.0, %v2701
    %2703 = vdwg.mxu0
    %2704 = vmatpush.msra.mxu0 %v162
    %2705 = vmatpush.msra.mxu0 %v161
    %2706 = vmatpush.msra.mxu0 %v160
    %2707 = vmatpush.msra.mxu0 %v159
    %2708 = vmatpush.msra.mxu0 %v158
    %2709 = vmatpush.msra.mxu0 %v157
    %2710 = vmatpush.msra.mxu0 %v156
    %2711 = vmatpush.msra.mxu0 %v155
    %2712 = vmatpush.msra.mxu0 %v154
    %2713 = vmatpush.msra.mxu0 %v153
    %2714 = vmatpush.msra.mxu0 %v152
    %2715 = vmatpush.msra.mxu0 %v151
    %2716 = vmatpush.msra.mxu0 %v150
    %2717 = vmatpush.msra.mxu0 %v149
    %2718 = vmatpush.msra.mxu0 %v148
    %2719 = vmatpush.msra.mxu0 %v147
    %2720 = vmatmul.f32.gmra.mxu0 %v146
    %v2721 = vpop.f32.mrf.mxu0
    %v2722 = vadd.f32 %v2702, %v2721
    %2723 = vdwg.mxu0
    %v2724 = vld [vmem:[%s12] sm:$0x1]
    %v2726 = vperm.slane %v2724, 0
    %v2728 = vadd.f32 %v2722, %v2726
    %2729 = vst [vmem:[#allocation12] sm:$0xff] %v2728
    // Predicated region
    $region74: #{tpu_custom_call.1} parent=1 // pred_check
      _
    $region75: #{tpu_custom_call.1} parent=1 // pred_check_branch
      %2731 = sbr.rel (0) target = $region77
    $region76: #{tpu_custom_call.1} parent=1 // pred_region
      %2733 = vsyncadd [#allocation5], 0
      %s2735 = sshll.u32 [#allocation12], 4
      %s2736 = int_to_ptr.vmem [resolvable:$true] %s2735
      %s2737 = sshll.u32 %s13, 4
      %s2738 = int_to_ptr.hbm [resolvable:$true] %s2737
      %2740 = dma.vmem_to_hbm [thread:$0]  %s2736, 128, %s2738, [#allocation5]
    $region77: #{tpu_custom_call.1} parent=1 // pred_fallthru
      _
    // Predicated region
    $region78: #{tpu_custom_call.1} parent=1 // pred_check
      _
    $region79: #{tpu_custom_call.1} parent=1 // pred_check_branch
      %2742 = sbr.rel (0) target = $region81
    $region80: #{tpu_custom_call.1} parent=1 // pred_region
      %2744 = dma.done [#allocation5], 128
    $region81: #{tpu_custom_call.1} parent=1 // pred_fallthru
      _
    %2745 = vsyncpa [#allocation4], 1
    %2746 = vsyncpa [#allocation7], 1
    %2747 = vsyncpa [#allocation10], 1
    %2748 = vsyncpa [#allocation5], 1

</llo_original>
